<compile_context>
chip_gen: v5e
topology: v5e:2x2
jax: 0.10.0
libtpu: 0.0.40
codegen_flags: <defaults>
</compile_context>

<pallas_src>
import functools

import jax
import jax.numpy as jnp
from jax import lax
from jax.experimental import pallas as pl
from jax.experimental.pallas import tpu as pltpu

EPS_ACT = 0.01          # epsilon of modified_reciprocal_activation
BN_EPS = 1e-5           # nn.BatchNorm1d default eps
LANE = 128              # TPU lane width; per-layer column blocks padded to this
VMEM_LIMIT = 32 * 1024 * 1024        # scoped-VMEM request (fits v5e/v6e/v7x)
FAST_PATH_BYTES = 20 * 1024 * 1024   # single-kernel path if working set fits here
TILE_VMEM_BUDGET = 20 * 1024 * 1024  # per-step budget used by the batch-tile picker


def _round_up(n, m):
    return ((n + m - 1) // m) * m


def _capped_denom(z):
    # torch: denom = where(|z| < eps, eps*sign(z), z); denom = where(denom == 0, eps, denom)
    # collapses to one nested select (z == 0 -> +eps, matching the reference).
    return jnp.where(jnp.abs(z) < EPS_ACT,
                     jnp.where(z < 0.0, -EPS_ACT, EPS_ACT),
                     z)


def _ladder_tail(z, a0_norm, L, hpad, approx):
    """Ladder layers 1..L-1: elementwise recursion on lane-aligned (TB, hpad) column
    blocks of the fused pre-activation z.  L is small & static here; switch to
    lax.fori_loop for very deep ladders."""
    prev = a0_norm
    for i in range(1, L):
        zi = z[:, i * hpad:(i + 1) * hpad] + prev
        prev = pl.reciprocal(_capped_denom(zi), approx=approx)
    return prev


# --------------------- fast path: everything in one kernel (grid=(1,)) ---------------------
def cofrnet_fused_kernel(x_ref, w_ref, b_ref, wf_ref, bf_ref, out_ref, *, L, hpad, approx):
    # ONE matmul for every ladder layer (each CustomizedLinear sees the original x).
    z = jnp.dot(x_ref[...], w_ref[...], preferred_element_type=jnp.float32) + b_ref[...]
    a0 = pl.reciprocal(_capped_denom(z[:, :hpad]), approx=approx)

    # Fresh nn.BatchNorm1d (training mode): exact full-batch mean / biased variance,
    # centered (numerically stable) form, computed in-kernel (no separate stats pass).
    inv_b = 1.0 / z.shape[0]
    mean = jnp.sum(a0, axis=0, keepdims=True) * inv_b
    cen = a0 - mean
    var = jnp.sum(cen * cen, axis=0, keepdims=True) * inv_b
    a0n = cen * lax.rsqrt(var + BN_EPS)

    prev = _ladder_tail(z, a0n, L, hpad, approx)
    out = jnp.dot(prev, wf_ref[...], preferred_element_type=jnp.float32) + bf_ref[...]
    out_ref[...] = out.astype(out_ref.dtype)


# ------------- tiled pass 1: full-batch layer-0 BatchNorm statistics (Welford) -------------
def bn_stats_kernel(x_ref, w0_ref, b0_ref, mean_ref, istd_ref, *, batch, tile, approx):
    """Accumulates running (mean, M2) of the layer-0 activation over all batch tiles
    with a Chan/Welford merge; the rsqrt epilogue is folded into the LAST grid step so
    the outputs are (mean, istd) directly (no XLA glue between the two passes).
    istd_ref holds the running M2 until the final step."""
    step = pl.program_id(0)

    @pl.when(step == 0)
    def _():
        mean_ref[...] = jnp.zeros_like(mean_ref)
        istd_ref[...] = jnp.zeros_like(istd_ref)

    z0 = jnp.dot(x_ref[...], w0_ref[...], preferred_element_type=jnp.float32) + b0_ref[...]
    a0 = pl.reciprocal(_capped_denom(z0), approx=approx)

    t_mean = jnp.sum(a0, axis=0, keepdims=True) * (1.0 / tile)
    cen = a0 - t_mean
    t_m2 = jnp.sum(cen * cen, axis=0, keepdims=True)

    n_prev = (step * tile).astype(jnp.float32)
    n_new = n_prev + float(tile)
    delta = t_mean - mean_ref[...]
    mean_ref[...] = mean_ref[...] + delta * (float(tile) / n_new)
    istd_ref[...] = istd_ref[...] + t_m2 + delta * delta * (n_prev * float(tile) / n_new)

    @pl.when(step == pl.num_programs(0) - 1)
    def _():
        istd_ref[...] = lax.rsqrt(istd_ref[...] * (1.0 / batch) + BN_EPS)


# ----------------------------- tiled pass 2: fused forward ---------------------------------
def cofrnet_fwd_kernel(mean_ref, istd_ref, x_ref, w_ref, b_ref, wf_ref, bf_ref, out_ref,
                       *, L, hpad, approx):
    z = jnp.dot(x_ref[...], w_ref[...], preferred_element_type=jnp.float32) + b_ref[...]
    a0 = pl.reciprocal(_capped_denom(z[:, :hpad]), approx=approx)
    a0n = (a0 - mean_ref[...]) * istd_ref[...]
    prev = _ladder_tail(z, a0n, L, hpad, approx)
    out = jnp.dot(prev, wf_ref[...], preferred_element_type=jnp.float32) + bf_ref[...]
    out_ref[...] = out.astype(out_ref.dtype)


# ------------------------------------ wrapper / glue ---------------------------------------
def _pick_batch_tile(batch, d, hpad, lhpad, o_pad):
    """Largest batch tile (divisor of batch, multiple of 8) whose pass-2 working set
    stays under TILE_VMEM_BUDGET (sized so it also fits v7x's 64 MiB physical VMEM)."""
    if batch <= 8:
        return batch
    per_row = 4 * (2 * d + 2 * o_pad + lhpad + 3 * hpad)   # x/out double-buffers + z + temps
    consts = 4 * (d * lhpad + lhpad + hpad * o_pad + o_pad + 2 * hpad)
    max_tb = max(8, (TILE_VMEM_BUDGET - consts) // per_row)
    best = None
    for tb in range(8, batch + 1, 8):
        if batch % tb == 0 and tb <= max_tb:
            best = tb
    if best is None:
        # TODO(synk): batches with no multiple-of-8 divisor under the budget would need a
        # padded final tile; fall back to a single full-array tile (correct, may be big).
        return batch
    if (batch // best) % 2 == 1 and best % 16 == 0:
        best //= 2      # prefer an even number of tiles (v7x: two TensorCores on pass 2)
    return best


@functools.partial(jax.jit,
                   static_argnames=("block_batch", "approx_recip", "out_dtype", "force_tiled"))
def cofrnet_apply(x, ladder_w, ladder_b, masks, final_w, final_b, *,
                  block_batch=None, approx_recip=False, out_dtype=jnp.float32,
                  force_tiled=False):
    """Mirror of CoFrNet_Model.forward.
      x        : (B, D)
      ladder_w : (L, H, D)  CustomizedLinear weights (PyTorch nn.Linear layout)
      ladder_b : (L, H)     CustomizedLinear biases
      masks    : (L, D, H)  connection masks (in_features, out_features), as in aix360
      final_w  : (O, H), final_b : (O,)  plain nn.Linear parameters
    """
    L, H, D = ladder_w.shape
    O = final_w.shape[0]
    B = x.shape[0]
    hpad = _round_up(H, LANE)        # lane-aligned per-layer column block
    lhpad = L * hpad
    o_pad = _round_up(O, LANE)       # lane-dense output slab (unmasked vst)

    x = x.astype(jnp.float32)

    # Parameter glue (once, outside the kernels): fold masks, pre-transpose, pad each
    # layer's columns to a 128-lane boundary and concatenate along the lane axis.
    w_eff = jnp.transpose(ladder_w, (0, 2, 1)).astype(jnp.float32) * masks.astype(jnp.float32)
    w_all = jnp.zeros((L, D, hpad), jnp.float32).at[:, :, :H].set(w_eff)
    w_all = jnp.transpose(w_all, (1, 0, 2)).reshape(D, lhpad)                     # (D, L*hpad)
    b_all = jnp.zeros((L, hpad), jnp.float32).at[:, :H].set(
        ladder_b.astype(jnp.float32)).reshape(1, lhpad)
    wf_pad = jnp.zeros((hpad, o_pad), jnp.float32).at[:H, :O].set(
        final_w.astype(jnp.float32).T)
    bf_pad = jnp.zeros((1, o_pad), jnp.float32).at[:, :O].set(
        final_b.astype(jnp.float32)[None, :])

    cp_seq = pltpu.CompilerParams(dimension_semantics=("arbitrary",),
                                  vmem_limit_bytes=VMEM_LIMIT)
    cp_par = pltpu.CompilerParams(dimension_semantics=("parallel",),
                                  vmem_limit_bytes=VMEM_LIMIT)

    def const(shape):                # small resident operand: same block every grid step
        return pl.BlockSpec(shape, lambda i: (0,) * len(shape))

    fast_bytes = (B * 4 * (D + lhpad + o_pad + 4 * hpad)
                  + 4 * (D * lhpad + lhpad + hpad * o_pad + o_pad))
    use_fast = (not force_tiled) and block_batch is None and fast_bytes <= FAST_PATH_BYTES

    if use_fast:
        # ---- single fused kernel: matmul + full-batch BN + ladder + final linear ----
        kern = functools.partial(cofrnet_fused_kernel, L=L, hpad=hpad, approx=approx_recip)
        out_pad = pl.pallas_call(
            kern,
            out_shape=jax.ShapeDtypeStruct((B, o_pad), out_dtype),
            grid=(1,),
            in_specs=[const((B, D)), const((D, lhpad)), const((1, lhpad)),
                      const((hpad, o_pad)), const((1, o_pad))],
            out_specs=pl.BlockSpec((B, o_pad), lambda i: (0, 0)),
            compiler_params=cp_seq,
        )(x, w_all, b_all, wf_pad, bf_pad)
        return out_pad[:, :O]

    # --------------------------- tiled two-pass path (large B) ---------------------------
    TB = _pick_batch_tile(B, D, hpad, lhpad, o_pad) if block_batch is None else block_batch
    assert B % TB == 0 and (TB % 8 == 0 or TB == B), \
        "batch tile must divide B and be a multiple of 8"
    nb = B // TB

    # pass 1: exact full-batch layer-0 BatchNorm statistics (stable Welford merge across
    # tiles; istd epilogue folded into the last grid step -> no XLA glue between passes).
    stats_kern = functools.partial(bn_stats_kernel, batch=B, tile=TB, approx=approx_recip)
    mean, istd = pl.pallas_call(
        stats_kern,
        out_shape=(jax.ShapeDtypeStruct((1, hpad), jnp.float32),
                   jax.ShapeDtypeStruct((1, hpad), jnp.float32)),
        grid=(nb,),
        in_specs=[pl.BlockSpec((TB, D), lambda i: (i, 0)),
                  const((D, hpad)), const((1, hpad))],
        out_specs=(const((1, hpad)), const((1, hpad))),
        compiler_params=cp_seq,        # resident accumulators -> sequential grid
    )(x, w_all[:, :hpad], b_all[:, :hpad])
    # TODO(synk): for very large B on v7x, split pass 1 over both TensorCores with a
    # leading size-2 "parallel" axis and per-core partial (mean, M2) outputs + combine.

    # pass 2: fused forward over independent batch tiles (parallel -> both TCs on v7x).
    fwd_kern = functools.partial(cofrnet_fwd_kernel, L=L, hpad=hpad, approx=approx_recip)
    out_pad = pl.pallas_call(
        fwd_kern,
        out_shape=jax.ShapeDtypeStruct((B, o_pad), out_dtype),
        grid=(nb,),
        in_specs=[const((1, hpad)), const((1, hpad)),
                  pl.BlockSpec((TB, D), lambda i: (i, 0)),
                  const((D, lhpad)), const((1, lhpad)),
                  const((hpad, o_pad)), const((1, o_pad))],
        out_specs=pl.BlockSpec((TB, o_pad), lambda i: (i, 0)),
        compiler_params=cp_par,
    )(mean, istd, x, w_all, b_all, wf_pad, bf_pad)
    return out_pad[:, :O]

    # TODO(synk): self.dropout and self.BatchNorm (BatchNorm2d) are defined in __init__ but
    # never used in forward(), so they are intentionally not implemented.
    # TODO(synk): the torch.isnan(...) print side effect inside the activation is not
    # reproduced (no data-dependent host print from a TPU kernel).


# ---------------------------------- pure-JAX reference -------------------------------------
def pure_jax_ref(x, ladder_w, ladder_b, masks, final_w, final_b):
    """Faithful re-implementation of the PyTorch forward, plus a first-order per-element
    bound on how much two *correct* float32 implementations may legitimately differ: the
    capped 1/x has derivative up to 1/eps^2 = 1e4 just outside the +/-0.01 cap, so an
    element-wise comparison is ill-conditioned for inputs that graze the boundary."""
    hp = lax.Precision.HIGHEST
    REL = 1e-6        # per-op relative rounding slack between implementations
    ABS = 1e-5        # absolute slack per pre-activation (matmul accumulation order)
    L = ladder_w.shape[0]
    prev, e_prev = None, None
    for i in range(L):
        w_eff = ladder_w[i] * masks[i].T                          # (H, D)
        z = jnp.dot(x, w_eff.T, precision=hp) + ladder_b[i]
        e_z = ABS + REL * jnp.abs(z)
        if i > 0:
            z = z + prev
            e_z = e_z + e_prev
        sgn = jnp.sign(z)
        denom = jnp.where(jnp.abs(z) < EPS_ACT, EPS_ACT * sgn, z)
        denom = jnp.where(denom == 0.0, EPS_ACT, denom)
        a = 1.0 / denom
        gain = 1.0 / jnp.square(jnp.maximum(jnp.abs(z) - e_z, EPS_ACT))
        e_a = e_z * gain + REL * jnp.abs(a)
        if i == 0:
            mean = jnp.mean(a, axis=0, keepdims=True)
            cen = a - mean
            var = jnp.mean(cen * cen, axis=0, keepdims=True)      # biased, as BatchNorm1d
            istd = 1.0 / jnp.sqrt(var + BN_EPS)
            e_mean = jnp.mean(e_a, axis=0, keepdims=True) + 1e-6
            e_var = jnp.mean(2.0 * jnp.abs(cen) * (e_a + e_mean), axis=0, keepdims=True) + 1e-6
            e_istd = 0.5 * istd * e_var / (var + BN_EPS) + REL * istd
            a = cen * istd
            e_a = (e_a + e_mean) * istd + jnp.abs(cen) * e_istd
        prev, e_prev = a, e_a
    out = jnp.dot(prev, final_w.T, precision=hp) + final_b
    e_out = jnp.dot(e_prev, jnp.abs(final_w).T, precision=hp) + ABS + REL * jnp.abs(out)
    return out, e_out


if __name__ == "__main__":
    # Shapes consistent with the module:
    #   connections = [mask_0 (D,H), mask_1 (D,H), mask_2 (D,H), final (H,O)]
    B, D, H, O, L = 512, 8, 16, 4, 3

    key = jax.random.PRNGKey(0)
    k_x, k_w, k_b, k_wf, k_bf = jax.random.split(key, 5)

    x = jax.random.normal(k_x, (B, D), jnp.float32)

    # Deterministic CoFrNet-style connection masks (in_features, out_features).
    mask = (jnp.arange(D)[:, None] <= (jnp.arange(H)[None, :] % D)).astype(jnp.float32)
    masks = jnp.stack([mask] * L, axis=0)                         # (L, D, H)

    bound_in = 1.0 / float(D) ** 0.5
    ladder_w = jax.random.uniform(k_w, (L, H, D), jnp.float32, -bound_in, bound_in)
    ladder_b = jax.random.uniform(k_b, (L, H), jnp.float32, -bound_in, bound_in)
    bound_h = 1.0 / float(H) ** 0.5
    final_w = jax.random.uniform(k_wf, (O, H), jnp.float32, -bound_h, bound_h)
    final_b = jax.random.uniform(k_bf, (O,), jnp.float32, -bound_h, bound_h)

    # 1) single fused kernel (the small-problem fast path; one pallas_call total).
    out_fast = jax.block_until_ready(
        cofrnet_apply(x, ladder_w, ladder_b, masks, final_w, final_b))
    # 2) tiled two-pass path (forced, block_batch=128 -> 4 batch tiles) to exercise the
    #    Welford pass-1 accumulator grid and the "parallel" pass-2 grid.
    out_tiled = jax.block_until_ready(
        cofrnet_apply(x, ladder_w, ladder_b, masks, final_w, final_b,
                      block_batch=128, force_tiled=True))
    # 3) EUP approximate-reciprocal variant (feature wired per the perf review).
    out_approx = jax.block_until_ready(
        cofrnet_apply(x, ladder_w, ladder_b, masks, final_w, final_b, approx_recip=True))

    ref, e_out = pure_jax_ref(x, ladder_w, ladder_b, masks, final_w, final_b)
    assert out_fast.shape == (B, O) and out_tiled.shape == (B, O)

    # Per-element tolerance = small floor + safety * first-order conditioning bound
    # (tight, < 5e-2, for the vast majority of elements -> a real correctness check;
    # genuine wiring / BatchNorm bugs produce O(0.1 .. 10) errors everywhere).
    tol = 5e-3 + 5e-3 * jnp.abs(ref) + 6.0 * e_out
    assert float(jnp.mean((e_out < 5e-2).astype(jnp.float32))) > 0.2

    def check(out, name):
        assert bool(jnp.all(jnp.isfinite(out))), name
        assert bool(jnp.all(jnp.abs(out - ref) <= tol)), name

    check(out_fast, "fast path mismatch vs pure-JAX reference")
    check(out_tiled, "tiled path mismatch vs pure-JAX reference")

    # approx-reciprocal variant: its extra error is not covered by the exact-arithmetic
    # conditioning bound, so only finiteness + bulk agreement are asserted.
    assert bool(jnp.all(jnp.isfinite(out_approx)))
    approx_tol = 5e-2 + 5e-2 * jnp.abs(ref) + 6.0 * e_out
    assert float(jnp.mean((jnp.abs(out_approx - ref) <= approx_tol).astype(jnp.float32))) >= 0.5

    print("KERNEL_OK")
</pallas_src>

<mosaic_0001>
module attributes {stable_mosaic.version = 11 : i64} {
  func.func @cofrnet_fused_kernel(%arg0: i32, %arg1: memref<512x8xf32, #tpu.memory_space<vmem>>, %arg2: memref<8x384xf32, #tpu.memory_space<vmem>>, %arg3: memref<1x384xf32, #tpu.memory_space<vmem>>, %arg4: memref<128x128xf32, #tpu.memory_space<vmem>>, %arg5: memref<1x128xf32, #tpu.memory_space<vmem>>, %arg6: memref<512x128xf32, #tpu.memory_space<vmem>>) attributes {dimension_semantics = [#tpu.dimension_semantics<arbitrary>], iteration_bounds = array<i64: 1>, scalar_prefetch = 0 : i64, scratch_operands = 0 : i64, tpu.core_type = #tpu.core_type<tc>, window_params = [{pipeline_mode = #tpu.pipeline_mode<synchronous>, transform_indices = @transform_0, window_bounds = array<i64: 512, 8>}, {pipeline_mode = #tpu.pipeline_mode<synchronous>, transform_indices = @transform_1, window_bounds = array<i64: 8, 384>}, {pipeline_mode = #tpu.pipeline_mode<synchronous>, transform_indices = @transform_2, window_bounds = array<i64: 1, 384>}, {pipeline_mode = #tpu.pipeline_mode<synchronous>, transform_indices = @transform_3, window_bounds = array<i64: 128, 128>}, {pipeline_mode = #tpu.pipeline_mode<synchronous>, transform_indices = @transform_4, window_bounds = array<i64: 1, 128>}, {pipeline_mode = #tpu.pipeline_mode<synchronous>, transform_indices = @transform_5, window_bounds = array<i64: 512, 128>}]} {
    %c0 = arith.constant 0 : index
    %c0_0 = arith.constant 0 : index
    %0 = vector.load %arg1[%c0, %c0_0] : memref<512x8xf32, #tpu.memory_space<vmem>>, vector<512x8xf32>
    %c0_1 = arith.constant 0 : index
    %c0_2 = arith.constant 0 : index
    %1 = vector.load %arg2[%c0_1, %c0_2] : memref<8x384xf32, #tpu.memory_space<vmem>>, vector<8x384xf32>
    %cst = arith.constant dense<0.000000e+00> : vector<512x384xf32>
    %2 = tpu.matmul %0, %1, %cst {dimension_numbers = #tpu.dot_dimension_numbers<[1], [0], [0], [1], [0, 0, 1, 1], [], []>} : vector<512x8xf32>, vector<8x384xf32>, vector<512x384xf32> -> vector<512x384xf32>
    %c0_3 = arith.constant 0 : index
    %c0_4 = arith.constant 0 : index
    %3 = vector.load %arg3[%c0_3, %c0_4] : memref<1x384xf32, #tpu.memory_space<vmem>>, vector<1x384xf32>
    %4 = vector.broadcast %3 : vector<1x384xf32> to vector<512x384xf32>
    %5 = arith.addf %2, %4 : vector<512x384xf32>
    %6 = vector.extract_strided_slice %5 {offsets = [0, 0], sizes = [512, 128], strides = [1, 1]} : vector<512x384xf32> to vector<512x128xf32>
    %7 = math.absf %6 : vector<512x128xf32>
    %cst_5 = arith.constant 0.00999999977 : f32
    %8 = vector.broadcast %cst_5 : f32 to vector<512x128xf32>
    %9 = arith.cmpf olt, %7, %8 : vector<512x128xf32>
    %cst_6 = arith.constant 0.000000e+00 : f32
    %10 = vector.broadcast %cst_6 : f32 to vector<512x128xf32>
    %11 = arith.cmpf olt, %6, %10 : vector<512x128xf32>
    %cst_7 = arith.constant -0.00999999977 : f32
    %cst_8 = arith.constant 0.00999999977 : f32
    %12 = vector.broadcast %cst_7 : f32 to vector<512x128xf32>
    %13 = vector.broadcast %cst_8 : f32 to vector<512x128xf32>
    %14 = arith.select %11, %12, %13 : vector<512x128xi1>, vector<512x128xf32>
    %15 = arith.select %9, %14, %6 : vector<512x128xi1>, vector<512x128xf32>
    %16 = tpu.reciprocal %15 : vector<512x128xf32> -> vector<512x128xf32>
    %cst_9 = arith.constant dense<0.000000e+00> : vector<128xf32>
    %17 = vector.multi_reduction <add>, %16, %cst_9 [0] : vector<512x128xf32> to vector<128xf32>
    %18 = vector.shape_cast %17 : vector<128xf32> to vector<1x128xf32>
    %cst_10 = arith.constant 0.001953125 : f32
    %19 = vector.broadcast %cst_10 : f32 to vector<1x128xf32>
    %20 = arith.mulf %18, %19 : vector<1x128xf32>
    %21 = vector.broadcast %20 : vector<1x128xf32> to vector<512x128xf32>
    %22 = arith.subf %16, %21 : vector<512x128xf32>
    %23 = arith.mulf %22, %22 : vector<512x128xf32>
    %cst_11 = arith.constant dense<0.000000e+00> : vector<128xf32>
    %24 = vector.multi_reduction <add>, %23, %cst_11 [0] : vector<512x128xf32> to vector<128xf32>
    %25 = vector.shape_cast %24 : vector<128xf32> to vector<1x128xf32>
    %cst_12 = arith.constant 0.001953125 : f32
    %26 = vector.broadcast %cst_12 : f32 to vector<1x128xf32>
    %27 = arith.mulf %25, %26 : vector<1x128xf32>
    %cst_13 = arith.constant 9.99999974E-6 : f32
    %28 = vector.broadcast %cst_13 : f32 to vector<1x128xf32>
    %29 = arith.addf %27, %28 : vector<1x128xf32>
    %30 = math.rsqrt %29 : vector<1x128xf32>
    %31 = vector.broadcast %30 : vector<1x128xf32> to vector<512x128xf32>
    %32 = arith.mulf %22, %31 : vector<512x128xf32>
    %33 = vector.extract_strided_slice %5 {offsets = [0, 128], sizes = [512, 128], strides = [1, 1]} : vector<512x384xf32> to vector<512x128xf32>
    %34 = arith.addf %33, %32 : vector<512x128xf32>
    %35 = math.absf %34 : vector<512x128xf32>
    %cst_14 = arith.constant 0.00999999977 : f32
    %36 = vector.broadcast %cst_14 : f32 to vector<512x128xf32>
    %37 = arith.cmpf olt, %35, %36 : vector<512x128xf32>
    %cst_15 = arith.constant 0.000000e+00 : f32
    %38 = vector.broadcast %cst_15 : f32 to vector<512x128xf32>
    %39 = arith.cmpf olt, %34, %38 : vector<512x128xf32>
    %cst_16 = arith.constant -0.00999999977 : f32
    %cst_17 = arith.constant 0.00999999977 : f32
    %40 = vector.broadcast %cst_16 : f32 to vector<512x128xf32>
    %41 = vector.broadcast %cst_17 : f32 to vector<512x128xf32>
    %42 = arith.select %39, %40, %41 : vector<512x128xi1>, vector<512x128xf32>
    %43 = arith.select %37, %42, %34 : vector<512x128xi1>, vector<512x128xf32>
    %44 = tpu.reciprocal %43 : vector<512x128xf32> -> vector<512x128xf32>
    %45 = vector.extract_strided_slice %5 {offsets = [0, 256], sizes = [512, 128], strides = [1, 1]} : vector<512x384xf32> to vector<512x128xf32>
    %46 = arith.addf %45, %44 : vector<512x128xf32>
    %47 = math.absf %46 : vector<512x128xf32>
    %cst_18 = arith.constant 0.00999999977 : f32
    %48 = vector.broadcast %cst_18 : f32 to vector<512x128xf32>
    %49 = arith.cmpf olt, %47, %48 : vector<512x128xf32>
    %cst_19 = arith.constant 0.000000e+00 : f32
    %50 = vector.broadcast %cst_19 : f32 to vector<512x128xf32>
    %51 = arith.cmpf olt, %46, %50 : vector<512x128xf32>
    %cst_20 = arith.constant -0.00999999977 : f32
    %cst_21 = arith.constant 0.00999999977 : f32
    %52 = vector.broadcast %cst_20 : f32 to vector<512x128xf32>
    %53 = vector.broadcast %cst_21 : f32 to vector<512x128xf32>
    %54 = arith.select %51, %52, %53 : vector<512x128xi1>, vector<512x128xf32>
    %55 = arith.select %49, %54, %46 : vector<512x128xi1>, vector<512x128xf32>
    %56 = tpu.reciprocal %55 : vector<512x128xf32> -> vector<512x128xf32>
    %c0_22 = arith.constant 0 : index
    %c0_23 = arith.constant 0 : index
    %57 = vector.load %arg4[%c0_22, %c0_23] : memref<128x128xf32, #tpu.memory_space<vmem>>, vector<128x128xf32>
    %cst_24 = arith.constant dense<0.000000e+00> : vector<512x128xf32>
    %58 = tpu.matmul %56, %57, %cst_24 {dimension_numbers = #tpu.dot_dimension_numbers<[1], [0], [0], [1], [0, 0, 1, 1], [], []>} : vector<512x128xf32>, vector<128x128xf32>, vector<512x128xf32> -> vector<512x128xf32>
    %c0_25 = arith.constant 0 : index
    %c0_26 = arith.constant 0 : index
    %59 = vector.load %arg5[%c0_25, %c0_26] : memref<1x128xf32, #tpu.memory_space<vmem>>, vector<1x128xf32>
    %60 = vector.broadcast %59 : vector<1x128xf32> to vector<512x128xf32>
    %61 = arith.addf %58, %60 : vector<512x128xf32>
    %c0_27 = arith.constant 0 : index
    %c0_28 = arith.constant 0 : index
    %62 = vector.load %arg6[%c0_27, %c0_28] : memref<512x128xf32, #tpu.memory_space<vmem>>, vector<512x128xf32>
    tpu.vector_store %arg6[%c0_27, %c0_28], %61 {strides = array<i32>} : memref<512x128xf32, #tpu.memory_space<vmem>>, vector<512x128xf32>,
    return
  }
  func.func @transform_0(%arg0: i32) -> (i32, i32) {
    %c0_i32 = arith.constant 0 : i32
    %c0_i32_0 = arith.constant 0 : i32
    %c0_i32_1 = arith.constant 0 : i32
    return %c0_i32, %c0_i32_0 : i32, i32
  }
  func.func @transform_1(%arg0: i32) -> (i32, i32) {
    %c0_i32 = arith.constant 0 : i32
    %c0_i32_0 = arith.constant 0 : i32
    %c0_i32_1 = arith.constant 0 : i32
    return %c0_i32, %c0_i32_0 : i32, i32
  }
  func.func @transform_2(%arg0: i32) -> (i32, i32) {
    %c0_i32 = arith.constant 0 : i32
    %c0_i32_0 = arith.constant 0 : i32
    %c0_i32_1 = arith.constant 0 : i32
    return %c0_i32, %c0_i32_0 : i32, i32
  }
  func.func @transform_3(%arg0: i32) -> (i32, i32) {
    %c0_i32 = arith.constant 0 : i32
    %c0_i32_0 = arith.constant 0 : i32
    %c0_i32_1 = arith.constant 0 : i32
    return %c0_i32, %c0_i32_0 : i32, i32
  }
  func.func @transform_4(%arg0: i32) -> (i32, i32) {
    %c0_i32 = arith.constant 0 : i32
    %c0_i32_0 = arith.constant 0 : i32
    %c0_i32_1 = arith.constant 0 : i32
    return %c0_i32, %c0_i32_0 : i32, i32
  }
  func.func @transform_5(%arg0: i32) -> (i32, i32) {
    %c0_i32 = arith.constant 0 : i32
    %c0_i32_0 = arith.constant 0 : i32
    %c0_i32_1 = arith.constant 0 : i32
    return %c0_i32, %c0_i32_0 : i32, i32
  }
}

</mosaic_0001>

<llo_original>
// kernel: cofrnet_apply.1
$region0: #{cofrnet_apply.1}
  #allocation0 [shape = 'u32[]', space=smem, size = 0x4, offset = 0x4, fixed_abs, tag = 'smem constant byte address 0x4 - core index']
  #allocation1 [shape = 'u32[72,128]{1,0:T(1,128)}', space=vmem, size = 0x9000, scoped, tag = 'internal scratch']
  %s0 = inlined_call_operand.vmem [shape: f32[512,8], index: 0, kind: input, shape index: {}]
  %s1 = inlined_call_operand.vmem [shape: f32[8,384], index: 1, kind: input, shape index: {}]
  %s2 = inlined_call_operand.vmem [shape: f32[1,384], index: 2, kind: input, shape index: {}]
  %s3 = inlined_call_operand.vmem [shape: f32[128,128], index: 3, kind: input, shape index: {}]
  %s4 = inlined_call_operand.vmem [shape: f32[1,128], index: 4, kind: input, shape index: {}]
  %s5 = inlined_call_operand.vmem [shape: f32[512,128], index: 5, kind: output, shape index: {}]
  %s6 = sld [smem:[#allocation0]]
  $region30: #{cofrnet_apply.1} parent=0
    _
  %s8 = ssub.s32 1, %s6
  %s9 = scalar_select 0, %s8, %s6
  // Predicated region
  $region2: #{cofrnet_apply.1} parent=0 // pred_check
    _
  $region3: #{cofrnet_apply.1} parent=0 // pred_check_branch
    %11 = sbr.rel (0) target = $region5
  $region4: #{cofrnet_apply.1} parent=0 // pred_region
    _
  $region5: #{cofrnet_apply.1} parent=0 // pred_fallthru
    _
  // Predicated region
  $region6: #{cofrnet_apply.1} parent=0 // pred_check
    _
  $region7: #{cofrnet_apply.1} parent=0 // pred_check_branch
    %13 = sbr.rel (0) target = $region9
  $region8: #{cofrnet_apply.1} parent=0 // pred_region
    _
  $region9: #{cofrnet_apply.1} parent=0 // pred_fallthru
    _
  // Predicated region
  $region10: #{cofrnet_apply.1} parent=0 // pred_check
    _
  $region11: #{cofrnet_apply.1} parent=0 // pred_check_branch
    %15 = sbr.rel (0) target = $region13
  $region12: #{cofrnet_apply.1} parent=0 // pred_region
    _
  $region13: #{cofrnet_apply.1} parent=0 // pred_fallthru
    _
  // Predicated region
  $region14: #{cofrnet_apply.1} parent=0 // pred_check
    _
  $region15: #{cofrnet_apply.1} parent=0 // pred_check_branch
    %17 = sbr.rel (0) target = $region17
  $region16: #{cofrnet_apply.1} parent=0 // pred_region
    _
  $region17: #{cofrnet_apply.1} parent=0 // pred_fallthru
    _
  // Predicated region
  $region18: #{cofrnet_apply.1} parent=0 // pred_check
    _
  $region19: #{cofrnet_apply.1} parent=0 // pred_check_branch
    %19 = sbr.rel (0) target = $region21
  $region20: #{cofrnet_apply.1} parent=0 // pred_region
    _
  $region21: #{cofrnet_apply.1} parent=0 // pred_fallthru
    _
  %v20 = vld [vmem:[%s0] sm:$0xff]
  %v21 = vld [vmem:[%s0 + $0x8] sm:$0xff]
  %v22 = vld [vmem:[%s0 + $0x10] sm:$0xff]
  %v23 = vld [vmem:[%s0 + $0x18] sm:$0xff]
  %v24 = vld [vmem:[%s0 + $0x20] sm:$0xff]
  %v25 = vld [vmem:[%s0 + $0x28] sm:$0xff]
  %v26 = vld [vmem:[%s0 + $0x30] sm:$0xff]
  %v27 = vld [vmem:[%s0 + $0x38] sm:$0xff]
  %v28 = vld [vmem:[%s0 + $0x40] sm:$0xff]
  %v29 = vld [vmem:[%s0 + $0x48] sm:$0xff]
  %v30 = vld [vmem:[%s0 + $0x50] sm:$0xff]
  %v31 = vld [vmem:[%s0 + $0x58] sm:$0xff]
  %v32 = vld [vmem:[%s0 + $0x60] sm:$0xff]
  %v33 = vld [vmem:[%s0 + $0x68] sm:$0xff]
  %v34 = vld [vmem:[%s0 + $0x70] sm:$0xff]
  %v35 = vld [vmem:[%s0 + $0x78] sm:$0xff]
  %v36 = vld [vmem:[%s0 + $0x80] sm:$0xff]
  %v37 = vld [vmem:[%s0 + $0x88] sm:$0xff]
  %v38 = vld [vmem:[%s0 + $0x90] sm:$0xff]
  %v39 = vld [vmem:[%s0 + $0x98] sm:$0xff]
  %v40 = vld [vmem:[%s0 + $0xa0] sm:$0xff]
  %v41 = vld [vmem:[%s0 + $0xa8] sm:$0xff]
  %v42 = vld [vmem:[%s0 + $0xb0] sm:$0xff]
  %v43 = vld [vmem:[%s0 + $0xb8] sm:$0xff]
  %v44 = vld [vmem:[%s0 + $0xc0] sm:$0xff]
  %v45 = vld [vmem:[%s0 + $0xc8] sm:$0xff]
  %v46 = vld [vmem:[%s0 + $0xd0] sm:$0xff]
  %v47 = vld [vmem:[%s0 + $0xd8] sm:$0xff]
  %v48 = vld [vmem:[%s0 + $0xe0] sm:$0xff]
  %v49 = vld [vmem:[%s0 + $0xe8] sm:$0xff]
  %v50 = vld [vmem:[%s0 + $0xf0] sm:$0xff]
  %v51 = vld [vmem:[%s0 + $0xf8] sm:$0xff]
  %v52 = vld [vmem:[%s0 + $0x100] sm:$0xff]
  %v53 = vld [vmem:[%s0 + $0x108] sm:$0xff]
  %v54 = vld [vmem:[%s0 + $0x110] sm:$0xff]
  %v55 = vld [vmem:[%s0 + $0x118] sm:$0xff]
  %v56 = vld [vmem:[%s0 + $0x120] sm:$0xff]
  %v57 = vld [vmem:[%s0 + $0x128] sm:$0xff]
  %v58 = vld [vmem:[%s0 + $0x130] sm:$0xff]
  %v59 = vld [vmem:[%s0 + $0x138] sm:$0xff]
  %v60 = vld [vmem:[%s0 + $0x140] sm:$0xff]
  %v61 = vld [vmem:[%s0 + $0x148] sm:$0xff]
  %v62 = vld [vmem:[%s0 + $0x150] sm:$0xff]
  %v63 = vld [vmem:[%s0 + $0x158] sm:$0xff]
  %v64 = vld [vmem:[%s0 + $0x160] sm:$0xff]
  %v65 = vld [vmem:[%s0 + $0x168] sm:$0xff]
  %v66 = vld [vmem:[%s0 + $0x170] sm:$0xff]
  %v67 = vld [vmem:[%s0 + $0x178] sm:$0xff]
  %v68 = vld [vmem:[%s0 + $0x180] sm:$0xff]
  %v69 = vld [vmem:[%s0 + $0x188] sm:$0xff]
  %v70 = vld [vmem:[%s0 + $0x190] sm:$0xff]
  %v71 = vld [vmem:[%s0 + $0x198] sm:$0xff]
  %v72 = vld [vmem:[%s0 + $0x1a0] sm:$0xff]
  %v73 = vld [vmem:[%s0 + $0x1a8] sm:$0xff]
  %v74 = vld [vmem:[%s0 + $0x1b0] sm:$0xff]
  %v75 = vld [vmem:[%s0 + $0x1b8] sm:$0xff]
  %v76 = vld [vmem:[%s0 + $0x1c0] sm:$0xff]
  %v77 = vld [vmem:[%s0 + $0x1c8] sm:$0xff]
  %v78 = vld [vmem:[%s0 + $0x1d0] sm:$0xff]
  %v79 = vld [vmem:[%s0 + $0x1d8] sm:$0xff]
  %v80 = vld [vmem:[%s0 + $0x1e0] sm:$0xff]
  %v81 = vld [vmem:[%s0 + $0x1e8] sm:$0xff]
  %v82 = vld [vmem:[%s0 + $0x1f0] sm:$0xff]
  %v83 = vld [vmem:[%s0 + $0x1f8] sm:$0xff]
  %v84 = vld [vmem:[%s1] sm:$0xff]
  %v85 = vld [vmem:[%s1 + $0x8] sm:$0xff]
  %v86 = vld [vmem:[%s1 + $0x10] sm:$0xff]
  %v87 = vld [vmem:[%s2] sm:$0x7]
  %v89 = vperm.slane %v87, 0
  %v90 = vperm.slane %v87, 1
  %v91 = vperm.slane %v87, 2
  %vm95 = vcmask 64512
  %v97 = vsel %vm95, %v20, 0
  %v100 = vsel %vm95, %v21, 0
  %v103 = vsel %vm95, %v22, 0
  %v106 = vsel %vm95, %v23, 0
  %v109 = vsel %vm95, %v24, 0
  %v112 = vsel %vm95, %v25, 0
  %v115 = vsel %vm95, %v26, 0
  %v118 = vsel %vm95, %v27, 0
  %v121 = vsel %vm95, %v28, 0
  %v124 = vsel %vm95, %v29, 0
  %v127 = vsel %vm95, %v30, 0
  %v130 = vsel %vm95, %v31, 0
  %v133 = vsel %vm95, %v32, 0
  %v136 = vsel %vm95, %v33, 0
  %v139 = vsel %vm95, %v34, 0
  %v142 = vsel %vm95, %v35, 0
  %v145 = vsel %vm95, %v36, 0
  %v148 = vsel %vm95, %v37, 0
  %v151 = vsel %vm95, %v38, 0
  %v154 = vsel %vm95, %v39, 0
  %v157 = vsel %vm95, %v40, 0
  %v160 = vsel %vm95, %v41, 0
  %v163 = vsel %vm95, %v42, 0
  %v166 = vsel %vm95, %v43, 0
  %v169 = vsel %vm95, %v44, 0
  %v172 = vsel %vm95, %v45, 0
  %v175 = vsel %vm95, %v46, 0
  %v178 = vsel %vm95, %v47, 0
  %v181 = vsel %vm95, %v48, 0
  %v184 = vsel %vm95, %v49, 0
  %v187 = vsel %vm95, %v50, 0
  %v190 = vsel %vm95, %v51, 0
  %v193 = vsel %vm95, %v52, 0
  %v196 = vsel %vm95, %v53, 0
  %v199 = vsel %vm95, %v54, 0
  %v202 = vsel %vm95, %v55, 0
  %v205 = vsel %vm95, %v56, 0
  %v208 = vsel %vm95, %v57, 0
  %v211 = vsel %vm95, %v58, 0
  %v214 = vsel %vm95, %v59, 0
  %v217 = vsel %vm95, %v60, 0
  %v220 = vsel %vm95, %v61, 0
  %v223 = vsel %vm95, %v62, 0
  %v226 = vsel %vm95, %v63, 0
  %v229 = vsel %vm95, %v64, 0
  %v232 = vsel %vm95, %v65, 0
  %v235 = vsel %vm95, %v66, 0
  %v238 = vsel %vm95, %v67, 0
  %v241 = vsel %vm95, %v68, 0
  %v244 = vsel %vm95, %v69, 0
  %v247 = vsel %vm95, %v70, 0
  %v250 = vsel %vm95, %v71, 0
  %v253 = vsel %vm95, %v72, 0
  %v256 = vsel %vm95, %v73, 0
  %v259 = vsel %vm95, %v74, 0
  %v262 = vsel %vm95, %v75, 0
  %v265 = vsel %vm95, %v76, 0
  %v268 = vsel %vm95, %v77, 0
  %v271 = vsel %vm95, %v78, 0
  %v274 = vsel %vm95, %v79, 0
  %v277 = vsel %vm95, %v80, 0
  %v280 = vsel %vm95, %v81, 0
  %v283 = vsel %vm95, %v82, 0
  %v286 = vsel %vm95, %v83, 0
  %288 = vmatpush.msra.mxu0 0.0
  %289 = vmatpush.msra.mxu0 0.0
  %290 = vmatpush.msra.mxu0 0.0
  %291 = vmatpush.msra.mxu0 0.0
  %292 = vmatpush.msra.mxu0 0.0
  %293 = vmatpush.msra.mxu0 0.0
  %294 = vmatpush.msra.mxu0 0.0
  %295 = vmatpush.msra.mxu0 0.0
  %296 = vmatpush.msra.mxu0 0.0
  %297 = vmatpush.msra.mxu0 0.0
  %298 = vmatpush.msra.mxu0 0.0
  %299 = vmatpush.msra.mxu0 0.0
  %300 = vmatpush.msra.mxu0 0.0
  %301 = vmatpush.msra.mxu0 0.0
  %302 = vmatpush.msra.mxu0 0.0
  %303 = vmatpush.msra.mxu0 %v84
  %304 = vmatmul.f32.gmra.mxu0 %v97
  %v305 = vpop.f32.mrf.mxu0
  %v306 = vadd.f32 %v89, %v305
  %307 = vmatmul.f32.gmra.mxu0 %v100
  %v308 = vpop.f32.mrf.mxu0
  %v309 = vadd.f32 %v89, %v308
  %310 = vmatmul.f32.gmra.mxu0 %v103
  %v311 = vpop.f32.mrf.mxu0
  %v312 = vadd.f32 %v89, %v311
  %313 = vmatmul.f32.gmra.mxu0 %v106
  %v314 = vpop.f32.mrf.mxu0
  %v315 = vadd.f32 %v89, %v314
  %316 = vmatmul.f32.gmra.mxu0 %v109
  %v317 = vpop.f32.mrf.mxu0
  %v318 = vadd.f32 %v89, %v317
  %319 = vmatmul.f32.gmra.mxu0 %v112
  %v320 = vpop.f32.mrf.mxu0
  %v321 = vadd.f32 %v89, %v320
  %322 = vmatmul.f32.gmra.mxu0 %v115
  %v323 = vpop.f32.mrf.mxu0
  %v324 = vadd.f32 %v89, %v323
  %325 = vmatmul.f32.gmra.mxu0 %v118
  %v326 = vpop.f32.mrf.mxu0
  %v327 = vadd.f32 %v89, %v326
  %328 = vmatmul.f32.gmra.mxu0 %v121
  %v329 = vpop.f32.mrf.mxu0
  %v330 = vadd.f32 %v89, %v329
  %331 = vmatmul.f32.gmra.mxu0 %v124
  %v332 = vpop.f32.mrf.mxu0
  %v333 = vadd.f32 %v89, %v332
  %334 = vmatmul.f32.gmra.mxu0 %v127
  %v335 = vpop.f32.mrf.mxu0
  %v336 = vadd.f32 %v89, %v335
  %337 = vmatmul.f32.gmra.mxu0 %v130
  %v338 = vpop.f32.mrf.mxu0
  %v339 = vadd.f32 %v89, %v338
  %340 = vmatmul.f32.gmra.mxu0 %v133
  %v341 = vpop.f32.mrf.mxu0
  %v342 = vadd.f32 %v89, %v341
  %343 = vmatmul.f32.gmra.mxu0 %v136
  %v344 = vpop.f32.mrf.mxu0
  %v345 = vadd.f32 %v89, %v344
  %346 = vmatmul.f32.gmra.mxu0 %v139
  %v347 = vpop.f32.mrf.mxu0
  %v348 = vadd.f32 %v89, %v347
  %349 = vmatmul.f32.gmra.mxu0 %v142
  %v350 = vpop.f32.mrf.mxu0
  %v351 = vadd.f32 %v89, %v350
  %352 = vmatmul.f32.gmra.mxu0 %v145
  %v353 = vpop.f32.mrf.mxu0
  %v354 = vadd.f32 %v89, %v353
  %355 = vmatmul.f32.gmra.mxu0 %v148
  %v356 = vpop.f32.mrf.mxu0
  %v357 = vadd.f32 %v89, %v356
  %358 = vmatmul.f32.gmra.mxu0 %v151
  %v359 = vpop.f32.mrf.mxu0
  %v360 = vadd.f32 %v89, %v359
  %361 = vmatmul.f32.gmra.mxu0 %v154
  %v362 = vpop.f32.mrf.mxu0
  %v363 = vadd.f32 %v89, %v362
  %364 = vmatmul.f32.gmra.mxu0 %v157
  %v365 = vpop.f32.mrf.mxu0
  %v366 = vadd.f32 %v89, %v365
  %367 = vmatmul.f32.gmra.mxu0 %v160
  %v368 = vpop.f32.mrf.mxu0
  %v369 = vadd.f32 %v89, %v368
  %370 = vmatmul.f32.gmra.mxu0 %v163
  %v371 = vpop.f32.mrf.mxu0
  %v372 = vadd.f32 %v89, %v371
  %373 = vmatmul.f32.gmra.mxu0 %v166
  %v374 = vpop.f32.mrf.mxu0
  %v375 = vadd.f32 %v89, %v374
  %376 = vmatmul.f32.gmra.mxu0 %v169
  %v377 = vpop.f32.mrf.mxu0
  %v378 = vadd.f32 %v89, %v377
  %379 = vmatmul.f32.gmra.mxu0 %v172
  %v380 = vpop.f32.mrf.mxu0
  %v381 = vadd.f32 %v89, %v380
  %382 = vmatmul.f32.gmra.mxu0 %v175
  %v383 = vpop.f32.mrf.mxu0
  %v384 = vadd.f32 %v89, %v383
  %385 = vmatmul.f32.gmra.mxu0 %v178
  %v386 = vpop.f32.mrf.mxu0
  %v387 = vadd.f32 %v89, %v386
  %388 = vmatmul.f32.gmra.mxu0 %v181
  %v389 = vpop.f32.mrf.mxu0
  %v390 = vadd.f32 %v89, %v389
  %391 = vmatmul.f32.gmra.mxu0 %v184
  %v392 = vpop.f32.mrf.mxu0
  %v393 = vadd.f32 %v89, %v392
  %394 = vmatmul.f32.gmra.mxu0 %v187
  %v395 = vpop.f32.mrf.mxu0
  %v396 = vadd.f32 %v89, %v395
  %397 = vmatmul.f32.gmra.mxu0 %v190
  %v398 = vpop.f32.mrf.mxu0
  %v399 = vadd.f32 %v89, %v398
  %400 = vmatmul.f32.gmra.mxu0 %v193
  %v401 = vpop.f32.mrf.mxu0
  %v402 = vadd.f32 %v89, %v401
  %403 = vmatmul.f32.gmra.mxu0 %v196
  %v404 = vpop.f32.mrf.mxu0
  %v405 = vadd.f32 %v89, %v404
  %406 = vmatmul.f32.gmra.mxu0 %v199
  %v407 = vpop.f32.mrf.mxu0
  %v408 = vadd.f32 %v89, %v407
  %409 = vmatmul.f32.gmra.mxu0 %v202
  %v410 = vpop.f32.mrf.mxu0
  %v411 = vadd.f32 %v89, %v410
  %412 = vmatmul.f32.gmra.mxu0 %v205
  %v413 = vpop.f32.mrf.mxu0
  %v414 = vadd.f32 %v89, %v413
  %415 = vmatmul.f32.gmra.mxu0 %v208
  %v416 = vpop.f32.mrf.mxu0
  %v417 = vadd.f32 %v89, %v416
  %418 = vmatmul.f32.gmra.mxu0 %v211
  %v419 = vpop.f32.mrf.mxu0
  %v420 = vadd.f32 %v89, %v419
  %421 = vmatmul.f32.gmra.mxu0 %v214
  %v422 = vpop.f32.mrf.mxu0
  %v423 = vadd.f32 %v89, %v422
  %424 = vmatmul.f32.gmra.mxu0 %v217
  %v425 = vpop.f32.mrf.mxu0
  %v426 = vadd.f32 %v89, %v425
  %427 = vmatmul.f32.gmra.mxu0 %v220
  %v428 = vpop.f32.mrf.mxu0
  %v429 = vadd.f32 %v89, %v428
  %430 = vmatmul.f32.gmra.mxu0 %v223
  %v431 = vpop.f32.mrf.mxu0
  %v432 = vadd.f32 %v89, %v431
  %433 = vmatmul.f32.gmra.mxu0 %v226
  %v434 = vpop.f32.mrf.mxu0
  %v435 = vadd.f32 %v89, %v434
  %436 = vmatmul.f32.gmra.mxu0 %v229
  %v437 = vpop.f32.mrf.mxu0
  %v438 = vadd.f32 %v89, %v437
  %439 = vmatmul.f32.gmra.mxu0 %v232
  %v440 = vpop.f32.mrf.mxu0
  %v441 = vadd.f32 %v89, %v440
  %442 = vmatmul.f32.gmra.mxu0 %v235
  %v443 = vpop.f32.mrf.mxu0
  %v444 = vadd.f32 %v89, %v443
  %445 = vmatmul.f32.gmra.mxu0 %v238
  %v446 = vpop.f32.mrf.mxu0
  %v447 = vadd.f32 %v89, %v446
  %448 = vmatmul.f32.gmra.mxu0 %v241
  %v449 = vpop.f32.mrf.mxu0
  %v450 = vadd.f32 %v89, %v449
  %451 = vmatmul.f32.gmra.mxu0 %v244
  %v452 = vpop.f32.mrf.mxu0
  %v453 = vadd.f32 %v89, %v452
  %454 = vmatmul.f32.gmra.mxu0 %v247
  %v455 = vpop.f32.mrf.mxu0
  %v456 = vadd.f32 %v89, %v455
  %457 = vmatmul.f32.gmra.mxu0 %v250
  %v458 = vpop.f32.mrf.mxu0
  %v459 = vadd.f32 %v89, %v458
  %460 = vmatmul.f32.gmra.mxu0 %v253
  %v461 = vpop.f32.mrf.mxu0
  %v462 = vadd.f32 %v89, %v461
  %463 = vmatmul.f32.gmra.mxu0 %v256
  %v464 = vpop.f32.mrf.mxu0
  %v465 = vadd.f32 %v89, %v464
  %466 = vmatmul.f32.gmra.mxu0 %v259
  %v467 = vpop.f32.mrf.mxu0
  %v468 = vadd.f32 %v89, %v467
  %469 = vmatmul.f32.gmra.mxu0 %v262
  %v470 = vpop.f32.mrf.mxu0
  %v471 = vadd.f32 %v89, %v470
  %472 = vmatmul.f32.gmra.mxu0 %v265
  %v473 = vpop.f32.mrf.mxu0
  %v474 = vadd.f32 %v89, %v473
  %475 = vmatmul.f32.gmra.mxu0 %v268
  %v476 = vpop.f32.mrf.mxu0
  %v477 = vadd.f32 %v89, %v476
  %478 = vmatmul.f32.gmra.mxu0 %v271
  %v479 = vpop.f32.mrf.mxu0
  %v480 = vadd.f32 %v89, %v479
  %481 = vmatmul.f32.gmra.mxu0 %v274
  %v482 = vpop.f32.mrf.mxu0
  %v483 = vadd.f32 %v89, %v482
  %484 = vmatmul.f32.gmra.mxu0 %v277
  %v485 = vpop.f32.mrf.mxu0
  %v486 = vadd.f32 %v89, %v485
  %487 = vmatmul.f32.gmra.mxu0 %v280
  %v488 = vpop.f32.mrf.mxu0
  %v489 = vadd.f32 %v89, %v488
  %490 = vmatmul.f32.gmra.mxu0 %v283
  %v491 = vpop.f32.mrf.mxu0
  %v492 = vadd.f32 %v89, %v491
  %493 = vmatmul.f32.gmra.mxu0 %v286
  %v494 = vpop.f32.mrf.mxu0
  %v495 = vadd.f32 %v89, %v494
  %496 = vdwg.mxu0
  %497 = vmatpush.msra.mxu0 0.0
  %498 = vmatpush.msra.mxu0 0.0
  %499 = vmatpush.msra.mxu0 0.0
  %500 = vmatpush.msra.mxu0 0.0
  %501 = vmatpush.msra.mxu0 0.0
  %502 = vmatpush.msra.mxu0 0.0
  %503 = vmatpush.msra.mxu0 0.0
  %504 = vmatpush.msra.mxu0 0.0
  %505 = vmatpush.msra.mxu0 0.0
  %506 = vmatpush.msra.mxu0 0.0
  %507 = vmatpush.msra.mxu0 0.0
  %508 = vmatpush.msra.mxu0 0.0
  %509 = vmatpush.msra.mxu0 0.0
  %510 = vmatpush.msra.mxu0 0.0
  %511 = vmatpush.msra.mxu0 0.0
  %512 = vmatpush.msra.mxu0 %v85
  %513 = vmatmul.f32.gmra.mxu0 %v97
  %v514 = vpop.f32.mrf.mxu0
  %v515 = vadd.f32 %v90, %v514
  %516 = vmatmul.f32.gmra.mxu0 %v100
  %v517 = vpop.f32.mrf.mxu0
  %v518 = vadd.f32 %v90, %v517
  %519 = vmatmul.f32.gmra.mxu0 %v103
  %v520 = vpop.f32.mrf.mxu0
  %v521 = vadd.f32 %v90, %v520
  %522 = vmatmul.f32.gmra.mxu0 %v106
  %v523 = vpop.f32.mrf.mxu0
  %v524 = vadd.f32 %v90, %v523
  %525 = vmatmul.f32.gmra.mxu0 %v109
  %v526 = vpop.f32.mrf.mxu0
  %v527 = vadd.f32 %v90, %v526
  %528 = vmatmul.f32.gmra.mxu0 %v112
  %v529 = vpop.f32.mrf.mxu0
  %v530 = vadd.f32 %v90, %v529
  %531 = vmatmul.f32.gmra.mxu0 %v115
  %v532 = vpop.f32.mrf.mxu0
  %v533 = vadd.f32 %v90, %v532
  %534 = vmatmul.f32.gmra.mxu0 %v118
  %v535 = vpop.f32.mrf.mxu0
  %v536 = vadd.f32 %v90, %v535
  %537 = vmatmul.f32.gmra.mxu0 %v121
  %v538 = vpop.f32.mrf.mxu0
  %v539 = vadd.f32 %v90, %v538
  %540 = vmatmul.f32.gmra.mxu0 %v124
  %v541 = vpop.f32.mrf.mxu0
  %v542 = vadd.f32 %v90, %v541
  %543 = vmatmul.f32.gmra.mxu0 %v127
  %v544 = vpop.f32.mrf.mxu0
  %v545 = vadd.f32 %v90, %v544
  %546 = vmatmul.f32.gmra.mxu0 %v130
  %v547 = vpop.f32.mrf.mxu0
  %v548 = vadd.f32 %v90, %v547
  %549 = vmatmul.f32.gmra.mxu0 %v133
  %v550 = vpop.f32.mrf.mxu0
  %v551 = vadd.f32 %v90, %v550
  %552 = vmatmul.f32.gmra.mxu0 %v136
  %v553 = vpop.f32.mrf.mxu0
  %v554 = vadd.f32 %v90, %v553
  %555 = vmatmul.f32.gmra.mxu0 %v139
  %v556 = vpop.f32.mrf.mxu0
  %v557 = vadd.f32 %v90, %v556
  %558 = vmatmul.f32.gmra.mxu0 %v142
  %v559 = vpop.f32.mrf.mxu0
  %v560 = vadd.f32 %v90, %v559
  %561 = vmatmul.f32.gmra.mxu0 %v145
  %v562 = vpop.f32.mrf.mxu0
  %v563 = vadd.f32 %v90, %v562
  %564 = vmatmul.f32.gmra.mxu0 %v148
  %v565 = vpop.f32.mrf.mxu0
  %v566 = vadd.f32 %v90, %v565
  %567 = vmatmul.f32.gmra.mxu0 %v151
  %v568 = vpop.f32.mrf.mxu0
  %v569 = vadd.f32 %v90, %v568
  %570 = vmatmul.f32.gmra.mxu0 %v154
  %v571 = vpop.f32.mrf.mxu0
  %v572 = vadd.f32 %v90, %v571
  %573 = vmatmul.f32.gmra.mxu0 %v157
  %v574 = vpop.f32.mrf.mxu0
  %v575 = vadd.f32 %v90, %v574
  %576 = vmatmul.f32.gmra.mxu0 %v160
  %v577 = vpop.f32.mrf.mxu0
  %v578 = vadd.f32 %v90, %v577
  %579 = vmatmul.f32.gmra.mxu0 %v163
  %v580 = vpop.f32.mrf.mxu0
  %v581 = vadd.f32 %v90, %v580
  %582 = vmatmul.f32.gmra.mxu0 %v166
  %v583 = vpop.f32.mrf.mxu0
  %v584 = vadd.f32 %v90, %v583
  %585 = vmatmul.f32.gmra.mxu0 %v169
  %v586 = vpop.f32.mrf.mxu0
  %v587 = vadd.f32 %v90, %v586
  %588 = vmatmul.f32.gmra.mxu0 %v172
  %v589 = vpop.f32.mrf.mxu0
  %v590 = vadd.f32 %v90, %v589
  %591 = vmatmul.f32.gmra.mxu0 %v175
  %v592 = vpop.f32.mrf.mxu0
  %v593 = vadd.f32 %v90, %v592
  %594 = vmatmul.f32.gmra.mxu0 %v178
  %v595 = vpop.f32.mrf.mxu0
  %v596 = vadd.f32 %v90, %v595
  %597 = vmatmul.f32.gmra.mxu0 %v181
  %v598 = vpop.f32.mrf.mxu0
  %v599 = vadd.f32 %v90, %v598
  %600 = vmatmul.f32.gmra.mxu0 %v184
  %v601 = vpop.f32.mrf.mxu0
  %v602 = vadd.f32 %v90, %v601
  %603 = vmatmul.f32.gmra.mxu0 %v187
  %v604 = vpop.f32.mrf.mxu0
  %v605 = vadd.f32 %v90, %v604
  %606 = vmatmul.f32.gmra.mxu0 %v190
  %v607 = vpop.f32.mrf.mxu0
  %v608 = vadd.f32 %v90, %v607
  %609 = vmatmul.f32.gmra.mxu0 %v193
  %v610 = vpop.f32.mrf.mxu0
  %v611 = vadd.f32 %v90, %v610
  %612 = vmatmul.f32.gmra.mxu0 %v196
  %v613 = vpop.f32.mrf.mxu0
  %v614 = vadd.f32 %v90, %v613
  %615 = vmatmul.f32.gmra.mxu0 %v199
  %v616 = vpop.f32.mrf.mxu0
  %v617 = vadd.f32 %v90, %v616
  %618 = vmatmul.f32.gmra.mxu0 %v202
  %v619 = vpop.f32.mrf.mxu0
  %v620 = vadd.f32 %v90, %v619
  %621 = vmatmul.f32.gmra.mxu0 %v205
  %v622 = vpop.f32.mrf.mxu0
  %v623 = vadd.f32 %v90, %v622
  %624 = vmatmul.f32.gmra.mxu0 %v208
  %v625 = vpop.f32.mrf.mxu0
  %v626 = vadd.f32 %v90, %v625
  %627 = vmatmul.f32.gmra.mxu0 %v211
  %v628 = vpop.f32.mrf.mxu0
  %v629 = vadd.f32 %v90, %v628
  %630 = vmatmul.f32.gmra.mxu0 %v214
  %v631 = vpop.f32.mrf.mxu0
  %v632 = vadd.f32 %v90, %v631
  %633 = vmatmul.f32.gmra.mxu0 %v217
  %v634 = vpop.f32.mrf.mxu0
  %v635 = vadd.f32 %v90, %v634
  %636 = vmatmul.f32.gmra.mxu0 %v220
  %v637 = vpop.f32.mrf.mxu0
  %v638 = vadd.f32 %v90, %v637
  %639 = vmatmul.f32.gmra.mxu0 %v223
  %v640 = vpop.f32.mrf.mxu0
  %v641 = vadd.f32 %v90, %v640
  %642 = vmatmul.f32.gmra.mxu0 %v226
  %v643 = vpop.f32.mrf.mxu0
  %v644 = vadd.f32 %v90, %v643
  %645 = vmatmul.f32.gmra.mxu0 %v229
  %v646 = vpop.f32.mrf.mxu0
  %v647 = vadd.f32 %v90, %v646
  %648 = vmatmul.f32.gmra.mxu0 %v232
  %v649 = vpop.f32.mrf.mxu0
  %v650 = vadd.f32 %v90, %v649
  %651 = vmatmul.f32.gmra.mxu0 %v235
  %v652 = vpop.f32.mrf.mxu0
  %v653 = vadd.f32 %v90, %v652
  %654 = vmatmul.f32.gmra.mxu0 %v238
  %v655 = vpop.f32.mrf.mxu0
  %v656 = vadd.f32 %v90, %v655
  %657 = vmatmul.f32.gmra.mxu0 %v241
  %v658 = vpop.f32.mrf.mxu0
  %v659 = vadd.f32 %v90, %v658
  %660 = vmatmul.f32.gmra.mxu0 %v244
  %v661 = vpop.f32.mrf.mxu0
  %v662 = vadd.f32 %v90, %v661
  %663 = vmatmul.f32.gmra.mxu0 %v247
  %v664 = vpop.f32.mrf.mxu0
  %v665 = vadd.f32 %v90, %v664
  %666 = vmatmul.f32.gmra.mxu0 %v250
  %v667 = vpop.f32.mrf.mxu0
  %v668 = vadd.f32 %v90, %v667
  %669 = vmatmul.f32.gmra.mxu0 %v253
  %v670 = vpop.f32.mrf.mxu0
  %v671 = vadd.f32 %v90, %v670
  %672 = vmatmul.f32.gmra.mxu0 %v256
  %v673 = vpop.f32.mrf.mxu0
  %v674 = vadd.f32 %v90, %v673
  %675 = vmatmul.f32.gmra.mxu0 %v259
  %v676 = vpop.f32.mrf.mxu0
  %v677 = vadd.f32 %v90, %v676
  %678 = vmatmul.f32.gmra.mxu0 %v262
  %v679 = vpop.f32.mrf.mxu0
  %v680 = vadd.f32 %v90, %v679
  %681 = vmatmul.f32.gmra.mxu0 %v265
  %v682 = vpop.f32.mrf.mxu0
  %v683 = vadd.f32 %v90, %v682
  %684 = vmatmul.f32.gmra.mxu0 %v268
  %v685 = vpop.f32.mrf.mxu0
  %v686 = vadd.f32 %v90, %v685
  %687 = vmatmul.f32.gmra.mxu0 %v271
  %v688 = vpop.f32.mrf.mxu0
  %v689 = vadd.f32 %v90, %v688
  %690 = vmatmul.f32.gmra.mxu0 %v274
  %v691 = vpop.f32.mrf.mxu0
  %v692 = vadd.f32 %v90, %v691
  %693 = vmatmul.f32.gmra.mxu0 %v277
  %v694 = vpop.f32.mrf.mxu0
  %v695 = vadd.f32 %v90, %v694
  %696 = vmatmul.f32.gmra.mxu0 %v280
  %v697 = vpop.f32.mrf.mxu0
  %v698 = vadd.f32 %v90, %v697
  %699 = vmatmul.f32.gmra.mxu0 %v283
  %v700 = vpop.f32.mrf.mxu0
  %v701 = vadd.f32 %v90, %v700
  %702 = vmatmul.f32.gmra.mxu0 %v286
  %v703 = vpop.f32.mrf.mxu0
  %v704 = vadd.f32 %v90, %v703
  %705 = vdwg.mxu0
  %706 = vmatpush.msra.mxu0 0.0
  %707 = vmatpush.msra.mxu0 0.0
  %708 = vmatpush.msra.mxu0 0.0
  %709 = vmatpush.msra.mxu0 0.0
  %710 = vmatpush.msra.mxu0 0.0
  %711 = vmatpush.msra.mxu0 0.0
  %712 = vmatpush.msra.mxu0 0.0
  %713 = vmatpush.msra.mxu0 0.0
  %714 = vmatpush.msra.mxu0 0.0
  %715 = vmatpush.msra.mxu0 0.0
  %716 = vmatpush.msra.mxu0 0.0
  %717 = vmatpush.msra.mxu0 0.0
  %718 = vmatpush.msra.mxu0 0.0
  %719 = vmatpush.msra.mxu0 0.0
  %720 = vmatpush.msra.mxu0 0.0
  %721 = vmatpush.msra.mxu0 %v86
  %722 = vmatmul.f32.gmra.mxu0 %v97
  %v723 = vpop.f32.mrf.mxu0
  %v724 = vadd.f32 %v91, %v723
  %725 = vmatmul.f32.gmra.mxu0 %v100
  %v726 = vpop.f32.mrf.mxu0
  %v727 = vadd.f32 %v91, %v726
  %728 = vmatmul.f32.gmra.mxu0 %v103
  %v729 = vpop.f32.mrf.mxu0
  %v730 = vadd.f32 %v91, %v729
  %731 = vmatmul.f32.gmra.mxu0 %v106
  %v732 = vpop.f32.mrf.mxu0
  %v733 = vadd.f32 %v91, %v732
  %734 = vmatmul.f32.gmra.mxu0 %v109
  %v735 = vpop.f32.mrf.mxu0
  %v736 = vadd.f32 %v91, %v735
  %737 = vmatmul.f32.gmra.mxu0 %v112
  %v738 = vpop.f32.mrf.mxu0
  %v739 = vadd.f32 %v91, %v738
  %740 = vmatmul.f32.gmra.mxu0 %v115
  %v741 = vpop.f32.mrf.mxu0
  %v742 = vadd.f32 %v91, %v741
  %743 = vmatmul.f32.gmra.mxu0 %v118
  %v744 = vpop.f32.mrf.mxu0
  %v745 = vadd.f32 %v91, %v744
  %746 = vmatmul.f32.gmra.mxu0 %v121
  %v747 = vpop.f32.mrf.mxu0
  %v748 = vadd.f32 %v91, %v747
  %749 = vmatmul.f32.gmra.mxu0 %v124
  %v750 = vpop.f32.mrf.mxu0
  %v751 = vadd.f32 %v91, %v750
  %752 = vmatmul.f32.gmra.mxu0 %v127
  %v753 = vpop.f32.mrf.mxu0
  %v754 = vadd.f32 %v91, %v753
  %755 = vmatmul.f32.gmra.mxu0 %v130
  %v756 = vpop.f32.mrf.mxu0
  %v757 = vadd.f32 %v91, %v756
  %758 = vmatmul.f32.gmra.mxu0 %v133
  %v759 = vpop.f32.mrf.mxu0
  %v760 = vadd.f32 %v91, %v759
  %761 = vmatmul.f32.gmra.mxu0 %v136
  %v762 = vpop.f32.mrf.mxu0
  %v763 = vadd.f32 %v91, %v762
  %764 = vmatmul.f32.gmra.mxu0 %v139
  %v765 = vpop.f32.mrf.mxu0
  %v766 = vadd.f32 %v91, %v765
  %767 = vmatmul.f32.gmra.mxu0 %v142
  %v768 = vpop.f32.mrf.mxu0
  %v769 = vadd.f32 %v91, %v768
  %770 = vmatmul.f32.gmra.mxu0 %v145
  %v771 = vpop.f32.mrf.mxu0
  %v772 = vadd.f32 %v91, %v771
  %773 = vmatmul.f32.gmra.mxu0 %v148
  %v774 = vpop.f32.mrf.mxu0
  %v775 = vadd.f32 %v91, %v774
  %776 = vmatmul.f32.gmra.mxu0 %v151
  %v777 = vpop.f32.mrf.mxu0
  %v778 = vadd.f32 %v91, %v777
  %779 = vmatmul.f32.gmra.mxu0 %v154
  %v780 = vpop.f32.mrf.mxu0
  %v781 = vadd.f32 %v91, %v780
  %782 = vmatmul.f32.gmra.mxu0 %v157
  %v783 = vpop.f32.mrf.mxu0
  %v784 = vadd.f32 %v91, %v783
  %785 = vmatmul.f32.gmra.mxu0 %v160
  %v786 = vpop.f32.mrf.mxu0
  %v787 = vadd.f32 %v91, %v786
  %788 = vmatmul.f32.gmra.mxu0 %v163
  %v789 = vpop.f32.mrf.mxu0
  %v790 = vadd.f32 %v91, %v789
  %791 = vmatmul.f32.gmra.mxu0 %v166
  %v792 = vpop.f32.mrf.mxu0
  %v793 = vadd.f32 %v91, %v792
  %794 = vmatmul.f32.gmra.mxu0 %v169
  %v795 = vpop.f32.mrf.mxu0
  %v796 = vadd.f32 %v91, %v795
  %797 = vmatmul.f32.gmra.mxu0 %v172
  %v798 = vpop.f32.mrf.mxu0
  %v799 = vadd.f32 %v91, %v798
  %800 = vmatmul.f32.gmra.mxu0 %v175
  %v801 = vpop.f32.mrf.mxu0
  %v802 = vadd.f32 %v91, %v801
  %803 = vmatmul.f32.gmra.mxu0 %v178
  %v804 = vpop.f32.mrf.mxu0
  %v805 = vadd.f32 %v91, %v804
  %806 = vmatmul.f32.gmra.mxu0 %v181
  %v807 = vpop.f32.mrf.mxu0
  %v808 = vadd.f32 %v91, %v807
  %809 = vmatmul.f32.gmra.mxu0 %v184
  %v810 = vpop.f32.mrf.mxu0
  %v811 = vadd.f32 %v91, %v810
  %812 = vmatmul.f32.gmra.mxu0 %v187
  %v813 = vpop.f32.mrf.mxu0
  %v814 = vadd.f32 %v91, %v813
  %815 = vmatmul.f32.gmra.mxu0 %v190
  %v816 = vpop.f32.mrf.mxu0
  %v817 = vadd.f32 %v91, %v816
  %818 = vmatmul.f32.gmra.mxu0 %v193
  %v819 = vpop.f32.mrf.mxu0
  %v820 = vadd.f32 %v91, %v819
  %821 = vmatmul.f32.gmra.mxu0 %v196
  %v822 = vpop.f32.mrf.mxu0
  %v823 = vadd.f32 %v91, %v822
  %824 = vmatmul.f32.gmra.mxu0 %v199
  %v825 = vpop.f32.mrf.mxu0
  %v826 = vadd.f32 %v91, %v825
  %827 = vmatmul.f32.gmra.mxu0 %v202
  %v828 = vpop.f32.mrf.mxu0
  %v829 = vadd.f32 %v91, %v828
  %830 = vmatmul.f32.gmra.mxu0 %v205
  %v831 = vpop.f32.mrf.mxu0
  %v832 = vadd.f32 %v91, %v831
  %833 = vmatmul.f32.gmra.mxu0 %v208
  %v834 = vpop.f32.mrf.mxu0
  %v835 = vadd.f32 %v91, %v834
  %836 = vmatmul.f32.gmra.mxu0 %v211
  %v837 = vpop.f32.mrf.mxu0
  %v838 = vadd.f32 %v91, %v837
  %839 = vmatmul.f32.gmra.mxu0 %v214
  %v840 = vpop.f32.mrf.mxu0
  %v841 = vadd.f32 %v91, %v840
  %842 = vmatmul.f32.gmra.mxu0 %v217
  %v843 = vpop.f32.mrf.mxu0
  %v844 = vadd.f32 %v91, %v843
  %845 = vmatmul.f32.gmra.mxu0 %v220
  %v846 = vpop.f32.mrf.mxu0
  %v847 = vadd.f32 %v91, %v846
  %848 = vmatmul.f32.gmra.mxu0 %v223
  %v849 = vpop.f32.mrf.mxu0
  %v850 = vadd.f32 %v91, %v849
  %851 = vmatmul.f32.gmra.mxu0 %v226
  %v852 = vpop.f32.mrf.mxu0
  %v853 = vadd.f32 %v91, %v852
  %854 = vmatmul.f32.gmra.mxu0 %v229
  %v855 = vpop.f32.mrf.mxu0
  %v856 = vadd.f32 %v91, %v855
  %857 = vmatmul.f32.gmra.mxu0 %v232
  %v858 = vpop.f32.mrf.mxu0
  %v859 = vadd.f32 %v91, %v858
  %860 = vmatmul.f32.gmra.mxu0 %v235
  %v861 = vpop.f32.mrf.mxu0
  %v862 = vadd.f32 %v91, %v861
  %863 = vmatmul.f32.gmra.mxu0 %v238
  %v864 = vpop.f32.mrf.mxu0
  %v865 = vadd.f32 %v91, %v864
  %866 = vmatmul.f32.gmra.mxu0 %v241
  %v867 = vpop.f32.mrf.mxu0
  %v868 = vadd.f32 %v91, %v867
  %869 = vmatmul.f32.gmra.mxu0 %v244
  %v870 = vpop.f32.mrf.mxu0
  %v871 = vadd.f32 %v91, %v870
  %872 = vmatmul.f32.gmra.mxu0 %v247
  %v873 = vpop.f32.mrf.mxu0
  %v874 = vadd.f32 %v91, %v873
  %875 = vmatmul.f32.gmra.mxu0 %v250
  %v876 = vpop.f32.mrf.mxu0
  %v877 = vadd.f32 %v91, %v876
  %878 = vmatmul.f32.gmra.mxu0 %v253
  %v879 = vpop.f32.mrf.mxu0
  %v880 = vadd.f32 %v91, %v879
  %881 = vmatmul.f32.gmra.mxu0 %v256
  %v882 = vpop.f32.mrf.mxu0
  %v883 = vadd.f32 %v91, %v882
  %884 = vmatmul.f32.gmra.mxu0 %v259
  %v885 = vpop.f32.mrf.mxu0
  %v886 = vadd.f32 %v91, %v885
  %887 = vmatmul.f32.gmra.mxu0 %v262
  %v888 = vpop.f32.mrf.mxu0
  %v889 = vadd.f32 %v91, %v888
  %890 = vmatmul.f32.gmra.mxu0 %v265
  %v891 = vpop.f32.mrf.mxu0
  %v892 = vadd.f32 %v91, %v891
  %893 = vmatmul.f32.gmra.mxu0 %v268
  %v894 = vpop.f32.mrf.mxu0
  %v895 = vadd.f32 %v91, %v894
  %896 = vmatmul.f32.gmra.mxu0 %v271
  %v897 = vpop.f32.mrf.mxu0
  %v898 = vadd.f32 %v91, %v897
  %899 = vmatmul.f32.gmra.mxu0 %v274
  %v900 = vpop.f32.mrf.mxu0
  %v901 = vadd.f32 %v91, %v900
  %902 = vmatmul.f32.gmra.mxu0 %v277
  %v903 = vpop.f32.mrf.mxu0
  %v904 = vadd.f32 %v91, %v903
  %905 = vmatmul.f32.gmra.mxu0 %v280
  %v906 = vpop.f32.mrf.mxu0
  %v907 = vadd.f32 %v91, %v906
  %908 = vmatmul.f32.gmra.mxu0 %v283
  %v909 = vpop.f32.mrf.mxu0
  %v910 = vadd.f32 %v91, %v909
  %911 = vmatmul.f32.gmra.mxu0 %v286
  %v912 = vpop.f32.mrf.mxu0
  %v913 = vadd.f32 %v91, %v912
  %914 = vdwg.mxu0
  %v915 = vand.u32 2147483647, %v306
  %v916 = vand.u32 2147483647, %v309
  %v917 = vand.u32 2147483647, %v312
  %v918 = vand.u32 2147483647, %v315
  %v919 = vand.u32 2147483647, %v318
  %v920 = vand.u32 2147483647, %v321
  %v921 = vand.u32 2147483647, %v324
  %v922 = vand.u32 2147483647, %v327
  %v923 = vand.u32 2147483647, %v330
  %v924 = vand.u32 2147483647, %v333
  %v925 = vand.u32 2147483647, %v336
  %v926 = vand.u32 2147483647, %v339
  %v927 = vand.u32 2147483647, %v342
  %v928 = vand.u32 2147483647, %v345
  %v929 = vand.u32 2147483647, %v348
  %v930 = vand.u32 2147483647, %v351
  %v931 = vand.u32 2147483647, %v354
  %v932 = vand.u32 2147483647, %v357
  %v933 = vand.u32 2147483647, %v360
  %v934 = vand.u32 2147483647, %v363
  %v935 = vand.u32 2147483647, %v366
  %v936 = vand.u32 2147483647, %v369
  %v937 = vand.u32 2147483647, %v372
  %v938 = vand.u32 2147483647, %v375
  %v939 = vand.u32 2147483647, %v378
  %v940 = vand.u32 2147483647, %v381
  %v941 = vand.u32 2147483647, %v384
  %v942 = vand.u32 2147483647, %v387
  %v943 = vand.u32 2147483647, %v390
  %v944 = vand.u32 2147483647, %v393
  %v945 = vand.u32 2147483647, %v396
  %v946 = vand.u32 2147483647, %v399
  %v947 = vand.u32 2147483647, %v402
  %v948 = vand.u32 2147483647, %v405
  %v949 = vand.u32 2147483647, %v408
  %v950 = vand.u32 2147483647, %v411
  %v951 = vand.u32 2147483647, %v414
  %v952 = vand.u32 2147483647, %v417
  %v953 = vand.u32 2147483647, %v420
  %v954 = vand.u32 2147483647, %v423
  %v955 = vand.u32 2147483647, %v426
  %v956 = vand.u32 2147483647, %v429
  %v957 = vand.u32 2147483647, %v432
  %v958 = vand.u32 2147483647, %v435
  %v959 = vand.u32 2147483647, %v438
  %v960 = vand.u32 2147483647, %v441
  %v961 = vand.u32 2147483647, %v444
  %v962 = vand.u32 2147483647, %v447
  %v963 = vand.u32 2147483647, %v450
  %v964 = vand.u32 2147483647, %v453
  %v965 = vand.u32 2147483647, %v456
  %v966 = vand.u32 2147483647, %v459
  %v967 = vand.u32 2147483647, %v462
  %v968 = vand.u32 2147483647, %v465
  %v969 = vand.u32 2147483647, %v468
  %v970 = vand.u32 2147483647, %v471
  %v971 = vand.u32 2147483647, %v474
  %v972 = vand.u32 2147483647, %v477
  %v973 = vand.u32 2147483647, %v480
  %v974 = vand.u32 2147483647, %v483
  %v975 = vand.u32 2147483647, %v486
  %v976 = vand.u32 2147483647, %v489
  %v977 = vand.u32 2147483647, %v492
  %v978 = vand.u32 2147483647, %v495
  %vm979 = vcmp.lt.f32.partialorder %v915, 0.01
  %vm980 = vcmp.lt.f32.partialorder %v916, 0.01
  %vm981 = vcmp.lt.f32.partialorder %v917, 0.01
  %vm982 = vcmp.lt.f32.partialorder %v918, 0.01
  %vm983 = vcmp.lt.f32.partialorder %v919, 0.01
  %vm984 = vcmp.lt.f32.partialorder %v920, 0.01
  %vm985 = vcmp.lt.f32.partialorder %v921, 0.01
  %vm986 = vcmp.lt.f32.partialorder %v922, 0.01
  %vm987 = vcmp.lt.f32.partialorder %v923, 0.01
  %vm988 = vcmp.lt.f32.partialorder %v924, 0.01
  %vm989 = vcmp.lt.f32.partialorder %v925, 0.01
  %vm990 = vcmp.lt.f32.partialorder %v926, 0.01
  %vm991 = vcmp.lt.f32.partialorder %v927, 0.01
  %vm992 = vcmp.lt.f32.partialorder %v928, 0.01
  %vm993 = vcmp.lt.f32.partialorder %v929, 0.01
  %vm994 = vcmp.lt.f32.partialorder %v930, 0.01
  %vm995 = vcmp.lt.f32.partialorder %v931, 0.01
  %vm996 = vcmp.lt.f32.partialorder %v932, 0.01
  %vm997 = vcmp.lt.f32.partialorder %v933, 0.01
  %vm998 = vcmp.lt.f32.partialorder %v934, 0.01
  %vm999 = vcmp.lt.f32.partialorder %v935, 0.01
  %vm1000 = vcmp.lt.f32.partialorder %v936, 0.01
  %vm1001 = vcmp.lt.f32.partialorder %v937, 0.01
  %vm1002 = vcmp.lt.f32.partialorder %v938, 0.01
  %vm1003 = vcmp.lt.f32.partialorder %v939, 0.01
  %vm1004 = vcmp.lt.f32.partialorder %v940, 0.01
  %vm1005 = vcmp.lt.f32.partialorder %v941, 0.01
  %vm1006 = vcmp.lt.f32.partialorder %v942, 0.01
  %vm1007 = vcmp.lt.f32.partialorder %v943, 0.01
  %vm1008 = vcmp.lt.f32.partialorder %v944, 0.01
  %vm1009 = vcmp.lt.f32.partialorder %v945, 0.01
  %vm1010 = vcmp.lt.f32.partialorder %v946, 0.01
  %vm1011 = vcmp.lt.f32.partialorder %v947, 0.01
  %vm1012 = vcmp.lt.f32.partialorder %v948, 0.01
  %vm1013 = vcmp.lt.f32.partialorder %v949, 0.01
  %vm1014 = vcmp.lt.f32.partialorder %v950, 0.01
  %vm1015 = vcmp.lt.f32.partialorder %v951, 0.01
  %vm1016 = vcmp.lt.f32.partialorder %v952, 0.01
  %vm1017 = vcmp.lt.f32.partialorder %v953, 0.01
  %vm1018 = vcmp.lt.f32.partialorder %v954, 0.01
  %vm1019 = vcmp.lt.f32.partialorder %v955, 0.01
  %vm1020 = vcmp.lt.f32.partialorder %v956, 0.01
  %vm1021 = vcmp.lt.f32.partialorder %v957, 0.01
  %vm1022 = vcmp.lt.f32.partialorder %v958, 0.01
  %vm1023 = vcmp.lt.f32.partialorder %v959, 0.01
  %vm1024 = vcmp.lt.f32.partialorder %v960, 0.01
  %vm1025 = vcmp.lt.f32.partialorder %v961, 0.01
  %vm1026 = vcmp.lt.f32.partialorder %v962, 0.01
  %vm1027 = vcmp.lt.f32.partialorder %v963, 0.01
  %vm1028 = vcmp.lt.f32.partialorder %v964, 0.01
  %vm1029 = vcmp.lt.f32.partialorder %v965, 0.01
  %vm1030 = vcmp.lt.f32.partialorder %v966, 0.01
  %vm1031 = vcmp.lt.f32.partialorder %v967, 0.01
  %vm1032 = vcmp.lt.f32.partialorder %v968, 0.01
  %vm1033 = vcmp.lt.f32.partialorder %v969, 0.01
  %vm1034 = vcmp.lt.f32.partialorder %v970, 0.01
  %vm1035 = vcmp.lt.f32.partialorder %v971, 0.01
  %vm1036 = vcmp.lt.f32.partialorder %v972, 0.01
  %vm1037 = vcmp.lt.f32.partialorder %v973, 0.01
  %vm1038 = vcmp.lt.f32.partialorder %v974, 0.01
  %vm1039 = vcmp.lt.f32.partialorder %v975, 0.01
  %vm1040 = vcmp.lt.f32.partialorder %v976, 0.01
  %vm1041 = vcmp.lt.f32.partialorder %v977, 0.01
  %vm1042 = vcmp.lt.f32.partialorder %v978, 0.01
  %vm1043 = vcmp.lt.f32.partialorder %v306, 0.0
  %vm1044 = vcmp.lt.f32.partialorder %v309, 0.0
  %vm1045 = vcmp.lt.f32.partialorder %v312, 0.0
  %vm1046 = vcmp.lt.f32.partialorder %v315, 0.0
  %vm1047 = vcmp.lt.f32.partialorder %v318, 0.0
  %vm1048 = vcmp.lt.f32.partialorder %v321, 0.0
  %vm1049 = vcmp.lt.f32.partialorder %v324, 0.0
  %vm1050 = vcmp.lt.f32.partialorder %v327, 0.0
  %vm1051 = vcmp.lt.f32.partialorder %v330, 0.0
  %vm1052 = vcmp.lt.f32.partialorder %v333, 0.0
  %vm1053 = vcmp.lt.f32.partialorder %v336, 0.0
  %vm1054 = vcmp.lt.f32.partialorder %v339, 0.0
  %vm1055 = vcmp.lt.f32.partialorder %v342, 0.0
  %vm1056 = vcmp.lt.f32.partialorder %v345, 0.0
  %vm1057 = vcmp.lt.f32.partialorder %v348, 0.0
  %vm1058 = vcmp.lt.f32.partialorder %v351, 0.0
  %vm1059 = vcmp.lt.f32.partialorder %v354, 0.0
  %vm1060 = vcmp.lt.f32.partialorder %v357, 0.0
  %vm1061 = vcmp.lt.f32.partialorder %v360, 0.0
  %vm1062 = vcmp.lt.f32.partialorder %v363, 0.0
  %vm1063 = vcmp.lt.f32.partialorder %v366, 0.0
  %vm1064 = vcmp.lt.f32.partialorder %v369, 0.0
  %vm1065 = vcmp.lt.f32.partialorder %v372, 0.0
  %vm1066 = vcmp.lt.f32.partialorder %v375, 0.0
  %vm1067 = vcmp.lt.f32.partialorder %v378, 0.0
  %vm1068 = vcmp.lt.f32.partialorder %v381, 0.0
  %vm1069 = vcmp.lt.f32.partialorder %v384, 0.0
  %vm1070 = vcmp.lt.f32.partialorder %v387, 0.0
  %vm1071 = vcmp.lt.f32.partialorder %v390, 0.0
  %vm1072 = vcmp.lt.f32.partialorder %v393, 0.0
  %vm1073 = vcmp.lt.f32.partialorder %v396, 0.0
  %vm1074 = vcmp.lt.f32.partialorder %v399, 0.0
  %vm1075 = vcmp.lt.f32.partialorder %v402, 0.0
  %vm1076 = vcmp.lt.f32.partialorder %v405, 0.0
  %vm1077 = vcmp.lt.f32.partialorder %v408, 0.0
  %vm1078 = vcmp.lt.f32.partialorder %v411, 0.0
  %vm1079 = vcmp.lt.f32.partialorder %v414, 0.0
  %vm1080 = vcmp.lt.f32.partialorder %v417, 0.0
  %vm1081 = vcmp.lt.f32.partialorder %v420, 0.0
  %vm1082 = vcmp.lt.f32.partialorder %v423, 0.0
  %vm1083 = vcmp.lt.f32.partialorder %v426, 0.0
  %vm1084 = vcmp.lt.f32.partialorder %v429, 0.0
  %vm1085 = vcmp.lt.f32.partialorder %v432, 0.0
  %vm1086 = vcmp.lt.f32.partialorder %v435, 0.0
  %vm1087 = vcmp.lt.f32.partialorder %v438, 0.0
  %vm1088 = vcmp.lt.f32.partialorder %v441, 0.0
  %vm1089 = vcmp.lt.f32.partialorder %v444, 0.0
  %vm1090 = vcmp.lt.f32.partialorder %v447, 0.0
  %vm1091 = vcmp.lt.f32.partialorder %v450, 0.0
  %vm1092 = vcmp.lt.f32.partialorder %v453, 0.0
  %vm1093 = vcmp.lt.f32.partialorder %v456, 0.0
  %vm1094 = vcmp.lt.f32.partialorder %v459, 0.0
  %vm1095 = vcmp.lt.f32.partialorder %v462, 0.0
  %vm1096 = vcmp.lt.f32.partialorder %v465, 0.0
  %vm1097 = vcmp.lt.f32.partialorder %v468, 0.0
  %vm1098 = vcmp.lt.f32.partialorder %v471, 0.0
  %vm1099 = vcmp.lt.f32.partialorder %v474, 0.0
  %vm1100 = vcmp.lt.f32.partialorder %v477, 0.0
  %vm1101 = vcmp.lt.f32.partialorder %v480, 0.0
  %vm1102 = vcmp.lt.f32.partialorder %v483, 0.0
  %vm1103 = vcmp.lt.f32.partialorder %v486, 0.0
  %vm1104 = vcmp.lt.f32.partialorder %v489, 0.0
  %vm1105 = vcmp.lt.f32.partialorder %v492, 0.0
  %vm1106 = vcmp.lt.f32.partialorder %v495, 0.0
  %v1107 = vsel %vm1043, -0.01, 0.01
  %v1108 = vsel %vm1044, -0.01, 0.01
  %v1109 = vsel %vm1045, -0.01, 0.01
  %v1110 = vsel %vm1046, -0.01, 0.01
  %v1111 = vsel %vm1047, -0.01, 0.01
  %v1112 = vsel %vm1048, -0.01, 0.01
  %v1113 = vsel %vm1049, -0.01, 0.01
  %v1114 = vsel %vm1050, -0.01, 0.01
  %v1115 = vsel %vm1051, -0.01, 0.01
  %v1116 = vsel %vm1052, -0.01, 0.01
  %v1117 = vsel %vm1053, -0.01, 0.01
  %v1118 = vsel %vm1054, -0.01, 0.01
  %v1119 = vsel %vm1055, -0.01, 0.01
  %v1120 = vsel %vm1056, -0.01, 0.01
  %v1121 = vsel %vm1057, -0.01, 0.01
  %v1122 = vsel %vm1058, -0.01, 0.01
  %v1123 = vsel %vm1059, -0.01, 0.01
  %v1124 = vsel %vm1060, -0.01, 0.01
  %v1125 = vsel %vm1061, -0.01, 0.01
  %v1126 = vsel %vm1062, -0.01, 0.01
  %v1127 = vsel %vm1063, -0.01, 0.01
  %v1128 = vsel %vm1064, -0.01, 0.01
  %v1129 = vsel %vm1065, -0.01, 0.01
  %v1130 = vsel %vm1066, -0.01, 0.01
  %v1131 = vsel %vm1067, -0.01, 0.01
  %v1132 = vsel %vm1068, -0.01, 0.01
  %v1133 = vsel %vm1069, -0.01, 0.01
  %v1134 = vsel %vm1070, -0.01, 0.01
  %v1135 = vsel %vm1071, -0.01, 0.01
  %v1136 = vsel %vm1072, -0.01, 0.01
  %v1137 = vsel %vm1073, -0.01, 0.01
  %v1138 = vsel %vm1074, -0.01, 0.01
  %v1139 = vsel %vm1075, -0.01, 0.01
  %v1140 = vsel %vm1076, -0.01, 0.01
  %v1141 = vsel %vm1077, -0.01, 0.01
  %v1142 = vsel %vm1078, -0.01, 0.01
  %v1143 = vsel %vm1079, -0.01, 0.01
  %v1144 = vsel %vm1080, -0.01, 0.01
  %v1145 = vsel %vm1081, -0.01, 0.01
  %v1146 = vsel %vm1082, -0.01, 0.01
  %v1147 = vsel %vm1083, -0.01, 0.01
  %v1148 = vsel %vm1084, -0.01, 0.01
  %v1149 = vsel %vm1085, -0.01, 0.01
  %v1150 = vsel %vm1086, -0.01, 0.01
  %v1151 = vsel %vm1087, -0.01, 0.01
  %v1152 = vsel %vm1088, -0.01, 0.01
  %v1153 = vsel %vm1089, -0.01, 0.01
  %v1154 = vsel %vm1090, -0.01, 0.01
  %v1155 = vsel %vm1091, -0.01, 0.01
  %v1156 = vsel %vm1092, -0.01, 0.01
  %v1157 = vsel %vm1093, -0.01, 0.01
  %v1158 = vsel %vm1094, -0.01, 0.01
  %v1159 = vsel %vm1095, -0.01, 0.01
  %v1160 = vsel %vm1096, -0.01, 0.01
  %v1161 = vsel %vm1097, -0.01, 0.01
  %v1162 = vsel %vm1098, -0.01, 0.01
  %v1163 = vsel %vm1099, -0.01, 0.01
  %v1164 = vsel %vm1100, -0.01, 0.01
  %v1165 = vsel %vm1101, -0.01, 0.01
  %v1166 = vsel %vm1102, -0.01, 0.01
  %v1167 = vsel %vm1103, -0.01, 0.01
  %v1168 = vsel %vm1104, -0.01, 0.01
  %v1169 = vsel %vm1105, -0.01, 0.01
  %v1170 = vsel %vm1106, -0.01, 0.01
  %v1171 = vsel %vm979, %v1107, %v306
  %v1172 = vsel %vm980, %v1108, %v309
  %v1173 = vsel %vm981, %v1109, %v312
  %v1174 = vsel %vm982, %v1110, %v315
  %v1175 = vsel %vm983, %v1111, %v318
  %v1176 = vsel %vm984, %v1112, %v321
  %v1177 = vsel %vm985, %v1113, %v324
  %v1178 = vsel %vm986, %v1114, %v327
  %v1179 = vsel %vm987, %v1115, %v330
  %v1180 = vsel %vm988, %v1116, %v333
  %v1181 = vsel %vm989, %v1117, %v336
  %v1182 = vsel %vm990, %v1118, %v339
  %v1183 = vsel %vm991, %v1119, %v342
  %v1184 = vsel %vm992, %v1120, %v345
  %v1185 = vsel %vm993, %v1121, %v348
  %v1186 = vsel %vm994, %v1122, %v351
  %v1187 = vsel %vm995, %v1123, %v354
  %v1188 = vsel %vm996, %v1124, %v357
  %v1189 = vsel %vm997, %v1125, %v360
  %v1190 = vsel %vm998, %v1126, %v363
  %v1191 = vsel %vm999, %v1127, %v366
  %v1192 = vsel %vm1000, %v1128, %v369
  %v1193 = vsel %vm1001, %v1129, %v372
  %v1194 = vsel %vm1002, %v1130, %v375
  %v1195 = vsel %vm1003, %v1131, %v378
  %v1196 = vsel %vm1004, %v1132, %v381
  %v1197 = vsel %vm1005, %v1133, %v384
  %v1198 = vsel %vm1006, %v1134, %v387
  %v1199 = vsel %vm1007, %v1135, %v390
  %v1200 = vsel %vm1008, %v1136, %v393
  %v1201 = vsel %vm1009, %v1137, %v396
  %v1202 = vsel %vm1010, %v1138, %v399
  %v1203 = vsel %vm1011, %v1139, %v402
  %v1204 = vsel %vm1012, %v1140, %v405
  %v1205 = vsel %vm1013, %v1141, %v408
  %v1206 = vsel %vm1014, %v1142, %v411
  %v1207 = vsel %vm1015, %v1143, %v414
  %v1208 = vsel %vm1016, %v1144, %v417
  %v1209 = vsel %vm1017, %v1145, %v420
  %v1210 = vsel %vm1018, %v1146, %v423
  %v1211 = vsel %vm1019, %v1147, %v426
  %v1212 = vsel %vm1020, %v1148, %v429
  %v1213 = vsel %vm1021, %v1149, %v432
  %v1214 = vsel %vm1022, %v1150, %v435
  %v1215 = vsel %vm1023, %v1151, %v438
  %v1216 = vsel %vm1024, %v1152, %v441
  %v1217 = vsel %vm1025, %v1153, %v444
  %v1218 = vsel %vm1026, %v1154, %v447
  %v1219 = vsel %vm1027, %v1155, %v450
  %v1220 = vsel %vm1028, %v1156, %v453
  %v1221 = vsel %vm1029, %v1157, %v456
  %v1222 = vsel %vm1030, %v1158, %v459
  %v1223 = vsel %vm1031, %v1159, %v462
  %v1224 = vsel %vm1032, %v1160, %v465
  %v1225 = vsel %vm1033, %v1161, %v468
  %v1226 = vsel %vm1034, %v1162, %v471
  %v1227 = vsel %vm1035, %v1163, %v474
  %v1228 = vsel %vm1036, %v1164, %v477
  %v1229 = vsel %vm1037, %v1165, %v480
  %v1230 = vsel %vm1038, %v1166, %v483
  %v1231 = vsel %vm1039, %v1167, %v486
  %v1232 = vsel %vm1040, %v1168, %v489
  %v1233 = vsel %vm1041, %v1169, %v492
  %v1234 = vsel %vm1042, %v1170, %v495
  %v1235 = vrcp.pop %v1171
  %v1236 = vmul.f32 %v1171, %v1235
  %v1237 = vsub.f32 1.0, %v1236
  %v1238 = vmul.f32 %v1235, %v1237
  %v1239 = vadd.f32 %v1235, %v1238
  %vm1240 = vweird.f32 %v1171
  %vm1241 = vweird.f32 %v1235
  %vm1242 = vmor %vm1240, %vm1241
  %v1243 = vsel %vm1242, %v1235, %v1239
  %v1244 = vand.u32 2147483647, %v1171
  %vm1245 = vcmp.eq.f32.partialorder %v1244, 8.507059e+37
  %v1246 = vand.u32 %v1171, 2147483648
  %v1247 = vor.u32 1.1754944e-38, %v1246
  %v1248 = vsel %vm1245, %v1247, %v1243
  %v1249 = vrcp.pop %v1172
  %v1250 = vmul.f32 %v1172, %v1249
  %v1251 = vsub.f32 1.0, %v1250
  %v1252 = vmul.f32 %v1249, %v1251
  %v1253 = vadd.f32 %v1249, %v1252
  %vm1254 = vweird.f32 %v1172
  %vm1255 = vweird.f32 %v1249
  %vm1256 = vmor %vm1254, %vm1255
  %v1257 = vsel %vm1256, %v1249, %v1253
  %v1258 = vand.u32 2147483647, %v1172
  %vm1259 = vcmp.eq.f32.partialorder %v1258, 8.507059e+37
  %v1260 = vand.u32 %v1172, 2147483648
  %v1261 = vor.u32 1.1754944e-38, %v1260
  %v1262 = vsel %vm1259, %v1261, %v1257
  %v1263 = vrcp.pop %v1173
  %v1264 = vmul.f32 %v1173, %v1263
  %v1265 = vsub.f32 1.0, %v1264
  %v1266 = vmul.f32 %v1263, %v1265
  %v1267 = vadd.f32 %v1263, %v1266
  %vm1268 = vweird.f32 %v1173
  %vm1269 = vweird.f32 %v1263
  %vm1270 = vmor %vm1268, %vm1269
  %v1271 = vsel %vm1270, %v1263, %v1267
  %v1272 = vand.u32 2147483647, %v1173
  %vm1273 = vcmp.eq.f32.partialorder %v1272, 8.507059e+37
  %v1274 = vand.u32 %v1173, 2147483648
  %v1275 = vor.u32 1.1754944e-38, %v1274
  %v1276 = vsel %vm1273, %v1275, %v1271
  %v1277 = vrcp.pop %v1174
  %v1278 = vmul.f32 %v1174, %v1277
  %v1279 = vsub.f32 1.0, %v1278
  %v1280 = vmul.f32 %v1277, %v1279
  %v1281 = vadd.f32 %v1277, %v1280
  %vm1282 = vweird.f32 %v1174
  %vm1283 = vweird.f32 %v1277
  %vm1284 = vmor %vm1282, %vm1283
  %v1285 = vsel %vm1284, %v1277, %v1281
  %v1286 = vand.u32 2147483647, %v1174
  %vm1287 = vcmp.eq.f32.partialorder %v1286, 8.507059e+37
  %v1288 = vand.u32 %v1174, 2147483648
  %v1289 = vor.u32 1.1754944e-38, %v1288
  %v1290 = vsel %vm1287, %v1289, %v1285
  %v1291 = vrcp.pop %v1175
  %v1292 = vmul.f32 %v1175, %v1291
  %v1293 = vsub.f32 1.0, %v1292
  %v1294 = vmul.f32 %v1291, %v1293
  %v1295 = vadd.f32 %v1291, %v1294
  %vm1296 = vweird.f32 %v1175
  %vm1297 = vweird.f32 %v1291
  %vm1298 = vmor %vm1296, %vm1297
  %v1299 = vsel %vm1298, %v1291, %v1295
  %v1300 = vand.u32 2147483647, %v1175
  %vm1301 = vcmp.eq.f32.partialorder %v1300, 8.507059e+37
  %v1302 = vand.u32 %v1175, 2147483648
  %v1303 = vor.u32 1.1754944e-38, %v1302
  %v1304 = vsel %vm1301, %v1303, %v1299
  %v1305 = vrcp.pop %v1176
  %v1306 = vmul.f32 %v1176, %v1305
  %v1307 = vsub.f32 1.0, %v1306
  %v1308 = vmul.f32 %v1305, %v1307
  %v1309 = vadd.f32 %v1305, %v1308
  %vm1310 = vweird.f32 %v1176
  %vm1311 = vweird.f32 %v1305
  %vm1312 = vmor %vm1310, %vm1311
  %v1313 = vsel %vm1312, %v1305, %v1309
  %v1314 = vand.u32 2147483647, %v1176
  %vm1315 = vcmp.eq.f32.partialorder %v1314, 8.507059e+37
  %v1316 = vand.u32 %v1176, 2147483648
  %v1317 = vor.u32 1.1754944e-38, %v1316
  %v1318 = vsel %vm1315, %v1317, %v1313
  %v1319 = vrcp.pop %v1177
  %v1320 = vmul.f32 %v1177, %v1319
  %v1321 = vsub.f32 1.0, %v1320
  %v1322 = vmul.f32 %v1319, %v1321
  %v1323 = vadd.f32 %v1319, %v1322
  %vm1324 = vweird.f32 %v1177
  %vm1325 = vweird.f32 %v1319
  %vm1326 = vmor %vm1324, %vm1325
  %v1327 = vsel %vm1326, %v1319, %v1323
  %v1328 = vand.u32 2147483647, %v1177
  %vm1329 = vcmp.eq.f32.partialorder %v1328, 8.507059e+37
  %v1330 = vand.u32 %v1177, 2147483648
  %v1331 = vor.u32 1.1754944e-38, %v1330
  %v1332 = vsel %vm1329, %v1331, %v1327
  %v1333 = vrcp.pop %v1178
  %v1334 = vmul.f32 %v1178, %v1333
  %v1335 = vsub.f32 1.0, %v1334
  %v1336 = vmul.f32 %v1333, %v1335
  %v1337 = vadd.f32 %v1333, %v1336
  %vm1338 = vweird.f32 %v1178
  %vm1339 = vweird.f32 %v1333
  %vm1340 = vmor %vm1338, %vm1339
  %v1341 = vsel %vm1340, %v1333, %v1337
  %v1342 = vand.u32 2147483647, %v1178
  %vm1343 = vcmp.eq.f32.partialorder %v1342, 8.507059e+37
  %v1344 = vand.u32 %v1178, 2147483648
  %v1345 = vor.u32 1.1754944e-38, %v1344
  %v1346 = vsel %vm1343, %v1345, %v1341
  %v1347 = vrcp.pop %v1179
  %v1348 = vmul.f32 %v1179, %v1347
  %v1349 = vsub.f32 1.0, %v1348
  %v1350 = vmul.f32 %v1347, %v1349
  %v1351 = vadd.f32 %v1347, %v1350
  %vm1352 = vweird.f32 %v1179
  %vm1353 = vweird.f32 %v1347
  %vm1354 = vmor %vm1352, %vm1353
  %v1355 = vsel %vm1354, %v1347, %v1351
  %v1356 = vand.u32 2147483647, %v1179
  %vm1357 = vcmp.eq.f32.partialorder %v1356, 8.507059e+37
  %v1358 = vand.u32 %v1179, 2147483648
  %v1359 = vor.u32 1.1754944e-38, %v1358
  %v1360 = vsel %vm1357, %v1359, %v1355
  %v1361 = vrcp.pop %v1180
  %v1362 = vmul.f32 %v1180, %v1361
  %v1363 = vsub.f32 1.0, %v1362
  %v1364 = vmul.f32 %v1361, %v1363
  %v1365 = vadd.f32 %v1361, %v1364
  %vm1366 = vweird.f32 %v1180
  %vm1367 = vweird.f32 %v1361
  %vm1368 = vmor %vm1366, %vm1367
  %v1369 = vsel %vm1368, %v1361, %v1365
  %v1370 = vand.u32 2147483647, %v1180
  %vm1371 = vcmp.eq.f32.partialorder %v1370, 8.507059e+37
  %v1372 = vand.u32 %v1180, 2147483648
  %v1373 = vor.u32 1.1754944e-38, %v1372
  %v1374 = vsel %vm1371, %v1373, %v1369
  %v1375 = vrcp.pop %v1181
  %v1376 = vmul.f32 %v1181, %v1375
  %v1377 = vsub.f32 1.0, %v1376
  %v1378 = vmul.f32 %v1375, %v1377
  %v1379 = vadd.f32 %v1375, %v1378
  %vm1380 = vweird.f32 %v1181
  %vm1381 = vweird.f32 %v1375
  %vm1382 = vmor %vm1380, %vm1381
  %v1383 = vsel %vm1382, %v1375, %v1379
  %v1384 = vand.u32 2147483647, %v1181
  %vm1385 = vcmp.eq.f32.partialorder %v1384, 8.507059e+37
  %v1386 = vand.u32 %v1181, 2147483648
  %v1387 = vor.u32 1.1754944e-38, %v1386
  %v1388 = vsel %vm1385, %v1387, %v1383
  %v1389 = vrcp.pop %v1182
  %v1390 = vmul.f32 %v1182, %v1389
  %v1391 = vsub.f32 1.0, %v1390
  %v1392 = vmul.f32 %v1389, %v1391
  %v1393 = vadd.f32 %v1389, %v1392
  %vm1394 = vweird.f32 %v1182
  %vm1395 = vweird.f32 %v1389
  %vm1396 = vmor %vm1394, %vm1395
  %v1397 = vsel %vm1396, %v1389, %v1393
  %v1398 = vand.u32 2147483647, %v1182
  %vm1399 = vcmp.eq.f32.partialorder %v1398, 8.507059e+37
  %v1400 = vand.u32 %v1182, 2147483648
  %v1401 = vor.u32 1.1754944e-38, %v1400
  %v1402 = vsel %vm1399, %v1401, %v1397
  %v1403 = vrcp.pop %v1183
  %v1404 = vmul.f32 %v1183, %v1403
  %v1405 = vsub.f32 1.0, %v1404
  %v1406 = vmul.f32 %v1403, %v1405
  %v1407 = vadd.f32 %v1403, %v1406
  %vm1408 = vweird.f32 %v1183
  %vm1409 = vweird.f32 %v1403
  %vm1410 = vmor %vm1408, %vm1409
  %v1411 = vsel %vm1410, %v1403, %v1407
  %v1412 = vand.u32 2147483647, %v1183
  %vm1413 = vcmp.eq.f32.partialorder %v1412, 8.507059e+37
  %v1414 = vand.u32 %v1183, 2147483648
  %v1415 = vor.u32 1.1754944e-38, %v1414
  %v1416 = vsel %vm1413, %v1415, %v1411
  %v1417 = vrcp.pop %v1184
  %v1418 = vmul.f32 %v1184, %v1417
  %v1419 = vsub.f32 1.0, %v1418
  %v1420 = vmul.f32 %v1417, %v1419
  %v1421 = vadd.f32 %v1417, %v1420
  %vm1422 = vweird.f32 %v1184
  %vm1423 = vweird.f32 %v1417
  %vm1424 = vmor %vm1422, %vm1423
  %v1425 = vsel %vm1424, %v1417, %v1421
  %v1426 = vand.u32 2147483647, %v1184
  %vm1427 = vcmp.eq.f32.partialorder %v1426, 8.507059e+37
  %v1428 = vand.u32 %v1184, 2147483648
  %v1429 = vor.u32 1.1754944e-38, %v1428
  %v1430 = vsel %vm1427, %v1429, %v1425
  %v1431 = vrcp.pop %v1185
  %v1432 = vmul.f32 %v1185, %v1431
  %v1433 = vsub.f32 1.0, %v1432
  %v1434 = vmul.f32 %v1431, %v1433
  %v1435 = vadd.f32 %v1431, %v1434
  %vm1436 = vweird.f32 %v1185
  %vm1437 = vweird.f32 %v1431
  %vm1438 = vmor %vm1436, %vm1437
  %v1439 = vsel %vm1438, %v1431, %v1435
  %v1440 = vand.u32 2147483647, %v1185
  %vm1441 = vcmp.eq.f32.partialorder %v1440, 8.507059e+37
  %v1442 = vand.u32 %v1185, 2147483648
  %v1443 = vor.u32 1.1754944e-38, %v1442
  %v1444 = vsel %vm1441, %v1443, %v1439
  %v1445 = vrcp.pop %v1186
  %v1446 = vmul.f32 %v1186, %v1445
  %v1447 = vsub.f32 1.0, %v1446
  %v1448 = vmul.f32 %v1445, %v1447
  %v1449 = vadd.f32 %v1445, %v1448
  %vm1450 = vweird.f32 %v1186
  %vm1451 = vweird.f32 %v1445
  %vm1452 = vmor %vm1450, %vm1451
  %v1453 = vsel %vm1452, %v1445, %v1449
  %v1454 = vand.u32 2147483647, %v1186
  %vm1455 = vcmp.eq.f32.partialorder %v1454, 8.507059e+37
  %v1456 = vand.u32 %v1186, 2147483648
  %v1457 = vor.u32 1.1754944e-38, %v1456
  %v1458 = vsel %vm1455, %v1457, %v1453
  %v1459 = vrcp.pop %v1187
  %v1460 = vmul.f32 %v1187, %v1459
  %v1461 = vsub.f32 1.0, %v1460
  %v1462 = vmul.f32 %v1459, %v1461
  %v1463 = vadd.f32 %v1459, %v1462
  %vm1464 = vweird.f32 %v1187
  %vm1465 = vweird.f32 %v1459
  %vm1466 = vmor %vm1464, %vm1465
  %v1467 = vsel %vm1466, %v1459, %v1463
  %v1468 = vand.u32 2147483647, %v1187
  %vm1469 = vcmp.eq.f32.partialorder %v1468, 8.507059e+37
  %v1470 = vand.u32 %v1187, 2147483648
  %v1471 = vor.u32 1.1754944e-38, %v1470
  %v1472 = vsel %vm1469, %v1471, %v1467
  %v1473 = vrcp.pop %v1188
  %v1474 = vmul.f32 %v1188, %v1473
  %v1475 = vsub.f32 1.0, %v1474
  %v1476 = vmul.f32 %v1473, %v1475
  %v1477 = vadd.f32 %v1473, %v1476
  %vm1478 = vweird.f32 %v1188
  %vm1479 = vweird.f32 %v1473
  %vm1480 = vmor %vm1478, %vm1479
  %v1481 = vsel %vm1480, %v1473, %v1477
  %v1482 = vand.u32 2147483647, %v1188
  %vm1483 = vcmp.eq.f32.partialorder %v1482, 8.507059e+37
  %v1484 = vand.u32 %v1188, 2147483648
  %v1485 = vor.u32 1.1754944e-38, %v1484
  %v1486 = vsel %vm1483, %v1485, %v1481
  %v1487 = vrcp.pop %v1189
  %v1488 = vmul.f32 %v1189, %v1487
  %v1489 = vsub.f32 1.0, %v1488
  %v1490 = vmul.f32 %v1487, %v1489
  %v1491 = vadd.f32 %v1487, %v1490
  %vm1492 = vweird.f32 %v1189
  %vm1493 = vweird.f32 %v1487
  %vm1494 = vmor %vm1492, %vm1493
  %v1495 = vsel %vm1494, %v1487, %v1491
  %v1496 = vand.u32 2147483647, %v1189
  %vm1497 = vcmp.eq.f32.partialorder %v1496, 8.507059e+37
  %v1498 = vand.u32 %v1189, 2147483648
  %v1499 = vor.u32 1.1754944e-38, %v1498
  %v1500 = vsel %vm1497, %v1499, %v1495
  %v1501 = vrcp.pop %v1190
  %v1502 = vmul.f32 %v1190, %v1501
  %v1503 = vsub.f32 1.0, %v1502
  %v1504 = vmul.f32 %v1501, %v1503
  %v1505 = vadd.f32 %v1501, %v1504
  %vm1506 = vweird.f32 %v1190
  %vm1507 = vweird.f32 %v1501
  %vm1508 = vmor %vm1506, %vm1507
  %v1509 = vsel %vm1508, %v1501, %v1505
  %v1510 = vand.u32 2147483647, %v1190
  %vm1511 = vcmp.eq.f32.partialorder %v1510, 8.507059e+37
  %v1512 = vand.u32 %v1190, 2147483648
  %v1513 = vor.u32 1.1754944e-38, %v1512
  %v1514 = vsel %vm1511, %v1513, %v1509
  %v1515 = vrcp.pop %v1191
  %v1516 = vmul.f32 %v1191, %v1515
  %v1517 = vsub.f32 1.0, %v1516
  %v1518 = vmul.f32 %v1515, %v1517
  %v1519 = vadd.f32 %v1515, %v1518
  %vm1520 = vweird.f32 %v1191
  %vm1521 = vweird.f32 %v1515
  %vm1522 = vmor %vm1520, %vm1521
  %v1523 = vsel %vm1522, %v1515, %v1519
  %v1524 = vand.u32 2147483647, %v1191
  %vm1525 = vcmp.eq.f32.partialorder %v1524, 8.507059e+37
  %v1526 = vand.u32 %v1191, 2147483648
  %v1527 = vor.u32 1.1754944e-38, %v1526
  %v1528 = vsel %vm1525, %v1527, %v1523
  %v1529 = vrcp.pop %v1192
  %v1530 = vmul.f32 %v1192, %v1529
  %v1531 = vsub.f32 1.0, %v1530
  %v1532 = vmul.f32 %v1529, %v1531
  %v1533 = vadd.f32 %v1529, %v1532
  %vm1534 = vweird.f32 %v1192
  %vm1535 = vweird.f32 %v1529
  %vm1536 = vmor %vm1534, %vm1535
  %v1537 = vsel %vm1536, %v1529, %v1533
  %v1538 = vand.u32 2147483647, %v1192
  %vm1539 = vcmp.eq.f32.partialorder %v1538, 8.507059e+37
  %v1540 = vand.u32 %v1192, 2147483648
  %v1541 = vor.u32 1.1754944e-38, %v1540
  %v1542 = vsel %vm1539, %v1541, %v1537
  %v1543 = vrcp.pop %v1193
  %v1544 = vmul.f32 %v1193, %v1543
  %v1545 = vsub.f32 1.0, %v1544
  %v1546 = vmul.f32 %v1543, %v1545
  %v1547 = vadd.f32 %v1543, %v1546
  %vm1548 = vweird.f32 %v1193
  %vm1549 = vweird.f32 %v1543
  %vm1550 = vmor %vm1548, %vm1549
  %v1551 = vsel %vm1550, %v1543, %v1547
  %v1552 = vand.u32 2147483647, %v1193
  %vm1553 = vcmp.eq.f32.partialorder %v1552, 8.507059e+37
  %v1554 = vand.u32 %v1193, 2147483648
  %v1555 = vor.u32 1.1754944e-38, %v1554
  %v1556 = vsel %vm1553, %v1555, %v1551
  %v1557 = vrcp.pop %v1194
  %v1558 = vmul.f32 %v1194, %v1557
  %v1559 = vsub.f32 1.0, %v1558
  %v1560 = vmul.f32 %v1557, %v1559
  %v1561 = vadd.f32 %v1557, %v1560
  %vm1562 = vweird.f32 %v1194
  %vm1563 = vweird.f32 %v1557
  %vm1564 = vmor %vm1562, %vm1563
  %v1565 = vsel %vm1564, %v1557, %v1561
  %v1566 = vand.u32 2147483647, %v1194
  %vm1567 = vcmp.eq.f32.partialorder %v1566, 8.507059e+37
  %v1568 = vand.u32 %v1194, 2147483648
  %v1569 = vor.u32 1.1754944e-38, %v1568
  %v1570 = vsel %vm1567, %v1569, %v1565
  %v1571 = vrcp.pop %v1195
  %v1572 = vmul.f32 %v1195, %v1571
  %v1573 = vsub.f32 1.0, %v1572
  %v1574 = vmul.f32 %v1571, %v1573
  %v1575 = vadd.f32 %v1571, %v1574
  %vm1576 = vweird.f32 %v1195
  %vm1577 = vweird.f32 %v1571
  %vm1578 = vmor %vm1576, %vm1577
  %v1579 = vsel %vm1578, %v1571, %v1575
  %v1580 = vand.u32 2147483647, %v1195
  %vm1581 = vcmp.eq.f32.partialorder %v1580, 8.507059e+37
  %v1582 = vand.u32 %v1195, 2147483648
  %v1583 = vor.u32 1.1754944e-38, %v1582
  %v1584 = vsel %vm1581, %v1583, %v1579
  %v1585 = vrcp.pop %v1196
  %v1586 = vmul.f32 %v1196, %v1585
  %v1587 = vsub.f32 1.0, %v1586
  %v1588 = vmul.f32 %v1585, %v1587
  %v1589 = vadd.f32 %v1585, %v1588
  %vm1590 = vweird.f32 %v1196
  %vm1591 = vweird.f32 %v1585
  %vm1592 = vmor %vm1590, %vm1591
  %v1593 = vsel %vm1592, %v1585, %v1589
  %v1594 = vand.u32 2147483647, %v1196
  %vm1595 = vcmp.eq.f32.partialorder %v1594, 8.507059e+37
  %v1596 = vand.u32 %v1196, 2147483648
  %v1597 = vor.u32 1.1754944e-38, %v1596
  %v1598 = vsel %vm1595, %v1597, %v1593
  %v1599 = vrcp.pop %v1197
  %v1600 = vmul.f32 %v1197, %v1599
  %v1601 = vsub.f32 1.0, %v1600
  %v1602 = vmul.f32 %v1599, %v1601
  %v1603 = vadd.f32 %v1599, %v1602
  %vm1604 = vweird.f32 %v1197
  %vm1605 = vweird.f32 %v1599
  %vm1606 = vmor %vm1604, %vm1605
  %v1607 = vsel %vm1606, %v1599, %v1603
  %v1608 = vand.u32 2147483647, %v1197
  %vm1609 = vcmp.eq.f32.partialorder %v1608, 8.507059e+37
  %v1610 = vand.u32 %v1197, 2147483648
  %v1611 = vor.u32 1.1754944e-38, %v1610
  %v1612 = vsel %vm1609, %v1611, %v1607
  %v1613 = vrcp.pop %v1198
  %v1614 = vmul.f32 %v1198, %v1613
  %v1615 = vsub.f32 1.0, %v1614
  %v1616 = vmul.f32 %v1613, %v1615
  %v1617 = vadd.f32 %v1613, %v1616
  %vm1618 = vweird.f32 %v1198
  %vm1619 = vweird.f32 %v1613
  %vm1620 = vmor %vm1618, %vm1619
  %v1621 = vsel %vm1620, %v1613, %v1617
  %v1622 = vand.u32 2147483647, %v1198
  %vm1623 = vcmp.eq.f32.partialorder %v1622, 8.507059e+37
  %v1624 = vand.u32 %v1198, 2147483648
  %v1625 = vor.u32 1.1754944e-38, %v1624
  %v1626 = vsel %vm1623, %v1625, %v1621
  %v1627 = vrcp.pop %v1199
  %v1628 = vmul.f32 %v1199, %v1627
  %v1629 = vsub.f32 1.0, %v1628
  %v1630 = vmul.f32 %v1627, %v1629
  %v1631 = vadd.f32 %v1627, %v1630
  %vm1632 = vweird.f32 %v1199
  %vm1633 = vweird.f32 %v1627
  %vm1634 = vmor %vm1632, %vm1633
  %v1635 = vsel %vm1634, %v1627, %v1631
  %v1636 = vand.u32 2147483647, %v1199
  %vm1637 = vcmp.eq.f32.partialorder %v1636, 8.507059e+37
  %v1638 = vand.u32 %v1199, 2147483648
  %v1639 = vor.u32 1.1754944e-38, %v1638
  %v1640 = vsel %vm1637, %v1639, %v1635
  %v1641 = vrcp.pop %v1200
  %v1642 = vmul.f32 %v1200, %v1641
  %v1643 = vsub.f32 1.0, %v1642
  %v1644 = vmul.f32 %v1641, %v1643
  %v1645 = vadd.f32 %v1641, %v1644
  %vm1646 = vweird.f32 %v1200
  %vm1647 = vweird.f32 %v1641
  %vm1648 = vmor %vm1646, %vm1647
  %v1649 = vsel %vm1648, %v1641, %v1645
  %v1650 = vand.u32 2147483647, %v1200
  %vm1651 = vcmp.eq.f32.partialorder %v1650, 8.507059e+37
  %v1652 = vand.u32 %v1200, 2147483648
  %v1653 = vor.u32 1.1754944e-38, %v1652
  %v1654 = vsel %vm1651, %v1653, %v1649
  %v1655 = vrcp.pop %v1201
  %v1656 = vmul.f32 %v1201, %v1655
  %v1657 = vsub.f32 1.0, %v1656
  %v1658 = vmul.f32 %v1655, %v1657
  %v1659 = vadd.f32 %v1655, %v1658
  %vm1660 = vweird.f32 %v1201
  %vm1661 = vweird.f32 %v1655
  %vm1662 = vmor %vm1660, %vm1661
  %v1663 = vsel %vm1662, %v1655, %v1659
  %v1664 = vand.u32 2147483647, %v1201
  %vm1665 = vcmp.eq.f32.partialorder %v1664, 8.507059e+37
  %v1666 = vand.u32 %v1201, 2147483648
  %v1667 = vor.u32 1.1754944e-38, %v1666
  %v1668 = vsel %vm1665, %v1667, %v1663
  %v1669 = vrcp.pop %v1202
  %v1670 = vmul.f32 %v1202, %v1669
  %v1671 = vsub.f32 1.0, %v1670
  %v1672 = vmul.f32 %v1669, %v1671
  %v1673 = vadd.f32 %v1669, %v1672
  %vm1674 = vweird.f32 %v1202
  %vm1675 = vweird.f32 %v1669
  %vm1676 = vmor %vm1674, %vm1675
  %v1677 = vsel %vm1676, %v1669, %v1673
  %v1678 = vand.u32 2147483647, %v1202
  %vm1679 = vcmp.eq.f32.partialorder %v1678, 8.507059e+37
  %v1680 = vand.u32 %v1202, 2147483648
  %v1681 = vor.u32 1.1754944e-38, %v1680
  %v1682 = vsel %vm1679, %v1681, %v1677
  %v1683 = vrcp.pop %v1203
  %v1684 = vmul.f32 %v1203, %v1683
  %v1685 = vsub.f32 1.0, %v1684
  %v1686 = vmul.f32 %v1683, %v1685
  %v1687 = vadd.f32 %v1683, %v1686
  %vm1688 = vweird.f32 %v1203
  %vm1689 = vweird.f32 %v1683
  %vm1690 = vmor %vm1688, %vm1689
  %v1691 = vsel %vm1690, %v1683, %v1687
  %v1692 = vand.u32 2147483647, %v1203
  %vm1693 = vcmp.eq.f32.partialorder %v1692, 8.507059e+37
  %v1694 = vand.u32 %v1203, 2147483648
  %v1695 = vor.u32 1.1754944e-38, %v1694
  %v1696 = vsel %vm1693, %v1695, %v1691
  %v1697 = vrcp.pop %v1204
  %v1698 = vmul.f32 %v1204, %v1697
  %v1699 = vsub.f32 1.0, %v1698
  %v1700 = vmul.f32 %v1697, %v1699
  %v1701 = vadd.f32 %v1697, %v1700
  %vm1702 = vweird.f32 %v1204
  %vm1703 = vweird.f32 %v1697
  %vm1704 = vmor %vm1702, %vm1703
  %v1705 = vsel %vm1704, %v1697, %v1701
  %v1706 = vand.u32 2147483647, %v1204
  %vm1707 = vcmp.eq.f32.partialorder %v1706, 8.507059e+37
  %v1708 = vand.u32 %v1204, 2147483648
  %v1709 = vor.u32 1.1754944e-38, %v1708
  %v1710 = vsel %vm1707, %v1709, %v1705
  %v1711 = vrcp.pop %v1205
  %v1712 = vmul.f32 %v1205, %v1711
  %v1713 = vsub.f32 1.0, %v1712
  %v1714 = vmul.f32 %v1711, %v1713
  %v1715 = vadd.f32 %v1711, %v1714
  %vm1716 = vweird.f32 %v1205
  %vm1717 = vweird.f32 %v1711
  %vm1718 = vmor %vm1716, %vm1717
  %v1719 = vsel %vm1718, %v1711, %v1715
  %v1720 = vand.u32 2147483647, %v1205
  %vm1721 = vcmp.eq.f32.partialorder %v1720, 8.507059e+37
  %v1722 = vand.u32 %v1205, 2147483648
  %v1723 = vor.u32 1.1754944e-38, %v1722
  %v1724 = vsel %vm1721, %v1723, %v1719
  %v1725 = vrcp.pop %v1206
  %v1726 = vmul.f32 %v1206, %v1725
  %v1727 = vsub.f32 1.0, %v1726
  %v1728 = vmul.f32 %v1725, %v1727
  %v1729 = vadd.f32 %v1725, %v1728
  %vm1730 = vweird.f32 %v1206
  %vm1731 = vweird.f32 %v1725
  %vm1732 = vmor %vm1730, %vm1731
  %v1733 = vsel %vm1732, %v1725, %v1729
  %v1734 = vand.u32 2147483647, %v1206
  %vm1735 = vcmp.eq.f32.partialorder %v1734, 8.507059e+37
  %v1736 = vand.u32 %v1206, 2147483648
  %v1737 = vor.u32 1.1754944e-38, %v1736
  %v1738 = vsel %vm1735, %v1737, %v1733
  %v1739 = vrcp.pop %v1207
  %v1740 = vmul.f32 %v1207, %v1739
  %v1741 = vsub.f32 1.0, %v1740
  %v1742 = vmul.f32 %v1739, %v1741
  %v1743 = vadd.f32 %v1739, %v1742
  %vm1744 = vweird.f32 %v1207
  %vm1745 = vweird.f32 %v1739
  %vm1746 = vmor %vm1744, %vm1745
  %v1747 = vsel %vm1746, %v1739, %v1743
  %v1748 = vand.u32 2147483647, %v1207
  %vm1749 = vcmp.eq.f32.partialorder %v1748, 8.507059e+37
  %v1750 = vand.u32 %v1207, 2147483648
  %v1751 = vor.u32 1.1754944e-38, %v1750
  %v1752 = vsel %vm1749, %v1751, %v1747
  %v1753 = vrcp.pop %v1208
  %v1754 = vmul.f32 %v1208, %v1753
  %v1755 = vsub.f32 1.0, %v1754
  %v1756 = vmul.f32 %v1753, %v1755
  %v1757 = vadd.f32 %v1753, %v1756
  %vm1758 = vweird.f32 %v1208
  %vm1759 = vweird.f32 %v1753
  %vm1760 = vmor %vm1758, %vm1759
  %v1761 = vsel %vm1760, %v1753, %v1757
  %v1762 = vand.u32 2147483647, %v1208
  %vm1763 = vcmp.eq.f32.partialorder %v1762, 8.507059e+37
  %v1764 = vand.u32 %v1208, 2147483648
  %v1765 = vor.u32 1.1754944e-38, %v1764
  %v1766 = vsel %vm1763, %v1765, %v1761
  %v1767 = vrcp.pop %v1209
  %v1768 = vmul.f32 %v1209, %v1767
  %v1769 = vsub.f32 1.0, %v1768
  %v1770 = vmul.f32 %v1767, %v1769
  %v1771 = vadd.f32 %v1767, %v1770
  %vm1772 = vweird.f32 %v1209
  %vm1773 = vweird.f32 %v1767
  %vm1774 = vmor %vm1772, %vm1773
  %v1775 = vsel %vm1774, %v1767, %v1771
  %v1776 = vand.u32 2147483647, %v1209
  %vm1777 = vcmp.eq.f32.partialorder %v1776, 8.507059e+37
  %v1778 = vand.u32 %v1209, 2147483648
  %v1779 = vor.u32 1.1754944e-38, %v1778
  %v1780 = vsel %vm1777, %v1779, %v1775
  %v1781 = vrcp.pop %v1210
  %v1782 = vmul.f32 %v1210, %v1781
  %v1783 = vsub.f32 1.0, %v1782
  %v1784 = vmul.f32 %v1781, %v1783
  %v1785 = vadd.f32 %v1781, %v1784
  %vm1786 = vweird.f32 %v1210
  %vm1787 = vweird.f32 %v1781
  %vm1788 = vmor %vm1786, %vm1787
  %v1789 = vsel %vm1788, %v1781, %v1785
  %v1790 = vand.u32 2147483647, %v1210
  %vm1791 = vcmp.eq.f32.partialorder %v1790, 8.507059e+37
  %v1792 = vand.u32 %v1210, 2147483648
  %v1793 = vor.u32 1.1754944e-38, %v1792
  %v1794 = vsel %vm1791, %v1793, %v1789
  %v1795 = vrcp.pop %v1211
  %v1796 = vmul.f32 %v1211, %v1795
  %v1797 = vsub.f32 1.0, %v1796
  %v1798 = vmul.f32 %v1795, %v1797
  %v1799 = vadd.f32 %v1795, %v1798
  %vm1800 = vweird.f32 %v1211
  %vm1801 = vweird.f32 %v1795
  %vm1802 = vmor %vm1800, %vm1801
  %v1803 = vsel %vm1802, %v1795, %v1799
  %v1804 = vand.u32 2147483647, %v1211
  %vm1805 = vcmp.eq.f32.partialorder %v1804, 8.507059e+37
  %v1806 = vand.u32 %v1211, 2147483648
  %v1807 = vor.u32 1.1754944e-38, %v1806
  %v1808 = vsel %vm1805, %v1807, %v1803
  %v1809 = vrcp.pop %v1212
  %v1810 = vmul.f32 %v1212, %v1809
  %v1811 = vsub.f32 1.0, %v1810
  %v1812 = vmul.f32 %v1809, %v1811
  %v1813 = vadd.f32 %v1809, %v1812
  %vm1814 = vweird.f32 %v1212
  %vm1815 = vweird.f32 %v1809
  %vm1816 = vmor %vm1814, %vm1815
  %v1817 = vsel %vm1816, %v1809, %v1813
  %v1818 = vand.u32 2147483647, %v1212
  %vm1819 = vcmp.eq.f32.partialorder %v1818, 8.507059e+37
  %v1820 = vand.u32 %v1212, 2147483648
  %v1821 = vor.u32 1.1754944e-38, %v1820
  %v1822 = vsel %vm1819, %v1821, %v1817
  %v1823 = vrcp.pop %v1213
  %v1824 = vmul.f32 %v1213, %v1823
  %v1825 = vsub.f32 1.0, %v1824
  %v1826 = vmul.f32 %v1823, %v1825
  %v1827 = vadd.f32 %v1823, %v1826
  %vm1828 = vweird.f32 %v1213
  %vm1829 = vweird.f32 %v1823
  %vm1830 = vmor %vm1828, %vm1829
  %v1831 = vsel %vm1830, %v1823, %v1827
  %v1832 = vand.u32 2147483647, %v1213
  %vm1833 = vcmp.eq.f32.partialorder %v1832, 8.507059e+37
  %v1834 = vand.u32 %v1213, 2147483648
  %v1835 = vor.u32 1.1754944e-38, %v1834
  %v1836 = vsel %vm1833, %v1835, %v1831
  %v1837 = vrcp.pop %v1214
  %v1838 = vmul.f32 %v1214, %v1837
  %v1839 = vsub.f32 1.0, %v1838
  %v1840 = vmul.f32 %v1837, %v1839
  %v1841 = vadd.f32 %v1837, %v1840
  %vm1842 = vweird.f32 %v1214
  %vm1843 = vweird.f32 %v1837
  %vm1844 = vmor %vm1842, %vm1843
  %v1845 = vsel %vm1844, %v1837, %v1841
  %v1846 = vand.u32 2147483647, %v1214
  %vm1847 = vcmp.eq.f32.partialorder %v1846, 8.507059e+37
  %v1848 = vand.u32 %v1214, 2147483648
  %v1849 = vor.u32 1.1754944e-38, %v1848
  %v1850 = vsel %vm1847, %v1849, %v1845
  %v1851 = vrcp.pop %v1215
  %v1852 = vmul.f32 %v1215, %v1851
  %v1853 = vsub.f32 1.0, %v1852
  %v1854 = vmul.f32 %v1851, %v1853
  %v1855 = vadd.f32 %v1851, %v1854
  %vm1856 = vweird.f32 %v1215
  %vm1857 = vweird.f32 %v1851
  %vm1858 = vmor %vm1856, %vm1857
  %v1859 = vsel %vm1858, %v1851, %v1855
  %v1860 = vand.u32 2147483647, %v1215
  %vm1861 = vcmp.eq.f32.partialorder %v1860, 8.507059e+37
  %v1862 = vand.u32 %v1215, 2147483648
  %v1863 = vor.u32 1.1754944e-38, %v1862
  %v1864 = vsel %vm1861, %v1863, %v1859
  %v1865 = vrcp.pop %v1216
  %v1866 = vmul.f32 %v1216, %v1865
  %v1867 = vsub.f32 1.0, %v1866
  %v1868 = vmul.f32 %v1865, %v1867
  %v1869 = vadd.f32 %v1865, %v1868
  %vm1870 = vweird.f32 %v1216
  %vm1871 = vweird.f32 %v1865
  %vm1872 = vmor %vm1870, %vm1871
  %v1873 = vsel %vm1872, %v1865, %v1869
  %v1874 = vand.u32 2147483647, %v1216
  %vm1875 = vcmp.eq.f32.partialorder %v1874, 8.507059e+37
  %v1876 = vand.u32 %v1216, 2147483648
  %v1877 = vor.u32 1.1754944e-38, %v1876
  %v1878 = vsel %vm1875, %v1877, %v1873
  %v1879 = vrcp.pop %v1217
  %v1880 = vmul.f32 %v1217, %v1879
  %v1881 = vsub.f32 1.0, %v1880
  %v1882 = vmul.f32 %v1879, %v1881
  %v1883 = vadd.f32 %v1879, %v1882
  %vm1884 = vweird.f32 %v1217
  %vm1885 = vweird.f32 %v1879
  %vm1886 = vmor %vm1884, %vm1885
  %v1887 = vsel %vm1886, %v1879, %v1883
  %v1888 = vand.u32 2147483647, %v1217
  %vm1889 = vcmp.eq.f32.partialorder %v1888, 8.507059e+37
  %v1890 = vand.u32 %v1217, 2147483648
  %v1891 = vor.u32 1.1754944e-38, %v1890
  %v1892 = vsel %vm1889, %v1891, %v1887
  %v1893 = vrcp.pop %v1218
  %v1894 = vmul.f32 %v1218, %v1893
  %v1895 = vsub.f32 1.0, %v1894
  %v1896 = vmul.f32 %v1893, %v1895
  %v1897 = vadd.f32 %v1893, %v1896
  %vm1898 = vweird.f32 %v1218
  %vm1899 = vweird.f32 %v1893
  %vm1900 = vmor %vm1898, %vm1899
  %v1901 = vsel %vm1900, %v1893, %v1897
  %v1902 = vand.u32 2147483647, %v1218
  %vm1903 = vcmp.eq.f32.partialorder %v1902, 8.507059e+37
  %v1904 = vand.u32 %v1218, 2147483648
  %v1905 = vor.u32 1.1754944e-38, %v1904
  %v1906 = vsel %vm1903, %v1905, %v1901
  %v1907 = vrcp.pop %v1219
  %v1908 = vmul.f32 %v1219, %v1907
  %v1909 = vsub.f32 1.0, %v1908
  %v1910 = vmul.f32 %v1907, %v1909
  %v1911 = vadd.f32 %v1907, %v1910
  %vm1912 = vweird.f32 %v1219
  %vm1913 = vweird.f32 %v1907
  %vm1914 = vmor %vm1912, %vm1913
  %v1915 = vsel %vm1914, %v1907, %v1911
  %v1916 = vand.u32 2147483647, %v1219
  %vm1917 = vcmp.eq.f32.partialorder %v1916, 8.507059e+37
  %v1918 = vand.u32 %v1219, 2147483648
  %v1919 = vor.u32 1.1754944e-38, %v1918
  %v1920 = vsel %vm1917, %v1919, %v1915
  %v1921 = vrcp.pop %v1220
  %v1922 = vmul.f32 %v1220, %v1921
  %v1923 = vsub.f32 1.0, %v1922
  %v1924 = vmul.f32 %v1921, %v1923
  %v1925 = vadd.f32 %v1921, %v1924
  %vm1926 = vweird.f32 %v1220
  %vm1927 = vweird.f32 %v1921
  %vm1928 = vmor %vm1926, %vm1927
  %v1929 = vsel %vm1928, %v1921, %v1925
  %v1930 = vand.u32 2147483647, %v1220
  %vm1931 = vcmp.eq.f32.partialorder %v1930, 8.507059e+37
  %v1932 = vand.u32 %v1220, 2147483648
  %v1933 = vor.u32 1.1754944e-38, %v1932
  %v1934 = vsel %vm1931, %v1933, %v1929
  %v1935 = vrcp.pop %v1221
  %v1936 = vmul.f32 %v1221, %v1935
  %v1937 = vsub.f32 1.0, %v1936
  %v1938 = vmul.f32 %v1935, %v1937
  %v1939 = vadd.f32 %v1935, %v1938
  %vm1940 = vweird.f32 %v1221
  %vm1941 = vweird.f32 %v1935
  %vm1942 = vmor %vm1940, %vm1941
  %v1943 = vsel %vm1942, %v1935, %v1939
  %v1944 = vand.u32 2147483647, %v1221
  %vm1945 = vcmp.eq.f32.partialorder %v1944, 8.507059e+37
  %v1946 = vand.u32 %v1221, 2147483648
  %v1947 = vor.u32 1.1754944e-38, %v1946
  %v1948 = vsel %vm1945, %v1947, %v1943
  %v1949 = vrcp.pop %v1222
  %v1950 = vmul.f32 %v1222, %v1949
  %v1951 = vsub.f32 1.0, %v1950
  %v1952 = vmul.f32 %v1949, %v1951
  %v1953 = vadd.f32 %v1949, %v1952
  %vm1954 = vweird.f32 %v1222
  %vm1955 = vweird.f32 %v1949
  %vm1956 = vmor %vm1954, %vm1955
  %v1957 = vsel %vm1956, %v1949, %v1953
  %v1958 = vand.u32 2147483647, %v1222
  %vm1959 = vcmp.eq.f32.partialorder %v1958, 8.507059e+37
  %v1960 = vand.u32 %v1222, 2147483648
  %v1961 = vor.u32 1.1754944e-38, %v1960
  %v1962 = vsel %vm1959, %v1961, %v1957
  %v1963 = vrcp.pop %v1223
  %v1964 = vmul.f32 %v1223, %v1963
  %v1965 = vsub.f32 1.0, %v1964
  %v1966 = vmul.f32 %v1963, %v1965
  %v1967 = vadd.f32 %v1963, %v1966
  %vm1968 = vweird.f32 %v1223
  %vm1969 = vweird.f32 %v1963
  %vm1970 = vmor %vm1968, %vm1969
  %v1971 = vsel %vm1970, %v1963, %v1967
  %v1972 = vand.u32 2147483647, %v1223
  %vm1973 = vcmp.eq.f32.partialorder %v1972, 8.507059e+37
  %v1974 = vand.u32 %v1223, 2147483648
  %v1975 = vor.u32 1.1754944e-38, %v1974
  %v1976 = vsel %vm1973, %v1975, %v1971
  %v1977 = vrcp.pop %v1224
  %v1978 = vmul.f32 %v1224, %v1977
  %v1979 = vsub.f32 1.0, %v1978
  %v1980 = vmul.f32 %v1977, %v1979
  %v1981 = vadd.f32 %v1977, %v1980
  %vm1982 = vweird.f32 %v1224
  %vm1983 = vweird.f32 %v1977
  %vm1984 = vmor %vm1982, %vm1983
  %v1985 = vsel %vm1984, %v1977, %v1981
  %v1986 = vand.u32 2147483647, %v1224
  %vm1987 = vcmp.eq.f32.partialorder %v1986, 8.507059e+37
  %v1988 = vand.u32 %v1224, 2147483648
  %v1989 = vor.u32 1.1754944e-38, %v1988
  %v1990 = vsel %vm1987, %v1989, %v1985
  %v1991 = vrcp.pop %v1225
  %v1992 = vmul.f32 %v1225, %v1991
  %v1993 = vsub.f32 1.0, %v1992
  %v1994 = vmul.f32 %v1991, %v1993
  %v1995 = vadd.f32 %v1991, %v1994
  %vm1996 = vweird.f32 %v1225
  %vm1997 = vweird.f32 %v1991
  %vm1998 = vmor %vm1996, %vm1997
  %v1999 = vsel %vm1998, %v1991, %v1995
  %v2000 = vand.u32 2147483647, %v1225
  %vm2001 = vcmp.eq.f32.partialorder %v2000, 8.507059e+37
  %v2002 = vand.u32 %v1225, 2147483648
  %v2003 = vor.u32 1.1754944e-38, %v2002
  %v2004 = vsel %vm2001, %v2003, %v1999
  %v2005 = vrcp.pop %v1226
  %v2006 = vmul.f32 %v1226, %v2005
  %v2007 = vsub.f32 1.0, %v2006
  %v2008 = vmul.f32 %v2005, %v2007
  %v2009 = vadd.f32 %v2005, %v2008
  %vm2010 = vweird.f32 %v1226
  %vm2011 = vweird.f32 %v2005
  %vm2012 = vmor %vm2010, %vm2011
  %v2013 = vsel %vm2012, %v2005, %v2009
  %v2014 = vand.u32 2147483647, %v1226
  %vm2015 = vcmp.eq.f32.partialorder %v2014, 8.507059e+37
  %v2016 = vand.u32 %v1226, 2147483648
  %v2017 = vor.u32 1.1754944e-38, %v2016
  %v2018 = vsel %vm2015, %v2017, %v2013
  %v2019 = vrcp.pop %v1227
  %v2020 = vmul.f32 %v1227, %v2019
  %v2021 = vsub.f32 1.0, %v2020
  %v2022 = vmul.f32 %v2019, %v2021
  %v2023 = vadd.f32 %v2019, %v2022
  %vm2024 = vweird.f32 %v1227
  %vm2025 = vweird.f32 %v2019
  %vm2026 = vmor %vm2024, %vm2025
  %v2027 = vsel %vm2026, %v2019, %v2023
  %v2028 = vand.u32 2147483647, %v1227
  %vm2029 = vcmp.eq.f32.partialorder %v2028, 8.507059e+37
  %v2030 = vand.u32 %v1227, 2147483648
  %v2031 = vor.u32 1.1754944e-38, %v2030
  %v2032 = vsel %vm2029, %v2031, %v2027
  %v2033 = vrcp.pop %v1228
  %v2034 = vmul.f32 %v1228, %v2033
  %v2035 = vsub.f32 1.0, %v2034
  %v2036 = vmul.f32 %v2033, %v2035
  %v2037 = vadd.f32 %v2033, %v2036
  %vm2038 = vweird.f32 %v1228
  %vm2039 = vweird.f32 %v2033
  %vm2040 = vmor %vm2038, %vm2039
  %v2041 = vsel %vm2040, %v2033, %v2037
  %v2042 = vand.u32 2147483647, %v1228
  %vm2043 = vcmp.eq.f32.partialorder %v2042, 8.507059e+37
  %v2044 = vand.u32 %v1228, 2147483648
  %v2045 = vor.u32 1.1754944e-38, %v2044
  %v2046 = vsel %vm2043, %v2045, %v2041
  %v2047 = vrcp.pop %v1229
  %v2048 = vmul.f32 %v1229, %v2047
  %v2049 = vsub.f32 1.0, %v2048
  %v2050 = vmul.f32 %v2047, %v2049
  %v2051 = vadd.f32 %v2047, %v2050
  %vm2052 = vweird.f32 %v1229
  %vm2053 = vweird.f32 %v2047
  %vm2054 = vmor %vm2052, %vm2053
  %v2055 = vsel %vm2054, %v2047, %v2051
  %v2056 = vand.u32 2147483647, %v1229
  %vm2057 = vcmp.eq.f32.partialorder %v2056, 8.507059e+37
  %v2058 = vand.u32 %v1229, 2147483648
  %v2059 = vor.u32 1.1754944e-38, %v2058
  %v2060 = vsel %vm2057, %v2059, %v2055
  %v2061 = vrcp.pop %v1230
  %v2062 = vmul.f32 %v1230, %v2061
  %v2063 = vsub.f32 1.0, %v2062
  %v2064 = vmul.f32 %v2061, %v2063
  %v2065 = vadd.f32 %v2061, %v2064
  %vm2066 = vweird.f32 %v1230
  %vm2067 = vweird.f32 %v2061
  %vm2068 = vmor %vm2066, %vm2067
  %v2069 = vsel %vm2068, %v2061, %v2065
  %v2070 = vand.u32 2147483647, %v1230
  %vm2071 = vcmp.eq.f32.partialorder %v2070, 8.507059e+37
  %v2072 = vand.u32 %v1230, 2147483648
  %v2073 = vor.u32 1.1754944e-38, %v2072
  %v2074 = vsel %vm2071, %v2073, %v2069
  %v2075 = vrcp.pop %v1231
  %v2076 = vmul.f32 %v1231, %v2075
  %v2077 = vsub.f32 1.0, %v2076
  %v2078 = vmul.f32 %v2075, %v2077
  %v2079 = vadd.f32 %v2075, %v2078
  %vm2080 = vweird.f32 %v1231
  %vm2081 = vweird.f32 %v2075
  %vm2082 = vmor %vm2080, %vm2081
  %v2083 = vsel %vm2082, %v2075, %v2079
  %v2084 = vand.u32 2147483647, %v1231
  %vm2085 = vcmp.eq.f32.partialorder %v2084, 8.507059e+37
  %v2086 = vand.u32 %v1231, 2147483648
  %v2087 = vor.u32 1.1754944e-38, %v2086
  %v2088 = vsel %vm2085, %v2087, %v2083
  %v2089 = vrcp.pop %v1232
  %v2090 = vmul.f32 %v1232, %v2089
  %v2091 = vsub.f32 1.0, %v2090
  %v2092 = vmul.f32 %v2089, %v2091
  %v2093 = vadd.f32 %v2089, %v2092
  %vm2094 = vweird.f32 %v1232
  %vm2095 = vweird.f32 %v2089
  %vm2096 = vmor %vm2094, %vm2095
  %v2097 = vsel %vm2096, %v2089, %v2093
  %v2098 = vand.u32 2147483647, %v1232
  %vm2099 = vcmp.eq.f32.partialorder %v2098, 8.507059e+37
  %v2100 = vand.u32 %v1232, 2147483648
  %v2101 = vor.u32 1.1754944e-38, %v2100
  %v2102 = vsel %vm2099, %v2101, %v2097
  %v2103 = vrcp.pop %v1233
  %v2104 = vmul.f32 %v1233, %v2103
  %v2105 = vsub.f32 1.0, %v2104
  %v2106 = vmul.f32 %v2103, %v2105
  %v2107 = vadd.f32 %v2103, %v2106
  %vm2108 = vweird.f32 %v1233
  %vm2109 = vweird.f32 %v2103
  %vm2110 = vmor %vm2108, %vm2109
  %v2111 = vsel %vm2110, %v2103, %v2107
  %v2112 = vand.u32 2147483647, %v1233
  %vm2113 = vcmp.eq.f32.partialorder %v2112, 8.507059e+37
  %v2114 = vand.u32 %v1233, 2147483648
  %v2115 = vor.u32 1.1754944e-38, %v2114
  %v2116 = vsel %vm2113, %v2115, %v2111
  %v2117 = vrcp.pop %v1234
  %v2118 = vmul.f32 %v1234, %v2117
  %v2119 = vsub.f32 1.0, %v2118
  %v2120 = vmul.f32 %v2117, %v2119
  %v2121 = vadd.f32 %v2117, %v2120
  %vm2122 = vweird.f32 %v1234
  %vm2123 = vweird.f32 %v2117
  %vm2124 = vmor %vm2122, %vm2123
  %v2125 = vsel %vm2124, %v2117, %v2121
  %v2126 = vand.u32 2147483647, %v1234
  %vm2127 = vcmp.eq.f32.partialorder %v2126, 8.507059e+37
  %v2128 = vand.u32 %v1234, 2147483648
  %v2129 = vor.u32 1.1754944e-38, %v2128
  %v2130 = vsel %vm2127, %v2129, %v2125
  %v2131 = vadd.f32 %v1248, %v1262
  %v2132 = vadd.f32 %v2131, %v1276
  %v2133 = vadd.f32 %v2132, %v1290
  %v2134 = vadd.f32 %v2133, %v1304
  %v2135 = vadd.f32 %v2134, %v1318
  %v2136 = vadd.f32 %v2135, %v1332
  %v2137 = vadd.f32 %v2136, %v1346
  %v2138 = vadd.f32 %v2137, %v1360
  %v2139 = vadd.f32 %v2138, %v1374
  %v2140 = vadd.f32 %v2139, %v1388
  %v2141 = vadd.f32 %v2140, %v1402
  %v2142 = vadd.f32 %v2141, %v1416
  %v2143 = vadd.f32 %v2142, %v1430
  %v2144 = vadd.f32 %v2143, %v1444
  %v2145 = vadd.f32 %v2144, %v1458
  %v2146 = vadd.f32 %v2145, %v1472
  %v2147 = vadd.f32 %v2146, %v1486
  %v2148 = vadd.f32 %v2147, %v1500
  %v2149 = vadd.f32 %v2148, %v1514
  %v2150 = vadd.f32 %v2149, %v1528
  %v2151 = vadd.f32 %v2150, %v1542
  %v2152 = vadd.f32 %v2151, %v1556
  %v2153 = vadd.f32 %v2152, %v1570
  %v2154 = vadd.f32 %v2153, %v1584
  %v2155 = vadd.f32 %v2154, %v1598
  %v2156 = vadd.f32 %v2155, %v1612
  %v2157 = vadd.f32 %v2156, %v1626
  %v2158 = vadd.f32 %v2157, %v1640
  %v2159 = vadd.f32 %v2158, %v1654
  %v2160 = vadd.f32 %v2159, %v1668
  %v2161 = vadd.f32 %v2160, %v1682
  %v2162 = vadd.f32 %v2161, %v1696
  %v2163 = vadd.f32 %v2162, %v1710
  %v2164 = vadd.f32 %v2163, %v1724
  %v2165 = vadd.f32 %v2164, %v1738
  %v2166 = vadd.f32 %v2165, %v1752
  %v2167 = vadd.f32 %v2166, %v1766
  %v2168 = vadd.f32 %v2167, %v1780
  %v2169 = vadd.f32 %v2168, %v1794
  %v2170 = vadd.f32 %v2169, %v1808
  %v2171 = vadd.f32 %v2170, %v1822
  %v2172 = vadd.f32 %v2171, %v1836
  %v2173 = vadd.f32 %v2172, %v1850
  %v2174 = vadd.f32 %v2173, %v1864
  %v2175 = vadd.f32 %v2174, %v1878
  %v2176 = vadd.f32 %v2175, %v1892
  %v2177 = vadd.f32 %v2176, %v1906
  %v2178 = vadd.f32 %v2177, %v1920
  %v2179 = vadd.f32 %v2178, %v1934
  %v2180 = vadd.f32 %v2179, %v1948
  %v2181 = vadd.f32 %v2180, %v1962
  %v2182 = vadd.f32 %v2181, %v1976
  %v2183 = vadd.f32 %v2182, %v1990
  %v2184 = vadd.f32 %v2183, %v2004
  %v2185 = vadd.f32 %v2184, %v2018
  %v2186 = vadd.f32 %v2185, %v2032
  %v2187 = vadd.f32 %v2186, %v2046
  %v2188 = vadd.f32 %v2187, %v2060
  %v2189 = vadd.f32 %v2188, %v2074
  %v2190 = vadd.f32 %v2189, %v2088
  %v2191 = vadd.f32 %v2190, %v2102
  %v2192 = vadd.f32 %v2191, %v2116
  %v2193 = vadd.f32 %v2192, %v2130
  %v2194 = vrot.slane %v2193, 4
  %v2195 = vadd.f32 %v2193, %v2194
  %v2196 = vrot.slane %v2195, 2
  %v2197 = vadd.f32 %v2195, %v2196
  %v2198 = vrot.slane %v2197, 1
  %v2199 = vadd.f32 %v2197, %v2198
  %v2200 = vmul.f32 %v2199, 0.001953125
  %v2201 = vsub.f32 %v1248, %v2200
  %v2202 = vsub.f32 %v1262, %v2200
  %v2203 = vsub.f32 %v1276, %v2200
  %v2204 = vsub.f32 %v1290, %v2200
  %v2205 = vsub.f32 %v1304, %v2200
  %v2206 = vsub.f32 %v1318, %v2200
  %v2207 = vsub.f32 %v1332, %v2200
  %v2208 = vsub.f32 %v1346, %v2200
  %v2209 = vsub.f32 %v1360, %v2200
  %v2210 = vsub.f32 %v1374, %v2200
  %v2211 = vsub.f32 %v1388, %v2200
  %v2212 = vsub.f32 %v1402, %v2200
  %v2213 = vsub.f32 %v1416, %v2200
  %v2214 = vsub.f32 %v1430, %v2200
  %v2215 = vsub.f32 %v1444, %v2200
  %v2216 = vsub.f32 %v1458, %v2200
  %v2217 = vsub.f32 %v1472, %v2200
  %v2218 = vsub.f32 %v1486, %v2200
  %v2219 = vsub.f32 %v1500, %v2200
  %v2220 = vsub.f32 %v1514, %v2200
  %v2221 = vsub.f32 %v1528, %v2200
  %v2222 = vsub.f32 %v1542, %v2200
  %v2223 = vsub.f32 %v1556, %v2200
  %v2224 = vsub.f32 %v1570, %v2200
  %v2225 = vsub.f32 %v1584, %v2200
  %v2226 = vsub.f32 %v1598, %v2200
  %v2227 = vsub.f32 %v1612, %v2200
  %v2228 = vsub.f32 %v1626, %v2200
  %v2229 = vsub.f32 %v1640, %v2200
  %v2230 = vsub.f32 %v1654, %v2200
  %v2231 = vsub.f32 %v1668, %v2200
  %v2232 = vsub.f32 %v1682, %v2200
  %v2233 = vsub.f32 %v1696, %v2200
  %v2234 = vsub.f32 %v1710, %v2200
  %v2235 = vsub.f32 %v1724, %v2200
  %v2236 = vsub.f32 %v1738, %v2200
  %v2237 = vsub.f32 %v1752, %v2200
  %v2238 = vsub.f32 %v1766, %v2200
  %v2239 = vsub.f32 %v1780, %v2200
  %v2240 = vsub.f32 %v1794, %v2200
  %v2241 = vsub.f32 %v1808, %v2200
  %v2242 = vsub.f32 %v1822, %v2200
  %v2243 = vsub.f32 %v1836, %v2200
  %v2244 = vsub.f32 %v1850, %v2200
  %v2245 = vsub.f32 %v1864, %v2200
  %v2246 = vsub.f32 %v1878, %v2200
  %v2247 = vsub.f32 %v1892, %v2200
  %v2248 = vsub.f32 %v1906, %v2200
  %v2249 = vsub.f32 %v1920, %v2200
  %v2250 = vsub.f32 %v1934, %v2200
  %v2251 = vsub.f32 %v1948, %v2200
  %v2252 = vsub.f32 %v1962, %v2200
  %v2253 = vsub.f32 %v1976, %v2200
  %v2254 = vsub.f32 %v1990, %v2200
  %v2255 = vsub.f32 %v2004, %v2200
  %v2256 = vsub.f32 %v2018, %v2200
  %v2257 = vsub.f32 %v2032, %v2200
  %v2258 = vsub.f32 %v2046, %v2200
  %v2259 = vsub.f32 %v2060, %v2200
  %v2260 = vsub.f32 %v2074, %v2200
  %v2261 = vsub.f32 %v2088, %v2200
  %v2262 = vsub.f32 %v2102, %v2200
  %v2263 = vsub.f32 %v2116, %v2200
  %v2264 = vsub.f32 %v2130, %v2200
  %v2265 = vmul.f32 %v2201, %v2201
  %v2266 = vmul.f32 %v2202, %v2202
  %v2267 = vmul.f32 %v2203, %v2203
  %v2268 = vmul.f32 %v2204, %v2204
  %v2269 = vmul.f32 %v2205, %v2205
  %v2270 = vmul.f32 %v2206, %v2206
  %v2271 = vmul.f32 %v2207, %v2207
  %v2272 = vmul.f32 %v2208, %v2208
  %v2273 = vmul.f32 %v2209, %v2209
  %v2274 = vmul.f32 %v2210, %v2210
  %v2275 = vmul.f32 %v2211, %v2211
  %v2276 = vmul.f32 %v2212, %v2212
  %v2277 = vmul.f32 %v2213, %v2213
  %v2278 = vmul.f32 %v2214, %v2214
  %v2279 = vmul.f32 %v2215, %v2215
  %v2280 = vmul.f32 %v2216, %v2216
  %v2281 = vmul.f32 %v2217, %v2217
  %v2282 = vmul.f32 %v2218, %v2218
  %v2283 = vmul.f32 %v2219, %v2219
  %v2284 = vmul.f32 %v2220, %v2220
  %v2285 = vmul.f32 %v2221, %v2221
  %v2286 = vmul.f32 %v2222, %v2222
  %v2287 = vmul.f32 %v2223, %v2223
  %v2288 = vmul.f32 %v2224, %v2224
  %v2289 = vmul.f32 %v2225, %v2225
  %v2290 = vmul.f32 %v2226, %v2226
  %v2291 = vmul.f32 %v2227, %v2227
  %v2292 = vmul.f32 %v2228, %v2228
  %v2293 = vmul.f32 %v2229, %v2229
  %v2294 = vmul.f32 %v2230, %v2230
  %v2295 = vmul.f32 %v2231, %v2231
  %v2296 = vmul.f32 %v2232, %v2232
  %v2297 = vmul.f32 %v2233, %v2233
  %v2298 = vmul.f32 %v2234, %v2234
  %v2299 = vmul.f32 %v2235, %v2235
  %v2300 = vmul.f32 %v2236, %v2236
  %v2301 = vmul.f32 %v2237, %v2237
  %v2302 = vmul.f32 %v2238, %v2238
  %v2303 = vmul.f32 %v2239, %v2239
  %v2304 = vmul.f32 %v2240, %v2240
  %v2305 = vmul.f32 %v2241, %v2241
  %v2306 = vmul.f32 %v2242, %v2242
  %v2307 = vmul.f32 %v2243, %v2243
  %v2308 = vmul.f32 %v2244, %v2244
  %v2309 = vmul.f32 %v2245, %v2245
  %v2310 = vmul.f32 %v2246, %v2246
  %v2311 = vmul.f32 %v2247, %v2247
  %v2312 = vmul.f32 %v2248, %v2248
  %v2313 = vmul.f32 %v2249, %v2249
  %v2314 = vmul.f32 %v2250, %v2250
  %v2315 = vmul.f32 %v2251, %v2251
  %v2316 = vmul.f32 %v2252, %v2252
  %v2317 = vmul.f32 %v2253, %v2253
  %v2318 = vmul.f32 %v2254, %v2254
  %v2319 = vmul.f32 %v2255, %v2255
  %v2320 = vmul.f32 %v2256, %v2256
  %v2321 = vmul.f32 %v2257, %v2257
  %v2322 = vmul.f32 %v2258, %v2258
  %v2323 = vmul.f32 %v2259, %v2259
  %v2324 = vmul.f32 %v2260, %v2260
  %v2325 = vmul.f32 %v2261, %v2261
  %v2326 = vmul.f32 %v2262, %v2262
  %v2327 = vmul.f32 %v2263, %v2263
  %v2328 = vmul.f32 %v2264, %v2264
  %v2329 = vadd.f32 %v2265, %v2266
  %v2330 = vadd.f32 %v2329, %v2267
  %v2331 = vadd.f32 %v2330, %v2268
  %v2332 = vadd.f32 %v2331, %v2269
  %v2333 = vadd.f32 %v2332, %v2270
  %v2334 = vadd.f32 %v2333, %v2271
  %v2335 = vadd.f32 %v2334, %v2272
  %v2336 = vadd.f32 %v2335, %v2273
  %v2337 = vadd.f32 %v2336, %v2274
  %v2338 = vadd.f32 %v2337, %v2275
  %v2339 = vadd.f32 %v2338, %v2276
  %v2340 = vadd.f32 %v2339, %v2277
  %v2341 = vadd.f32 %v2340, %v2278
  %v2342 = vadd.f32 %v2341, %v2279
  %v2343 = vadd.f32 %v2342, %v2280
  %v2344 = vadd.f32 %v2343, %v2281
  %v2345 = vadd.f32 %v2344, %v2282
  %v2346 = vadd.f32 %v2345, %v2283
  %v2347 = vadd.f32 %v2346, %v2284
  %v2348 = vadd.f32 %v2347, %v2285
  %v2349 = vadd.f32 %v2348, %v2286
  %v2350 = vadd.f32 %v2349, %v2287
  %v2351 = vadd.f32 %v2350, %v2288
  %v2352 = vadd.f32 %v2351, %v2289
  %v2353 = vadd.f32 %v2352, %v2290
  %v2354 = vadd.f32 %v2353, %v2291
  %v2355 = vadd.f32 %v2354, %v2292
  %v2356 = vadd.f32 %v2355, %v2293
  %v2357 = vadd.f32 %v2356, %v2294
  %v2358 = vadd.f32 %v2357, %v2295
  %v2359 = vadd.f32 %v2358, %v2296
  %v2360 = vadd.f32 %v2359, %v2297
  %v2361 = vadd.f32 %v2360, %v2298
  %v2362 = vadd.f32 %v2361, %v2299
  %v2363 = vadd.f32 %v2362, %v2300
  %v2364 = vadd.f32 %v2363, %v2301
  %v2365 = vadd.f32 %v2364, %v2302
  %v2366 = vadd.f32 %v2365, %v2303
  %v2367 = vadd.f32 %v2366, %v2304
  %v2368 = vadd.f32 %v2367, %v2305
  %v2369 = vadd.f32 %v2368, %v2306
  %v2370 = vadd.f32 %v2369, %v2307
  %v2371 = vadd.f32 %v2370, %v2308
  %v2372 = vadd.f32 %v2371, %v2309
  %v2373 = vadd.f32 %v2372, %v2310
  %v2374 = vadd.f32 %v2373, %v2311
  %v2375 = vadd.f32 %v2374, %v2312
  %v2376 = vadd.f32 %v2375, %v2313
  %v2377 = vadd.f32 %v2376, %v2314
  %v2378 = vadd.f32 %v2377, %v2315
  %v2379 = vadd.f32 %v2378, %v2316
  %v2380 = vadd.f32 %v2379, %v2317
  %v2381 = vadd.f32 %v2380, %v2318
  %v2382 = vadd.f32 %v2381, %v2319
  %v2383 = vadd.f32 %v2382, %v2320
  %v2384 = vadd.f32 %v2383, %v2321
  %v2385 = vadd.f32 %v2384, %v2322
  %v2386 = vadd.f32 %v2385, %v2323
  %v2387 = vadd.f32 %v2386, %v2324
  %v2388 = vadd.f32 %v2387, %v2325
  %v2389 = vadd.f32 %v2388, %v2326
  %v2390 = vadd.f32 %v2389, %v2327
  %v2391 = vadd.f32 %v2390, %v2328
  %v2392 = vrot.slane %v2391, 4
  %v2393 = vadd.f32 %v2391, %v2392
  %v2394 = vrot.slane %v2393, 2
  %v2395 = vadd.f32 %v2393, %v2394
  %v2396 = vrot.slane %v2395, 1
  %v2397 = vadd.f32 %v2395, %v2396
  %v2398 = vmul.f32 %v2397, 0.001953125
  %v2399 = vadd.f32 %v2398, 1e-05
  %v2400 = vrsqrt.pop %v2399
  %v2401 = vmul.f32 %v2400, %v2399
  %v2402 = vmul.f32 %v2401, %v2400
  %v2403 = vmul.f32 0.5, %v2402
  %v2404 = vsub.f32 1.5, %v2403
  %v2405 = vmul.f32 %v2400, %v2404
  %vm2406 = vweird.f32 %v2399
  %vm2407 = vweird.f32 %v2400
  %vm2408 = vmor %vm2406, %vm2407
  %v2409 = vsel %vm2408, %v2400, %v2405
  %v2410 = vmul.f32 %v2201, %v2409
  %v2411 = vmul.f32 %v2202, %v2409
  %v2412 = vmul.f32 %v2203, %v2409
  %v2413 = vmul.f32 %v2204, %v2409
  %v2414 = vmul.f32 %v2205, %v2409
  %v2415 = vmul.f32 %v2206, %v2409
  %v2416 = vmul.f32 %v2207, %v2409
  %v2417 = vmul.f32 %v2208, %v2409
  %v2418 = vmul.f32 %v2209, %v2409
  %v2419 = vmul.f32 %v2210, %v2409
  %v2420 = vmul.f32 %v2211, %v2409
  %v2421 = vmul.f32 %v2212, %v2409
  %v2422 = vmul.f32 %v2213, %v2409
  %v2423 = vmul.f32 %v2214, %v2409
  %v2424 = vmul.f32 %v2215, %v2409
  %v2425 = vmul.f32 %v2216, %v2409
  %v2426 = vmul.f32 %v2217, %v2409
  %v2427 = vmul.f32 %v2218, %v2409
  %v2428 = vmul.f32 %v2219, %v2409
  %v2429 = vmul.f32 %v2220, %v2409
  %v2430 = vmul.f32 %v2221, %v2409
  %v2431 = vmul.f32 %v2222, %v2409
  %v2432 = vmul.f32 %v2223, %v2409
  %v2433 = vmul.f32 %v2224, %v2409
  %v2434 = vmul.f32 %v2225, %v2409
  %v2435 = vmul.f32 %v2226, %v2409
  %v2436 = vmul.f32 %v2227, %v2409
  %v2437 = vmul.f32 %v2228, %v2409
  %v2438 = vmul.f32 %v2229, %v2409
  %v2439 = vmul.f32 %v2230, %v2409
  %v2440 = vmul.f32 %v2231, %v2409
  %v2441 = vmul.f32 %v2232, %v2409
  %v2442 = vmul.f32 %v2233, %v2409
  %v2443 = vmul.f32 %v2234, %v2409
  %v2444 = vmul.f32 %v2235, %v2409
  %v2445 = vmul.f32 %v2236, %v2409
  %v2446 = vmul.f32 %v2237, %v2409
  %v2447 = vmul.f32 %v2238, %v2409
  %v2448 = vmul.f32 %v2239, %v2409
  %v2449 = vmul.f32 %v2240, %v2409
  %v2450 = vmul.f32 %v2241, %v2409
  %v2451 = vmul.f32 %v2242, %v2409
  %v2452 = vmul.f32 %v2243, %v2409
  %v2453 = vmul.f32 %v2244, %v2409
  %v2454 = vmul.f32 %v2245, %v2409
  %v2455 = vmul.f32 %v2246, %v2409
  %v2456 = vmul.f32 %v2247, %v2409
  %v2457 = vmul.f32 %v2248, %v2409
  %v2458 = vmul.f32 %v2249, %v2409
  %v2459 = vmul.f32 %v2250, %v2409
  %v2460 = vmul.f32 %v2251, %v2409
  %v2461 = vmul.f32 %v2252, %v2409
  %v2462 = vmul.f32 %v2253, %v2409
  %v2463 = vmul.f32 %v2254, %v2409
  %v2464 = vmul.f32 %v2255, %v2409
  %v2465 = vmul.f32 %v2256, %v2409
  %v2466 = vmul.f32 %v2257, %v2409
  %v2467 = vmul.f32 %v2258, %v2409
  %v2468 = vmul.f32 %v2259, %v2409
  %v2469 = vmul.f32 %v2260, %v2409
  %v2470 = vmul.f32 %v2261, %v2409
  %v2471 = vmul.f32 %v2262, %v2409
  %v2472 = vmul.f32 %v2263, %v2409
  %v2473 = vmul.f32 %v2264, %v2409
  %v2474 = vadd.f32 %v515, %v2410
  %v2475 = vadd.f32 %v518, %v2411
  %v2476 = vadd.f32 %v521, %v2412
  %v2477 = vadd.f32 %v524, %v2413
  %v2478 = vadd.f32 %v527, %v2414
  %v2479 = vadd.f32 %v530, %v2415
  %v2480 = vadd.f32 %v533, %v2416
  %v2481 = vadd.f32 %v536, %v2417
  %v2482 = vadd.f32 %v539, %v2418
  %v2483 = vadd.f32 %v542, %v2419
  %v2484 = vadd.f32 %v545, %v2420
  %v2485 = vadd.f32 %v548, %v2421
  %v2486 = vadd.f32 %v551, %v2422
  %v2487 = vadd.f32 %v554, %v2423
  %v2488 = vadd.f32 %v557, %v2424
  %v2489 = vadd.f32 %v560, %v2425
  %v2490 = vadd.f32 %v563, %v2426
  %v2491 = vadd.f32 %v566, %v2427
  %v2492 = vadd.f32 %v569, %v2428
  %v2493 = vadd.f32 %v572, %v2429
  %v2494 = vadd.f32 %v575, %v2430
  %v2495 = vadd.f32 %v578, %v2431
  %v2496 = vadd.f32 %v581, %v2432
  %v2497 = vadd.f32 %v584, %v2433
  %v2498 = vadd.f32 %v587, %v2434
  %v2499 = vadd.f32 %v590, %v2435
  %v2500 = vadd.f32 %v593, %v2436
  %v2501 = vadd.f32 %v596, %v2437
  %v2502 = vadd.f32 %v599, %v2438
  %v2503 = vadd.f32 %v602, %v2439
  %v2504 = vadd.f32 %v605, %v2440
  %v2505 = vadd.f32 %v608, %v2441
  %v2506 = vadd.f32 %v611, %v2442
  %v2507 = vadd.f32 %v614, %v2443
  %v2508 = vadd.f32 %v617, %v2444
  %v2509 = vadd.f32 %v620, %v2445
  %v2510 = vadd.f32 %v623, %v2446
  %v2511 = vadd.f32 %v626, %v2447
  %v2512 = vadd.f32 %v629, %v2448
  %v2513 = vadd.f32 %v632, %v2449
  %v2514 = vadd.f32 %v635, %v2450
  %v2515 = vadd.f32 %v638, %v2451
  %v2516 = vadd.f32 %v641, %v2452
  %v2517 = vadd.f32 %v644, %v2453
  %v2518 = vadd.f32 %v647, %v2454
  %v2519 = vadd.f32 %v650, %v2455
  %v2520 = vadd.f32 %v653, %v2456
  %v2521 = vadd.f32 %v656, %v2457
  %v2522 = vadd.f32 %v659, %v2458
  %v2523 = vadd.f32 %v662, %v2459
  %v2524 = vadd.f32 %v665, %v2460
  %v2525 = vadd.f32 %v668, %v2461
  %v2526 = vadd.f32 %v671, %v2462
  %v2527 = vadd.f32 %v674, %v2463
  %v2528 = vadd.f32 %v677, %v2464
  %v2529 = vadd.f32 %v680, %v2465
  %v2530 = vadd.f32 %v683, %v2466
  %v2531 = vadd.f32 %v686, %v2467
  %v2532 = vadd.f32 %v689, %v2468
  %v2533 = vadd.f32 %v692, %v2469
  %v2534 = vadd.f32 %v695, %v2470
  %v2535 = vadd.f32 %v698, %v2471
  %v2536 = vadd.f32 %v701, %v2472
  %v2537 = vadd.f32 %v704, %v2473
  %v2538 = vand.u32 2147483647, %v2474
  %v2539 = vand.u32 2147483647, %v2475
  %v2540 = vand.u32 2147483647, %v2476
  %v2541 = vand.u32 2147483647, %v2477
  %v2542 = vand.u32 2147483647, %v2478
  %v2543 = vand.u32 2147483647, %v2479
  %v2544 = vand.u32 2147483647, %v2480
  %v2545 = vand.u32 2147483647, %v2481
  %v2546 = vand.u32 2147483647, %v2482
  %v2547 = vand.u32 2147483647, %v2483
  %v2548 = vand.u32 2147483647, %v2484
  %v2549 = vand.u32 2147483647, %v2485
  %v2550 = vand.u32 2147483647, %v2486
  %v2551 = vand.u32 2147483647, %v2487
  %v2552 = vand.u32 2147483647, %v2488
  %v2553 = vand.u32 2147483647, %v2489
  %v2554 = vand.u32 2147483647, %v2490
  %v2555 = vand.u32 2147483647, %v2491
  %v2556 = vand.u32 2147483647, %v2492
  %v2557 = vand.u32 2147483647, %v2493
  %v2558 = vand.u32 2147483647, %v2494
  %v2559 = vand.u32 2147483647, %v2495
  %v2560 = vand.u32 2147483647, %v2496
  %v2561 = vand.u32 2147483647, %v2497
  %v2562 = vand.u32 2147483647, %v2498
  %v2563 = vand.u32 2147483647, %v2499
  %v2564 = vand.u32 2147483647, %v2500
  %v2565 = vand.u32 2147483647, %v2501
  %v2566 = vand.u32 2147483647, %v2502
  %v2567 = vand.u32 2147483647, %v2503
  %v2568 = vand.u32 2147483647, %v2504
  %v2569 = vand.u32 2147483647, %v2505
  %v2570 = vand.u32 2147483647, %v2506
  %v2571 = vand.u32 2147483647, %v2507
  %v2572 = vand.u32 2147483647, %v2508
  %v2573 = vand.u32 2147483647, %v2509
  %v2574 = vand.u32 2147483647, %v2510
  %v2575 = vand.u32 2147483647, %v2511
  %v2576 = vand.u32 2147483647, %v2512
  %v2577 = vand.u32 2147483647, %v2513
  %v2578 = vand.u32 2147483647, %v2514
  %v2579 = vand.u32 2147483647, %v2515
  %v2580 = vand.u32 2147483647, %v2516
  %v2581 = vand.u32 2147483647, %v2517
  %v2582 = vand.u32 2147483647, %v2518
  %v2583 = vand.u32 2147483647, %v2519
  %v2584 = vand.u32 2147483647, %v2520
  %v2585 = vand.u32 2147483647, %v2521
  %v2586 = vand.u32 2147483647, %v2522
  %v2587 = vand.u32 2147483647, %v2523
  %v2588 = vand.u32 2147483647, %v2524
  %v2589 = vand.u32 2147483647, %v2525
  %v2590 = vand.u32 2147483647, %v2526
  %v2591 = vand.u32 2147483647, %v2527
  %v2592 = vand.u32 2147483647, %v2528
  %v2593 = vand.u32 2147483647, %v2529
  %v2594 = vand.u32 2147483647, %v2530
  %v2595 = vand.u32 2147483647, %v2531
  %v2596 = vand.u32 2147483647, %v2532
  %v2597 = vand.u32 2147483647, %v2533
  %v2598 = vand.u32 2147483647, %v2534
  %v2599 = vand.u32 2147483647, %v2535
  %v2600 = vand.u32 2147483647, %v2536
  %v2601 = vand.u32 2147483647, %v2537
  %vm2602 = vcmp.lt.f32.partialorder %v2538, 0.01
  %vm2603 = vcmp.lt.f32.partialorder %v2539, 0.01
  %vm2604 = vcmp.lt.f32.partialorder %v2540, 0.01
  %vm2605 = vcmp.lt.f32.partialorder %v2541, 0.01
  %vm2606 = vcmp.lt.f32.partialorder %v2542, 0.01
  %vm2607 = vcmp.lt.f32.partialorder %v2543, 0.01
  %vm2608 = vcmp.lt.f32.partialorder %v2544, 0.01
  %vm2609 = vcmp.lt.f32.partialorder %v2545, 0.01
  %vm2610 = vcmp.lt.f32.partialorder %v2546, 0.01
  %vm2611 = vcmp.lt.f32.partialorder %v2547, 0.01
  %vm2612 = vcmp.lt.f32.partialorder %v2548, 0.01
  %vm2613 = vcmp.lt.f32.partialorder %v2549, 0.01
  %vm2614 = vcmp.lt.f32.partialorder %v2550, 0.01
  %vm2615 = vcmp.lt.f32.partialorder %v2551, 0.01
  %vm2616 = vcmp.lt.f32.partialorder %v2552, 0.01
  %vm2617 = vcmp.lt.f32.partialorder %v2553, 0.01
  %vm2618 = vcmp.lt.f32.partialorder %v2554, 0.01
  %vm2619 = vcmp.lt.f32.partialorder %v2555, 0.01
  %vm2620 = vcmp.lt.f32.partialorder %v2556, 0.01
  %vm2621 = vcmp.lt.f32.partialorder %v2557, 0.01
  %vm2622 = vcmp.lt.f32.partialorder %v2558, 0.01
  %vm2623 = vcmp.lt.f32.partialorder %v2559, 0.01
  %vm2624 = vcmp.lt.f32.partialorder %v2560, 0.01
  %vm2625 = vcmp.lt.f32.partialorder %v2561, 0.01
  %vm2626 = vcmp.lt.f32.partialorder %v2562, 0.01
  %vm2627 = vcmp.lt.f32.partialorder %v2563, 0.01
  %vm2628 = vcmp.lt.f32.partialorder %v2564, 0.01
  %vm2629 = vcmp.lt.f32.partialorder %v2565, 0.01
  %vm2630 = vcmp.lt.f32.partialorder %v2566, 0.01
  %vm2631 = vcmp.lt.f32.partialorder %v2567, 0.01
  %vm2632 = vcmp.lt.f32.partialorder %v2568, 0.01
  %vm2633 = vcmp.lt.f32.partialorder %v2569, 0.01
  %vm2634 = vcmp.lt.f32.partialorder %v2570, 0.01
  %vm2635 = vcmp.lt.f32.partialorder %v2571, 0.01
  %vm2636 = vcmp.lt.f32.partialorder %v2572, 0.01
  %vm2637 = vcmp.lt.f32.partialorder %v2573, 0.01
  %vm2638 = vcmp.lt.f32.partialorder %v2574, 0.01
  %vm2639 = vcmp.lt.f32.partialorder %v2575, 0.01
  %vm2640 = vcmp.lt.f32.partialorder %v2576, 0.01
  %vm2641 = vcmp.lt.f32.partialorder %v2577, 0.01
  %vm2642 = vcmp.lt.f32.partialorder %v2578, 0.01
  %vm2643 = vcmp.lt.f32.partialorder %v2579, 0.01
  %vm2644 = vcmp.lt.f32.partialorder %v2580, 0.01
  %vm2645 = vcmp.lt.f32.partialorder %v2581, 0.01
  %vm2646 = vcmp.lt.f32.partialorder %v2582, 0.01
  %vm2647 = vcmp.lt.f32.partialorder %v2583, 0.01
  %vm2648 = vcmp.lt.f32.partialorder %v2584, 0.01
  %vm2649 = vcmp.lt.f32.partialorder %v2585, 0.01
  %vm2650 = vcmp.lt.f32.partialorder %v2586, 0.01
  %vm2651 = vcmp.lt.f32.partialorder %v2587, 0.01
  %vm2652 = vcmp.lt.f32.partialorder %v2588, 0.01
  %vm2653 = vcmp.lt.f32.partialorder %v2589, 0.01
  %vm2654 = vcmp.lt.f32.partialorder %v2590, 0.01
  %vm2655 = vcmp.lt.f32.partialorder %v2591, 0.01
  %vm2656 = vcmp.lt.f32.partialorder %v2592, 0.01
  %vm2657 = vcmp.lt.f32.partialorder %v2593, 0.01
  %vm2658 = vcmp.lt.f32.partialorder %v2594, 0.01
  %vm2659 = vcmp.lt.f32.partialorder %v2595, 0.01
  %vm2660 = vcmp.lt.f32.partialorder %v2596, 0.01
  %vm2661 = vcmp.lt.f32.partialorder %v2597, 0.01
  %vm2662 = vcmp.lt.f32.partialorder %v2598, 0.01
  %vm2663 = vcmp.lt.f32.partialorder %v2599, 0.01
  %vm2664 = vcmp.lt.f32.partialorder %v2600, 0.01
  %vm2665 = vcmp.lt.f32.partialorder %v2601, 0.01
  %vm2666 = vcmp.lt.f32.partialorder %v2474, 0.0
  %vm2667 = vcmp.lt.f32.partialorder %v2475, 0.0
  %vm2668 = vcmp.lt.f32.partialorder %v2476, 0.0
  %vm2669 = vcmp.lt.f32.partialorder %v2477, 0.0
  %vm2670 = vcmp.lt.f32.partialorder %v2478, 0.0
  %vm2671 = vcmp.lt.f32.partialorder %v2479, 0.0
  %vm2672 = vcmp.lt.f32.partialorder %v2480, 0.0
  %vm2673 = vcmp.lt.f32.partialorder %v2481, 0.0
  %vm2674 = vcmp.lt.f32.partialorder %v2482, 0.0
  %vm2675 = vcmp.lt.f32.partialorder %v2483, 0.0
  %vm2676 = vcmp.lt.f32.partialorder %v2484, 0.0
  %vm2677 = vcmp.lt.f32.partialorder %v2485, 0.0
  %vm2678 = vcmp.lt.f32.partialorder %v2486, 0.0
  %vm2679 = vcmp.lt.f32.partialorder %v2487, 0.0
  %vm2680 = vcmp.lt.f32.partialorder %v2488, 0.0
  %vm2681 = vcmp.lt.f32.partialorder %v2489, 0.0
  %vm2682 = vcmp.lt.f32.partialorder %v2490, 0.0
  %vm2683 = vcmp.lt.f32.partialorder %v2491, 0.0
  %vm2684 = vcmp.lt.f32.partialorder %v2492, 0.0
  %vm2685 = vcmp.lt.f32.partialorder %v2493, 0.0
  %vm2686 = vcmp.lt.f32.partialorder %v2494, 0.0
  %vm2687 = vcmp.lt.f32.partialorder %v2495, 0.0
  %vm2688 = vcmp.lt.f32.partialorder %v2496, 0.0
  %vm2689 = vcmp.lt.f32.partialorder %v2497, 0.0
  %vm2690 = vcmp.lt.f32.partialorder %v2498, 0.0
  %vm2691 = vcmp.lt.f32.partialorder %v2499, 0.0
  %vm2692 = vcmp.lt.f32.partialorder %v2500, 0.0
  %vm2693 = vcmp.lt.f32.partialorder %v2501, 0.0
  %vm2694 = vcmp.lt.f32.partialorder %v2502, 0.0
  %vm2695 = vcmp.lt.f32.partialorder %v2503, 0.0
  %vm2696 = vcmp.lt.f32.partialorder %v2504, 0.0
  %vm2697 = vcmp.lt.f32.partialorder %v2505, 0.0
  %vm2698 = vcmp.lt.f32.partialorder %v2506, 0.0
  %vm2699 = vcmp.lt.f32.partialorder %v2507, 0.0
  %vm2700 = vcmp.lt.f32.partialorder %v2508, 0.0
  %vm2701 = vcmp.lt.f32.partialorder %v2509, 0.0
  %vm2702 = vcmp.lt.f32.partialorder %v2510, 0.0
  %vm2703 = vcmp.lt.f32.partialorder %v2511, 0.0
  %vm2704 = vcmp.lt.f32.partialorder %v2512, 0.0
  %vm2705 = vcmp.lt.f32.partialorder %v2513, 0.0
  %vm2706 = vcmp.lt.f32.partialorder %v2514, 0.0
  %vm2707 = vcmp.lt.f32.partialorder %v2515, 0.0
  %vm2708 = vcmp.lt.f32.partialorder %v2516, 0.0
  %vm2709 = vcmp.lt.f32.partialorder %v2517, 0.0
  %vm2710 = vcmp.lt.f32.partialorder %v2518, 0.0
  %vm2711 = vcmp.lt.f32.partialorder %v2519, 0.0
  %vm2712 = vcmp.lt.f32.partialorder %v2520, 0.0
  %vm2713 = vcmp.lt.f32.partialorder %v2521, 0.0
  %vm2714 = vcmp.lt.f32.partialorder %v2522, 0.0
  %vm2715 = vcmp.lt.f32.partialorder %v2523, 0.0
  %vm2716 = vcmp.lt.f32.partialorder %v2524, 0.0
  %vm2717 = vcmp.lt.f32.partialorder %v2525, 0.0
  %vm2718 = vcmp.lt.f32.partialorder %v2526, 0.0
  %vm2719 = vcmp.lt.f32.partialorder %v2527, 0.0
  %vm2720 = vcmp.lt.f32.partialorder %v2528, 0.0
  %vm2721 = vcmp.lt.f32.partialorder %v2529, 0.0
  %vm2722 = vcmp.lt.f32.partialorder %v2530, 0.0
  %vm2723 = vcmp.lt.f32.partialorder %v2531, 0.0
  %vm2724 = vcmp.lt.f32.partialorder %v2532, 0.0
  %vm2725 = vcmp.lt.f32.partialorder %v2533, 0.0
  %vm2726 = vcmp.lt.f32.partialorder %v2534, 0.0
  %vm2727 = vcmp.lt.f32.partialorder %v2535, 0.0
  %vm2728 = vcmp.lt.f32.partialorder %v2536, 0.0
  %vm2729 = vcmp.lt.f32.partialorder %v2537, 0.0
  %v2730 = vsel %vm2666, -0.01, 0.01
  %v2731 = vsel %vm2667, -0.01, 0.01
  %v2732 = vsel %vm2668, -0.01, 0.01
  %v2733 = vsel %vm2669, -0.01, 0.01
  %v2734 = vsel %vm2670, -0.01, 0.01
  %v2735 = vsel %vm2671, -0.01, 0.01
  %v2736 = vsel %vm2672, -0.01, 0.01
  %v2737 = vsel %vm2673, -0.01, 0.01
  %v2738 = vsel %vm2674, -0.01, 0.01
  %v2739 = vsel %vm2675, -0.01, 0.01
  %v2740 = vsel %vm2676, -0.01, 0.01
  %v2741 = vsel %vm2677, -0.01, 0.01
  %v2742 = vsel %vm2678, -0.01, 0.01
  %v2743 = vsel %vm2679, -0.01, 0.01
  %v2744 = vsel %vm2680, -0.01, 0.01
  %v2745 = vsel %vm2681, -0.01, 0.01
  %v2746 = vsel %vm2682, -0.01, 0.01
  %v2747 = vsel %vm2683, -0.01, 0.01
  %v2748 = vsel %vm2684, -0.01, 0.01
  %v2749 = vsel %vm2685, -0.01, 0.01
  %v2750 = vsel %vm2686, -0.01, 0.01
  %v2751 = vsel %vm2687, -0.01, 0.01
  %v2752 = vsel %vm2688, -0.01, 0.01
  %v2753 = vsel %vm2689, -0.01, 0.01
  %v2754 = vsel %vm2690, -0.01, 0.01
  %v2755 = vsel %vm2691, -0.01, 0.01
  %v2756 = vsel %vm2692, -0.01, 0.01
  %v2757 = vsel %vm2693, -0.01, 0.01
  %v2758 = vsel %vm2694, -0.01, 0.01
  %v2759 = vsel %vm2695, -0.01, 0.01
  %v2760 = vsel %vm2696, -0.01, 0.01
  %v2761 = vsel %vm2697, -0.01, 0.01
  %v2762 = vsel %vm2698, -0.01, 0.01
  %v2763 = vsel %vm2699, -0.01, 0.01
  %v2764 = vsel %vm2700, -0.01, 0.01
  %v2765 = vsel %vm2701, -0.01, 0.01
  %v2766 = vsel %vm2702, -0.01, 0.01
  %v2767 = vsel %vm2703, -0.01, 0.01
  %v2768 = vsel %vm2704, -0.01, 0.01
  %v2769 = vsel %vm2705, -0.01, 0.01
  %v2770 = vsel %vm2706, -0.01, 0.01
  %v2771 = vsel %vm2707, -0.01, 0.01
  %v2772 = vsel %vm2708, -0.01, 0.01
  %v2773 = vsel %vm2709, -0.01, 0.01
  %v2774 = vsel %vm2710, -0.01, 0.01
  %v2775 = vsel %vm2711, -0.01, 0.01
  %v2776 = vsel %vm2712, -0.01, 0.01
  %v2777 = vsel %vm2713, -0.01, 0.01
  %v2778 = vsel %vm2714, -0.01, 0.01
  %v2779 = vsel %vm2715, -0.01, 0.01
  %v2780 = vsel %vm2716, -0.01, 0.01
  %v2781 = vsel %vm2717, -0.01, 0.01
  %v2782 = vsel %vm2718, -0.01, 0.01
  %v2783 = vsel %vm2719, -0.01, 0.01
  %v2784 = vsel %vm2720, -0.01, 0.01
  %v2785 = vsel %vm2721, -0.01, 0.01
  %v2786 = vsel %vm2722, -0.01, 0.01
  %v2787 = vsel %vm2723, -0.01, 0.01
  %v2788 = vsel %vm2724, -0.01, 0.01
  %v2789 = vsel %vm2725, -0.01, 0.01
  %v2790 = vsel %vm2726, -0.01, 0.01
  %v2791 = vsel %vm2727, -0.01, 0.01
  %v2792 = vsel %vm2728, -0.01, 0.01
  %v2793 = vsel %vm2729, -0.01, 0.01
  %v2794 = vsel %vm2602, %v2730, %v2474
  %v2795 = vsel %vm2603, %v2731, %v2475
  %v2796 = vsel %vm2604, %v2732, %v2476
  %v2797 = vsel %vm2605, %v2733, %v2477
  %v2798 = vsel %vm2606, %v2734, %v2478
  %v2799 = vsel %vm2607, %v2735, %v2479
  %v2800 = vsel %vm2608, %v2736, %v2480
  %v2801 = vsel %vm2609, %v2737, %v2481
  %v2802 = vsel %vm2610, %v2738, %v2482
  %v2803 = vsel %vm2611, %v2739, %v2483
  %v2804 = vsel %vm2612, %v2740, %v2484
  %v2805 = vsel %vm2613, %v2741, %v2485
  %v2806 = vsel %vm2614, %v2742, %v2486
  %v2807 = vsel %vm2615, %v2743, %v2487
  %v2808 = vsel %vm2616, %v2744, %v2488
  %v2809 = vsel %vm2617, %v2745, %v2489
  %v2810 = vsel %vm2618, %v2746, %v2490
  %v2811 = vsel %vm2619, %v2747, %v2491
  %v2812 = vsel %vm2620, %v2748, %v2492
  %v2813 = vsel %vm2621, %v2749, %v2493
  %v2814 = vsel %vm2622, %v2750, %v2494
  %v2815 = vsel %vm2623, %v2751, %v2495
  %v2816 = vsel %vm2624, %v2752, %v2496
  %v2817 = vsel %vm2625, %v2753, %v2497
  %v2818 = vsel %vm2626, %v2754, %v2498
  %v2819 = vsel %vm2627, %v2755, %v2499
  %v2820 = vsel %vm2628, %v2756, %v2500
  %v2821 = vsel %vm2629, %v2757, %v2501
  %v2822 = vsel %vm2630, %v2758, %v2502
  %v2823 = vsel %vm2631, %v2759, %v2503
  %v2824 = vsel %vm2632, %v2760, %v2504
  %v2825 = vsel %vm2633, %v2761, %v2505
  %v2826 = vsel %vm2634, %v2762, %v2506
  %v2827 = vsel %vm2635, %v2763, %v2507
  %v2828 = vsel %vm2636, %v2764, %v2508
  %v2829 = vsel %vm2637, %v2765, %v2509
  %v2830 = vsel %vm2638, %v2766, %v2510
  %v2831 = vsel %vm2639, %v2767, %v2511
  %v2832 = vsel %vm2640, %v2768, %v2512
  %v2833 = vsel %vm2641, %v2769, %v2513
  %v2834 = vsel %vm2642, %v2770, %v2514
  %v2835 = vsel %vm2643, %v2771, %v2515
  %v2836 = vsel %vm2644, %v2772, %v2516
  %v2837 = vsel %vm2645, %v2773, %v2517
  %v2838 = vsel %vm2646, %v2774, %v2518
  %v2839 = vsel %vm2647, %v2775, %v2519
  %v2840 = vsel %vm2648, %v2776, %v2520
  %v2841 = vsel %vm2649, %v2777, %v2521
  %v2842 = vsel %vm2650, %v2778, %v2522
  %v2843 = vsel %vm2651, %v2779, %v2523
  %v2844 = vsel %vm2652, %v2780, %v2524
  %v2845 = vsel %vm2653, %v2781, %v2525
  %v2846 = vsel %vm2654, %v2782, %v2526
  %v2847 = vsel %vm2655, %v2783, %v2527
  %v2848 = vsel %vm2656, %v2784, %v2528
  %v2849 = vsel %vm2657, %v2785, %v2529
  %v2850 = vsel %vm2658, %v2786, %v2530
  %v2851 = vsel %vm2659, %v2787, %v2531
  %v2852 = vsel %vm2660, %v2788, %v2532
  %v2853 = vsel %vm2661, %v2789, %v2533
  %v2854 = vsel %vm2662, %v2790, %v2534
  %v2855 = vsel %vm2663, %v2791, %v2535
  %v2856 = vsel %vm2664, %v2792, %v2536
  %v2857 = vsel %vm2665, %v2793, %v2537
  %v2858 = vrcp.pop %v2794
  %v2859 = vmul.f32 %v2794, %v2858
  %v2860 = vsub.f32 1.0, %v2859
  %v2861 = vmul.f32 %v2858, %v2860
  %v2862 = vadd.f32 %v2858, %v2861
  %vm2863 = vweird.f32 %v2794
  %vm2864 = vweird.f32 %v2858
  %vm2865 = vmor %vm2863, %vm2864
  %v2866 = vsel %vm2865, %v2858, %v2862
  %v2867 = vand.u32 2147483647, %v2794
  %vm2868 = vcmp.eq.f32.partialorder %v2867, 8.507059e+37
  %v2869 = vand.u32 %v2794, 2147483648
  %v2870 = vor.u32 1.1754944e-38, %v2869
  %v2871 = vsel %vm2868, %v2870, %v2866
  %v2872 = vrcp.pop %v2795
  %v2873 = vmul.f32 %v2795, %v2872
  %v2874 = vsub.f32 1.0, %v2873
  %v2875 = vmul.f32 %v2872, %v2874
  %v2876 = vadd.f32 %v2872, %v2875
  %vm2877 = vweird.f32 %v2795
  %vm2878 = vweird.f32 %v2872
  %vm2879 = vmor %vm2877, %vm2878
  %v2880 = vsel %vm2879, %v2872, %v2876
  %v2881 = vand.u32 2147483647, %v2795
  %vm2882 = vcmp.eq.f32.partialorder %v2881, 8.507059e+37
  %v2883 = vand.u32 %v2795, 2147483648
  %v2884 = vor.u32 1.1754944e-38, %v2883
  %v2885 = vsel %vm2882, %v2884, %v2880
  %v2886 = vrcp.pop %v2796
  %v2887 = vmul.f32 %v2796, %v2886
  %v2888 = vsub.f32 1.0, %v2887
  %v2889 = vmul.f32 %v2886, %v2888
  %v2890 = vadd.f32 %v2886, %v2889
  %vm2891 = vweird.f32 %v2796
  %vm2892 = vweird.f32 %v2886
  %vm2893 = vmor %vm2891, %vm2892
  %v2894 = vsel %vm2893, %v2886, %v2890
  %v2895 = vand.u32 2147483647, %v2796
  %vm2896 = vcmp.eq.f32.partialorder %v2895, 8.507059e+37
  %v2897 = vand.u32 %v2796, 2147483648
  %v2898 = vor.u32 1.1754944e-38, %v2897
  %v2899 = vsel %vm2896, %v2898, %v2894
  %v2900 = vrcp.pop %v2797
  %v2901 = vmul.f32 %v2797, %v2900
  %v2902 = vsub.f32 1.0, %v2901
  %v2903 = vmul.f32 %v2900, %v2902
  %v2904 = vadd.f32 %v2900, %v2903
  %vm2905 = vweird.f32 %v2797
  %vm2906 = vweird.f32 %v2900
  %vm2907 = vmor %vm2905, %vm2906
  %v2908 = vsel %vm2907, %v2900, %v2904
  %v2909 = vand.u32 2147483647, %v2797
  %vm2910 = vcmp.eq.f32.partialorder %v2909, 8.507059e+37
  %v2911 = vand.u32 %v2797, 2147483648
  %v2912 = vor.u32 1.1754944e-38, %v2911
  %v2913 = vsel %vm2910, %v2912, %v2908
  %v2914 = vrcp.pop %v2798
  %v2915 = vmul.f32 %v2798, %v2914
  %v2916 = vsub.f32 1.0, %v2915
  %v2917 = vmul.f32 %v2914, %v2916
  %v2918 = vadd.f32 %v2914, %v2917
  %vm2919 = vweird.f32 %v2798
  %vm2920 = vweird.f32 %v2914
  %vm2921 = vmor %vm2919, %vm2920
  %v2922 = vsel %vm2921, %v2914, %v2918
  %v2923 = vand.u32 2147483647, %v2798
  %vm2924 = vcmp.eq.f32.partialorder %v2923, 8.507059e+37
  %v2925 = vand.u32 %v2798, 2147483648
  %v2926 = vor.u32 1.1754944e-38, %v2925
  %v2927 = vsel %vm2924, %v2926, %v2922
  %v2928 = vrcp.pop %v2799
  %v2929 = vmul.f32 %v2799, %v2928
  %v2930 = vsub.f32 1.0, %v2929
  %v2931 = vmul.f32 %v2928, %v2930
  %v2932 = vadd.f32 %v2928, %v2931
  %vm2933 = vweird.f32 %v2799
  %vm2934 = vweird.f32 %v2928
  %vm2935 = vmor %vm2933, %vm2934
  %v2936 = vsel %vm2935, %v2928, %v2932
  %v2937 = vand.u32 2147483647, %v2799
  %vm2938 = vcmp.eq.f32.partialorder %v2937, 8.507059e+37
  %v2939 = vand.u32 %v2799, 2147483648
  %v2940 = vor.u32 1.1754944e-38, %v2939
  %v2941 = vsel %vm2938, %v2940, %v2936
  %v2942 = vrcp.pop %v2800
  %v2943 = vmul.f32 %v2800, %v2942
  %v2944 = vsub.f32 1.0, %v2943
  %v2945 = vmul.f32 %v2942, %v2944
  %v2946 = vadd.f32 %v2942, %v2945
  %vm2947 = vweird.f32 %v2800
  %vm2948 = vweird.f32 %v2942
  %vm2949 = vmor %vm2947, %vm2948
  %v2950 = vsel %vm2949, %v2942, %v2946
  %v2951 = vand.u32 2147483647, %v2800
  %vm2952 = vcmp.eq.f32.partialorder %v2951, 8.507059e+37
  %v2953 = vand.u32 %v2800, 2147483648
  %v2954 = vor.u32 1.1754944e-38, %v2953
  %v2955 = vsel %vm2952, %v2954, %v2950
  %v2956 = vrcp.pop %v2801
  %v2957 = vmul.f32 %v2801, %v2956
  %v2958 = vsub.f32 1.0, %v2957
  %v2959 = vmul.f32 %v2956, %v2958
  %v2960 = vadd.f32 %v2956, %v2959
  %vm2961 = vweird.f32 %v2801
  %vm2962 = vweird.f32 %v2956
  %vm2963 = vmor %vm2961, %vm2962
  %v2964 = vsel %vm2963, %v2956, %v2960
  %v2965 = vand.u32 2147483647, %v2801
  %vm2966 = vcmp.eq.f32.partialorder %v2965, 8.507059e+37
  %v2967 = vand.u32 %v2801, 2147483648
  %v2968 = vor.u32 1.1754944e-38, %v2967
  %v2969 = vsel %vm2966, %v2968, %v2964
  %v2970 = vrcp.pop %v2802
  %v2971 = vmul.f32 %v2802, %v2970
  %v2972 = vsub.f32 1.0, %v2971
  %v2973 = vmul.f32 %v2970, %v2972
  %v2974 = vadd.f32 %v2970, %v2973
  %vm2975 = vweird.f32 %v2802
  %vm2976 = vweird.f32 %v2970
  %vm2977 = vmor %vm2975, %vm2976
  %v2978 = vsel %vm2977, %v2970, %v2974
  %v2979 = vand.u32 2147483647, %v2802
  %vm2980 = vcmp.eq.f32.partialorder %v2979, 8.507059e+37
  %v2981 = vand.u32 %v2802, 2147483648
  %v2982 = vor.u32 1.1754944e-38, %v2981
  %v2983 = vsel %vm2980, %v2982, %v2978
  %v2984 = vrcp.pop %v2803
  %v2985 = vmul.f32 %v2803, %v2984
  %v2986 = vsub.f32 1.0, %v2985
  %v2987 = vmul.f32 %v2984, %v2986
  %v2988 = vadd.f32 %v2984, %v2987
  %vm2989 = vweird.f32 %v2803
  %vm2990 = vweird.f32 %v2984
  %vm2991 = vmor %vm2989, %vm2990
  %v2992 = vsel %vm2991, %v2984, %v2988
  %v2993 = vand.u32 2147483647, %v2803
  %vm2994 = vcmp.eq.f32.partialorder %v2993, 8.507059e+37
  %v2995 = vand.u32 %v2803, 2147483648
  %v2996 = vor.u32 1.1754944e-38, %v2995
  %v2997 = vsel %vm2994, %v2996, %v2992
  %v2998 = vrcp.pop %v2804
  %v2999 = vmul.f32 %v2804, %v2998
  %v3000 = vsub.f32 1.0, %v2999
  %v3001 = vmul.f32 %v2998, %v3000
  %v3002 = vadd.f32 %v2998, %v3001
  %vm3003 = vweird.f32 %v2804
  %vm3004 = vweird.f32 %v2998
  %vm3005 = vmor %vm3003, %vm3004
  %v3006 = vsel %vm3005, %v2998, %v3002
  %v3007 = vand.u32 2147483647, %v2804
  %vm3008 = vcmp.eq.f32.partialorder %v3007, 8.507059e+37
  %v3009 = vand.u32 %v2804, 2147483648
  %v3010 = vor.u32 1.1754944e-38, %v3009
  %v3011 = vsel %vm3008, %v3010, %v3006
  %v3012 = vrcp.pop %v2805
  %v3013 = vmul.f32 %v2805, %v3012
  %v3014 = vsub.f32 1.0, %v3013
  %v3015 = vmul.f32 %v3012, %v3014
  %v3016 = vadd.f32 %v3012, %v3015
  %vm3017 = vweird.f32 %v2805
  %vm3018 = vweird.f32 %v3012
  %vm3019 = vmor %vm3017, %vm3018
  %v3020 = vsel %vm3019, %v3012, %v3016
  %v3021 = vand.u32 2147483647, %v2805
  %vm3022 = vcmp.eq.f32.partialorder %v3021, 8.507059e+37
  %v3023 = vand.u32 %v2805, 2147483648
  %v3024 = vor.u32 1.1754944e-38, %v3023
  %v3025 = vsel %vm3022, %v3024, %v3020
  %v3026 = vrcp.pop %v2806
  %v3027 = vmul.f32 %v2806, %v3026
  %v3028 = vsub.f32 1.0, %v3027
  %v3029 = vmul.f32 %v3026, %v3028
  %v3030 = vadd.f32 %v3026, %v3029
  %vm3031 = vweird.f32 %v2806
  %vm3032 = vweird.f32 %v3026
  %vm3033 = vmor %vm3031, %vm3032
  %v3034 = vsel %vm3033, %v3026, %v3030
  %v3035 = vand.u32 2147483647, %v2806
  %vm3036 = vcmp.eq.f32.partialorder %v3035, 8.507059e+37
  %v3037 = vand.u32 %v2806, 2147483648
  %v3038 = vor.u32 1.1754944e-38, %v3037
  %v3039 = vsel %vm3036, %v3038, %v3034
  %v3040 = vrcp.pop %v2807
  %v3041 = vmul.f32 %v2807, %v3040
  %v3042 = vsub.f32 1.0, %v3041
  %v3043 = vmul.f32 %v3040, %v3042
  %v3044 = vadd.f32 %v3040, %v3043
  %vm3045 = vweird.f32 %v2807
  %vm3046 = vweird.f32 %v3040
  %vm3047 = vmor %vm3045, %vm3046
  %v3048 = vsel %vm3047, %v3040, %v3044
  %v3049 = vand.u32 2147483647, %v2807
  %vm3050 = vcmp.eq.f32.partialorder %v3049, 8.507059e+37
  %v3051 = vand.u32 %v2807, 2147483648
  %v3052 = vor.u32 1.1754944e-38, %v3051
  %v3053 = vsel %vm3050, %v3052, %v3048
  %v3054 = vrcp.pop %v2808
  %v3055 = vmul.f32 %v2808, %v3054
  %v3056 = vsub.f32 1.0, %v3055
  %v3057 = vmul.f32 %v3054, %v3056
  %v3058 = vadd.f32 %v3054, %v3057
  %vm3059 = vweird.f32 %v2808
  %vm3060 = vweird.f32 %v3054
  %vm3061 = vmor %vm3059, %vm3060
  %v3062 = vsel %vm3061, %v3054, %v3058
  %v3063 = vand.u32 2147483647, %v2808
  %vm3064 = vcmp.eq.f32.partialorder %v3063, 8.507059e+37
  %v3065 = vand.u32 %v2808, 2147483648
  %v3066 = vor.u32 1.1754944e-38, %v3065
  %v3067 = vsel %vm3064, %v3066, %v3062
  %v3068 = vrcp.pop %v2809
  %v3069 = vmul.f32 %v2809, %v3068
  %v3070 = vsub.f32 1.0, %v3069
  %v3071 = vmul.f32 %v3068, %v3070
  %v3072 = vadd.f32 %v3068, %v3071
  %vm3073 = vweird.f32 %v2809
  %vm3074 = vweird.f32 %v3068
  %vm3075 = vmor %vm3073, %vm3074
  %v3076 = vsel %vm3075, %v3068, %v3072
  %v3077 = vand.u32 2147483647, %v2809
  %vm3078 = vcmp.eq.f32.partialorder %v3077, 8.507059e+37
  %v3079 = vand.u32 %v2809, 2147483648
  %v3080 = vor.u32 1.1754944e-38, %v3079
  %v3081 = vsel %vm3078, %v3080, %v3076
  %v3082 = vrcp.pop %v2810
  %v3083 = vmul.f32 %v2810, %v3082
  %v3084 = vsub.f32 1.0, %v3083
  %v3085 = vmul.f32 %v3082, %v3084
  %v3086 = vadd.f32 %v3082, %v3085
  %vm3087 = vweird.f32 %v2810
  %vm3088 = vweird.f32 %v3082
  %vm3089 = vmor %vm3087, %vm3088
  %v3090 = vsel %vm3089, %v3082, %v3086
  %v3091 = vand.u32 2147483647, %v2810
  %vm3092 = vcmp.eq.f32.partialorder %v3091, 8.507059e+37
  %v3093 = vand.u32 %v2810, 2147483648
  %v3094 = vor.u32 1.1754944e-38, %v3093
  %v3095 = vsel %vm3092, %v3094, %v3090
  %v3096 = vrcp.pop %v2811
  %v3097 = vmul.f32 %v2811, %v3096
  %v3098 = vsub.f32 1.0, %v3097
  %v3099 = vmul.f32 %v3096, %v3098
  %v3100 = vadd.f32 %v3096, %v3099
  %vm3101 = vweird.f32 %v2811
  %vm3102 = vweird.f32 %v3096
  %vm3103 = vmor %vm3101, %vm3102
  %v3104 = vsel %vm3103, %v3096, %v3100
  %v3105 = vand.u32 2147483647, %v2811
  %vm3106 = vcmp.eq.f32.partialorder %v3105, 8.507059e+37
  %v3107 = vand.u32 %v2811, 2147483648
  %v3108 = vor.u32 1.1754944e-38, %v3107
  %v3109 = vsel %vm3106, %v3108, %v3104
  %v3110 = vrcp.pop %v2812
  %v3111 = vmul.f32 %v2812, %v3110
  %v3112 = vsub.f32 1.0, %v3111
  %v3113 = vmul.f32 %v3110, %v3112
  %v3114 = vadd.f32 %v3110, %v3113
  %vm3115 = vweird.f32 %v2812
  %vm3116 = vweird.f32 %v3110
  %vm3117 = vmor %vm3115, %vm3116
  %v3118 = vsel %vm3117, %v3110, %v3114
  %v3119 = vand.u32 2147483647, %v2812
  %vm3120 = vcmp.eq.f32.partialorder %v3119, 8.507059e+37
  %v3121 = vand.u32 %v2812, 2147483648
  %v3122 = vor.u32 1.1754944e-38, %v3121
  %v3123 = vsel %vm3120, %v3122, %v3118
  %v3124 = vrcp.pop %v2813
  %v3125 = vmul.f32 %v2813, %v3124
  %v3126 = vsub.f32 1.0, %v3125
  %v3127 = vmul.f32 %v3124, %v3126
  %v3128 = vadd.f32 %v3124, %v3127
  %vm3129 = vweird.f32 %v2813
  %vm3130 = vweird.f32 %v3124
  %vm3131 = vmor %vm3129, %vm3130
  %v3132 = vsel %vm3131, %v3124, %v3128
  %v3133 = vand.u32 2147483647, %v2813
  %vm3134 = vcmp.eq.f32.partialorder %v3133, 8.507059e+37
  %v3135 = vand.u32 %v2813, 2147483648
  %v3136 = vor.u32 1.1754944e-38, %v3135
  %v3137 = vsel %vm3134, %v3136, %v3132
  %v3138 = vrcp.pop %v2814
  %v3139 = vmul.f32 %v2814, %v3138
  %v3140 = vsub.f32 1.0, %v3139
  %v3141 = vmul.f32 %v3138, %v3140
  %v3142 = vadd.f32 %v3138, %v3141
  %vm3143 = vweird.f32 %v2814
  %vm3144 = vweird.f32 %v3138
  %vm3145 = vmor %vm3143, %vm3144
  %v3146 = vsel %vm3145, %v3138, %v3142
  %v3147 = vand.u32 2147483647, %v2814
  %vm3148 = vcmp.eq.f32.partialorder %v3147, 8.507059e+37
  %v3149 = vand.u32 %v2814, 2147483648
  %v3150 = vor.u32 1.1754944e-38, %v3149
  %v3151 = vsel %vm3148, %v3150, %v3146
  %v3152 = vrcp.pop %v2815
  %v3153 = vmul.f32 %v2815, %v3152
  %v3154 = vsub.f32 1.0, %v3153
  %v3155 = vmul.f32 %v3152, %v3154
  %v3156 = vadd.f32 %v3152, %v3155
  %vm3157 = vweird.f32 %v2815
  %vm3158 = vweird.f32 %v3152
  %vm3159 = vmor %vm3157, %vm3158
  %v3160 = vsel %vm3159, %v3152, %v3156
  %v3161 = vand.u32 2147483647, %v2815
  %vm3162 = vcmp.eq.f32.partialorder %v3161, 8.507059e+37
  %v3163 = vand.u32 %v2815, 2147483648
  %v3164 = vor.u32 1.1754944e-38, %v3163
  %v3165 = vsel %vm3162, %v3164, %v3160
  %v3166 = vrcp.pop %v2816
  %v3167 = vmul.f32 %v2816, %v3166
  %v3168 = vsub.f32 1.0, %v3167
  %v3169 = vmul.f32 %v3166, %v3168
  %v3170 = vadd.f32 %v3166, %v3169
  %vm3171 = vweird.f32 %v2816
  %vm3172 = vweird.f32 %v3166
  %vm3173 = vmor %vm3171, %vm3172
  %v3174 = vsel %vm3173, %v3166, %v3170
  %v3175 = vand.u32 2147483647, %v2816
  %vm3176 = vcmp.eq.f32.partialorder %v3175, 8.507059e+37
  %v3177 = vand.u32 %v2816, 2147483648
  %v3178 = vor.u32 1.1754944e-38, %v3177
  %v3179 = vsel %vm3176, %v3178, %v3174
  %v3180 = vrcp.pop %v2817
  %v3181 = vmul.f32 %v2817, %v3180
  %v3182 = vsub.f32 1.0, %v3181
  %v3183 = vmul.f32 %v3180, %v3182
  %v3184 = vadd.f32 %v3180, %v3183
  %vm3185 = vweird.f32 %v2817
  %vm3186 = vweird.f32 %v3180
  %vm3187 = vmor %vm3185, %vm3186
  %v3188 = vsel %vm3187, %v3180, %v3184
  %v3189 = vand.u32 2147483647, %v2817
  %vm3190 = vcmp.eq.f32.partialorder %v3189, 8.507059e+37
  %v3191 = vand.u32 %v2817, 2147483648
  %v3192 = vor.u32 1.1754944e-38, %v3191
  %v3193 = vsel %vm3190, %v3192, %v3188
  %v3194 = vrcp.pop %v2818
  %v3195 = vmul.f32 %v2818, %v3194
  %v3196 = vsub.f32 1.0, %v3195
  %v3197 = vmul.f32 %v3194, %v3196
  %v3198 = vadd.f32 %v3194, %v3197
  %vm3199 = vweird.f32 %v2818
  %vm3200 = vweird.f32 %v3194
  %vm3201 = vmor %vm3199, %vm3200
  %v3202 = vsel %vm3201, %v3194, %v3198
  %v3203 = vand.u32 2147483647, %v2818
  %vm3204 = vcmp.eq.f32.partialorder %v3203, 8.507059e+37
  %v3205 = vand.u32 %v2818, 2147483648
  %v3206 = vor.u32 1.1754944e-38, %v3205
  %v3207 = vsel %vm3204, %v3206, %v3202
  %v3208 = vrcp.pop %v2819
  %v3209 = vmul.f32 %v2819, %v3208
  %v3210 = vsub.f32 1.0, %v3209
  %v3211 = vmul.f32 %v3208, %v3210
  %v3212 = vadd.f32 %v3208, %v3211
  %vm3213 = vweird.f32 %v2819
  %vm3214 = vweird.f32 %v3208
  %vm3215 = vmor %vm3213, %vm3214
  %v3216 = vsel %vm3215, %v3208, %v3212
  %v3217 = vand.u32 2147483647, %v2819
  %vm3218 = vcmp.eq.f32.partialorder %v3217, 8.507059e+37
  %v3219 = vand.u32 %v2819, 2147483648
  %v3220 = vor.u32 1.1754944e-38, %v3219
  %v3221 = vsel %vm3218, %v3220, %v3216
  %v3222 = vrcp.pop %v2820
  %v3223 = vmul.f32 %v2820, %v3222
  %v3224 = vsub.f32 1.0, %v3223
  %v3225 = vmul.f32 %v3222, %v3224
  %v3226 = vadd.f32 %v3222, %v3225
  %vm3227 = vweird.f32 %v2820
  %vm3228 = vweird.f32 %v3222
  %vm3229 = vmor %vm3227, %vm3228
  %v3230 = vsel %vm3229, %v3222, %v3226
  %v3231 = vand.u32 2147483647, %v2820
  %vm3232 = vcmp.eq.f32.partialorder %v3231, 8.507059e+37
  %v3233 = vand.u32 %v2820, 2147483648
  %v3234 = vor.u32 1.1754944e-38, %v3233
  %v3235 = vsel %vm3232, %v3234, %v3230
  %v3236 = vrcp.pop %v2821
  %v3237 = vmul.f32 %v2821, %v3236
  %v3238 = vsub.f32 1.0, %v3237
  %v3239 = vmul.f32 %v3236, %v3238
  %v3240 = vadd.f32 %v3236, %v3239
  %vm3241 = vweird.f32 %v2821
  %vm3242 = vweird.f32 %v3236
  %vm3243 = vmor %vm3241, %vm3242
  %v3244 = vsel %vm3243, %v3236, %v3240
  %v3245 = vand.u32 2147483647, %v2821
  %vm3246 = vcmp.eq.f32.partialorder %v3245, 8.507059e+37
  %v3247 = vand.u32 %v2821, 2147483648
  %v3248 = vor.u32 1.1754944e-38, %v3247
  %v3249 = vsel %vm3246, %v3248, %v3244
  %v3250 = vrcp.pop %v2822
  %v3251 = vmul.f32 %v2822, %v3250
  %v3252 = vsub.f32 1.0, %v3251
  %v3253 = vmul.f32 %v3250, %v3252
  %v3254 = vadd.f32 %v3250, %v3253
  %vm3255 = vweird.f32 %v2822
  %vm3256 = vweird.f32 %v3250
  %vm3257 = vmor %vm3255, %vm3256
  %v3258 = vsel %vm3257, %v3250, %v3254
  %v3259 = vand.u32 2147483647, %v2822
  %vm3260 = vcmp.eq.f32.partialorder %v3259, 8.507059e+37
  %v3261 = vand.u32 %v2822, 2147483648
  %v3262 = vor.u32 1.1754944e-38, %v3261
  %v3263 = vsel %vm3260, %v3262, %v3258
  %v3264 = vrcp.pop %v2823
  %v3265 = vmul.f32 %v2823, %v3264
  %v3266 = vsub.f32 1.0, %v3265
  %v3267 = vmul.f32 %v3264, %v3266
  %v3268 = vadd.f32 %v3264, %v3267
  %vm3269 = vweird.f32 %v2823
  %vm3270 = vweird.f32 %v3264
  %vm3271 = vmor %vm3269, %vm3270
  %v3272 = vsel %vm3271, %v3264, %v3268
  %v3273 = vand.u32 2147483647, %v2823
  %vm3274 = vcmp.eq.f32.partialorder %v3273, 8.507059e+37
  %v3275 = vand.u32 %v2823, 2147483648
  %v3276 = vor.u32 1.1754944e-38, %v3275
  %v3277 = vsel %vm3274, %v3276, %v3272
  %v3278 = vrcp.pop %v2824
  %v3279 = vmul.f32 %v2824, %v3278
  %v3280 = vsub.f32 1.0, %v3279
  %v3281 = vmul.f32 %v3278, %v3280
  %v3282 = vadd.f32 %v3278, %v3281
  %vm3283 = vweird.f32 %v2824
  %vm3284 = vweird.f32 %v3278
  %vm3285 = vmor %vm3283, %vm3284
  %v3286 = vsel %vm3285, %v3278, %v3282
  %v3287 = vand.u32 2147483647, %v2824
  %vm3288 = vcmp.eq.f32.partialorder %v3287, 8.507059e+37
  %v3289 = vand.u32 %v2824, 2147483648
  %v3290 = vor.u32 1.1754944e-38, %v3289
  %v3291 = vsel %vm3288, %v3290, %v3286
  %v3292 = vrcp.pop %v2825
  %v3293 = vmul.f32 %v2825, %v3292
  %v3294 = vsub.f32 1.0, %v3293
  %v3295 = vmul.f32 %v3292, %v3294
  %v3296 = vadd.f32 %v3292, %v3295
  %vm3297 = vweird.f32 %v2825
  %vm3298 = vweird.f32 %v3292
  %vm3299 = vmor %vm3297, %vm3298
  %v3300 = vsel %vm3299, %v3292, %v3296
  %v3301 = vand.u32 2147483647, %v2825
  %vm3302 = vcmp.eq.f32.partialorder %v3301, 8.507059e+37
  %v3303 = vand.u32 %v2825, 2147483648
  %v3304 = vor.u32 1.1754944e-38, %v3303
  %v3305 = vsel %vm3302, %v3304, %v3300
  %v3306 = vrcp.pop %v2826
  %v3307 = vmul.f32 %v2826, %v3306
  %v3308 = vsub.f32 1.0, %v3307
  %v3309 = vmul.f32 %v3306, %v3308
  %v3310 = vadd.f32 %v3306, %v3309
  %vm3311 = vweird.f32 %v2826
  %vm3312 = vweird.f32 %v3306
  %vm3313 = vmor %vm3311, %vm3312
  %v3314 = vsel %vm3313, %v3306, %v3310
  %v3315 = vand.u32 2147483647, %v2826
  %vm3316 = vcmp.eq.f32.partialorder %v3315, 8.507059e+37
  %v3317 = vand.u32 %v2826, 2147483648
  %v3318 = vor.u32 1.1754944e-38, %v3317
  %v3319 = vsel %vm3316, %v3318, %v3314
  %v3320 = vrcp.pop %v2827
  %v3321 = vmul.f32 %v2827, %v3320
  %v3322 = vsub.f32 1.0, %v3321
  %v3323 = vmul.f32 %v3320, %v3322
  %v3324 = vadd.f32 %v3320, %v3323
  %vm3325 = vweird.f32 %v2827
  %vm3326 = vweird.f32 %v3320
  %vm3327 = vmor %vm3325, %vm3326
  %v3328 = vsel %vm3327, %v3320, %v3324
  %v3329 = vand.u32 2147483647, %v2827
  %vm3330 = vcmp.eq.f32.partialorder %v3329, 8.507059e+37
  %v3331 = vand.u32 %v2827, 2147483648
  %v3332 = vor.u32 1.1754944e-38, %v3331
  %v3333 = vsel %vm3330, %v3332, %v3328
  %v3334 = vrcp.pop %v2828
  %v3335 = vmul.f32 %v2828, %v3334
  %v3336 = vsub.f32 1.0, %v3335
  %v3337 = vmul.f32 %v3334, %v3336
  %v3338 = vadd.f32 %v3334, %v3337
  %vm3339 = vweird.f32 %v2828
  %vm3340 = vweird.f32 %v3334
  %vm3341 = vmor %vm3339, %vm3340
  %v3342 = vsel %vm3341, %v3334, %v3338
  %v3343 = vand.u32 2147483647, %v2828
  %vm3344 = vcmp.eq.f32.partialorder %v3343, 8.507059e+37
  %v3345 = vand.u32 %v2828, 2147483648
  %v3346 = vor.u32 1.1754944e-38, %v3345
  %v3347 = vsel %vm3344, %v3346, %v3342
  %v3348 = vrcp.pop %v2829
  %v3349 = vmul.f32 %v2829, %v3348
  %v3350 = vsub.f32 1.0, %v3349
  %v3351 = vmul.f32 %v3348, %v3350
  %v3352 = vadd.f32 %v3348, %v3351
  %vm3353 = vweird.f32 %v2829
  %vm3354 = vweird.f32 %v3348
  %vm3355 = vmor %vm3353, %vm3354
  %v3356 = vsel %vm3355, %v3348, %v3352
  %v3357 = vand.u32 2147483647, %v2829
  %vm3358 = vcmp.eq.f32.partialorder %v3357, 8.507059e+37
  %v3359 = vand.u32 %v2829, 2147483648
  %v3360 = vor.u32 1.1754944e-38, %v3359
  %v3361 = vsel %vm3358, %v3360, %v3356
  %v3362 = vrcp.pop %v2830
  %v3363 = vmul.f32 %v2830, %v3362
  %v3364 = vsub.f32 1.0, %v3363
  %v3365 = vmul.f32 %v3362, %v3364
  %v3366 = vadd.f32 %v3362, %v3365
  %vm3367 = vweird.f32 %v2830
  %vm3368 = vweird.f32 %v3362
  %vm3369 = vmor %vm3367, %vm3368
  %v3370 = vsel %vm3369, %v3362, %v3366
  %v3371 = vand.u32 2147483647, %v2830
  %vm3372 = vcmp.eq.f32.partialorder %v3371, 8.507059e+37
  %v3373 = vand.u32 %v2830, 2147483648
  %v3374 = vor.u32 1.1754944e-38, %v3373
  %v3375 = vsel %vm3372, %v3374, %v3370
  %v3376 = vrcp.pop %v2831
  %v3377 = vmul.f32 %v2831, %v3376
  %v3378 = vsub.f32 1.0, %v3377
  %v3379 = vmul.f32 %v3376, %v3378
  %v3380 = vadd.f32 %v3376, %v3379
  %vm3381 = vweird.f32 %v2831
  %vm3382 = vweird.f32 %v3376
  %vm3383 = vmor %vm3381, %vm3382
  %v3384 = vsel %vm3383, %v3376, %v3380
  %v3385 = vand.u32 2147483647, %v2831
  %vm3386 = vcmp.eq.f32.partialorder %v3385, 8.507059e+37
  %v3387 = vand.u32 %v2831, 2147483648
  %v3388 = vor.u32 1.1754944e-38, %v3387
  %v3389 = vsel %vm3386, %v3388, %v3384
  %v3390 = vrcp.pop %v2832
  %v3391 = vmul.f32 %v2832, %v3390
  %v3392 = vsub.f32 1.0, %v3391
  %v3393 = vmul.f32 %v3390, %v3392
  %v3394 = vadd.f32 %v3390, %v3393
  %vm3395 = vweird.f32 %v2832
  %vm3396 = vweird.f32 %v3390
  %vm3397 = vmor %vm3395, %vm3396
  %v3398 = vsel %vm3397, %v3390, %v3394
  %v3399 = vand.u32 2147483647, %v2832
  %vm3400 = vcmp.eq.f32.partialorder %v3399, 8.507059e+37
  %v3401 = vand.u32 %v2832, 2147483648
  %v3402 = vor.u32 1.1754944e-38, %v3401
  %v3403 = vsel %vm3400, %v3402, %v3398
  %v3404 = vrcp.pop %v2833
  %v3405 = vmul.f32 %v2833, %v3404
  %v3406 = vsub.f32 1.0, %v3405
  %v3407 = vmul.f32 %v3404, %v3406
  %v3408 = vadd.f32 %v3404, %v3407
  %vm3409 = vweird.f32 %v2833
  %vm3410 = vweird.f32 %v3404
  %vm3411 = vmor %vm3409, %vm3410
  %v3412 = vsel %vm3411, %v3404, %v3408
  %v3413 = vand.u32 2147483647, %v2833
  %vm3414 = vcmp.eq.f32.partialorder %v3413, 8.507059e+37
  %v3415 = vand.u32 %v2833, 2147483648
  %v3416 = vor.u32 1.1754944e-38, %v3415
  %v3417 = vsel %vm3414, %v3416, %v3412
  %v3418 = vrcp.pop %v2834
  %v3419 = vmul.f32 %v2834, %v3418
  %v3420 = vsub.f32 1.0, %v3419
  %v3421 = vmul.f32 %v3418, %v3420
  %v3422 = vadd.f32 %v3418, %v3421
  %vm3423 = vweird.f32 %v2834
  %vm3424 = vweird.f32 %v3418
  %vm3425 = vmor %vm3423, %vm3424
  %v3426 = vsel %vm3425, %v3418, %v3422
  %v3427 = vand.u32 2147483647, %v2834
  %vm3428 = vcmp.eq.f32.partialorder %v3427, 8.507059e+37
  %v3429 = vand.u32 %v2834, 2147483648
  %v3430 = vor.u32 1.1754944e-38, %v3429
  %v3431 = vsel %vm3428, %v3430, %v3426
  %v3432 = vrcp.pop %v2835
  %v3433 = vmul.f32 %v2835, %v3432
  %v3434 = vsub.f32 1.0, %v3433
  %v3435 = vmul.f32 %v3432, %v3434
  %v3436 = vadd.f32 %v3432, %v3435
  %vm3437 = vweird.f32 %v2835
  %vm3438 = vweird.f32 %v3432
  %vm3439 = vmor %vm3437, %vm3438
  %v3440 = vsel %vm3439, %v3432, %v3436
  %v3441 = vand.u32 2147483647, %v2835
  %vm3442 = vcmp.eq.f32.partialorder %v3441, 8.507059e+37
  %v3443 = vand.u32 %v2835, 2147483648
  %v3444 = vor.u32 1.1754944e-38, %v3443
  %v3445 = vsel %vm3442, %v3444, %v3440
  %v3446 = vrcp.pop %v2836
  %v3447 = vmul.f32 %v2836, %v3446
  %v3448 = vsub.f32 1.0, %v3447
  %v3449 = vmul.f32 %v3446, %v3448
  %v3450 = vadd.f32 %v3446, %v3449
  %vm3451 = vweird.f32 %v2836
  %vm3452 = vweird.f32 %v3446
  %vm3453 = vmor %vm3451, %vm3452
  %v3454 = vsel %vm3453, %v3446, %v3450
  %v3455 = vand.u32 2147483647, %v2836
  %vm3456 = vcmp.eq.f32.partialorder %v3455, 8.507059e+37
  %v3457 = vand.u32 %v2836, 2147483648
  %v3458 = vor.u32 1.1754944e-38, %v3457
  %v3459 = vsel %vm3456, %v3458, %v3454
  %v3460 = vrcp.pop %v2837
  %v3461 = vmul.f32 %v2837, %v3460
  %v3462 = vsub.f32 1.0, %v3461
  %v3463 = vmul.f32 %v3460, %v3462
  %v3464 = vadd.f32 %v3460, %v3463
  %vm3465 = vweird.f32 %v2837
  %vm3466 = vweird.f32 %v3460
  %vm3467 = vmor %vm3465, %vm3466
  %v3468 = vsel %vm3467, %v3460, %v3464
  %v3469 = vand.u32 2147483647, %v2837
  %vm3470 = vcmp.eq.f32.partialorder %v3469, 8.507059e+37
  %v3471 = vand.u32 %v2837, 2147483648
  %v3472 = vor.u32 1.1754944e-38, %v3471
  %v3473 = vsel %vm3470, %v3472, %v3468
  %v3474 = vrcp.pop %v2838
  %v3475 = vmul.f32 %v2838, %v3474
  %v3476 = vsub.f32 1.0, %v3475
  %v3477 = vmul.f32 %v3474, %v3476
  %v3478 = vadd.f32 %v3474, %v3477
  %vm3479 = vweird.f32 %v2838
  %vm3480 = vweird.f32 %v3474
  %vm3481 = vmor %vm3479, %vm3480
  %v3482 = vsel %vm3481, %v3474, %v3478
  %v3483 = vand.u32 2147483647, %v2838
  %vm3484 = vcmp.eq.f32.partialorder %v3483, 8.507059e+37
  %v3485 = vand.u32 %v2838, 2147483648
  %v3486 = vor.u32 1.1754944e-38, %v3485
  %v3487 = vsel %vm3484, %v3486, %v3482
  %v3488 = vrcp.pop %v2839
  %v3489 = vmul.f32 %v2839, %v3488
  %v3490 = vsub.f32 1.0, %v3489
  %v3491 = vmul.f32 %v3488, %v3490
  %v3492 = vadd.f32 %v3488, %v3491
  %vm3493 = vweird.f32 %v2839
  %vm3494 = vweird.f32 %v3488
  %vm3495 = vmor %vm3493, %vm3494
  %v3496 = vsel %vm3495, %v3488, %v3492
  %v3497 = vand.u32 2147483647, %v2839
  %vm3498 = vcmp.eq.f32.partialorder %v3497, 8.507059e+37
  %v3499 = vand.u32 %v2839, 2147483648
  %v3500 = vor.u32 1.1754944e-38, %v3499
  %v3501 = vsel %vm3498, %v3500, %v3496
  %v3502 = vrcp.pop %v2840
  %v3503 = vmul.f32 %v2840, %v3502
  %v3504 = vsub.f32 1.0, %v3503
  %v3505 = vmul.f32 %v3502, %v3504
  %v3506 = vadd.f32 %v3502, %v3505
  %vm3507 = vweird.f32 %v2840
  %vm3508 = vweird.f32 %v3502
  %vm3509 = vmor %vm3507, %vm3508
  %v3510 = vsel %vm3509, %v3502, %v3506
  %v3511 = vand.u32 2147483647, %v2840
  %vm3512 = vcmp.eq.f32.partialorder %v3511, 8.507059e+37
  %v3513 = vand.u32 %v2840, 2147483648
  %v3514 = vor.u32 1.1754944e-38, %v3513
  %v3515 = vsel %vm3512, %v3514, %v3510
  %v3516 = vrcp.pop %v2841
  %v3517 = vmul.f32 %v2841, %v3516
  %v3518 = vsub.f32 1.0, %v3517
  %v3519 = vmul.f32 %v3516, %v3518
  %v3520 = vadd.f32 %v3516, %v3519
  %vm3521 = vweird.f32 %v2841
  %vm3522 = vweird.f32 %v3516
  %vm3523 = vmor %vm3521, %vm3522
  %v3524 = vsel %vm3523, %v3516, %v3520
  %v3525 = vand.u32 2147483647, %v2841
  %vm3526 = vcmp.eq.f32.partialorder %v3525, 8.507059e+37
  %v3527 = vand.u32 %v2841, 2147483648
  %v3528 = vor.u32 1.1754944e-38, %v3527
  %v3529 = vsel %vm3526, %v3528, %v3524
  %v3530 = vrcp.pop %v2842
  %v3531 = vmul.f32 %v2842, %v3530
  %v3532 = vsub.f32 1.0, %v3531
  %v3533 = vmul.f32 %v3530, %v3532
  %v3534 = vadd.f32 %v3530, %v3533
  %vm3535 = vweird.f32 %v2842
  %vm3536 = vweird.f32 %v3530
  %vm3537 = vmor %vm3535, %vm3536
  %v3538 = vsel %vm3537, %v3530, %v3534
  %v3539 = vand.u32 2147483647, %v2842
  %vm3540 = vcmp.eq.f32.partialorder %v3539, 8.507059e+37
  %v3541 = vand.u32 %v2842, 2147483648
  %v3542 = vor.u32 1.1754944e-38, %v3541
  %v3543 = vsel %vm3540, %v3542, %v3538
  %v3544 = vrcp.pop %v2843
  %v3545 = vmul.f32 %v2843, %v3544
  %v3546 = vsub.f32 1.0, %v3545
  %v3547 = vmul.f32 %v3544, %v3546
  %v3548 = vadd.f32 %v3544, %v3547
  %vm3549 = vweird.f32 %v2843
  %vm3550 = vweird.f32 %v3544
  %vm3551 = vmor %vm3549, %vm3550
  %v3552 = vsel %vm3551, %v3544, %v3548
  %v3553 = vand.u32 2147483647, %v2843
  %vm3554 = vcmp.eq.f32.partialorder %v3553, 8.507059e+37
  %v3555 = vand.u32 %v2843, 2147483648
  %v3556 = vor.u32 1.1754944e-38, %v3555
  %v3557 = vsel %vm3554, %v3556, %v3552
  %v3558 = vrcp.pop %v2844
  %v3559 = vmul.f32 %v2844, %v3558
  %v3560 = vsub.f32 1.0, %v3559
  %v3561 = vmul.f32 %v3558, %v3560
  %v3562 = vadd.f32 %v3558, %v3561
  %vm3563 = vweird.f32 %v2844
  %vm3564 = vweird.f32 %v3558
  %vm3565 = vmor %vm3563, %vm3564
  %v3566 = vsel %vm3565, %v3558, %v3562
  %v3567 = vand.u32 2147483647, %v2844
  %vm3568 = vcmp.eq.f32.partialorder %v3567, 8.507059e+37
  %v3569 = vand.u32 %v2844, 2147483648
  %v3570 = vor.u32 1.1754944e-38, %v3569
  %v3571 = vsel %vm3568, %v3570, %v3566
  %v3572 = vrcp.pop %v2845
  %v3573 = vmul.f32 %v2845, %v3572
  %v3574 = vsub.f32 1.0, %v3573
  %v3575 = vmul.f32 %v3572, %v3574
  %v3576 = vadd.f32 %v3572, %v3575
  %vm3577 = vweird.f32 %v2845
  %vm3578 = vweird.f32 %v3572
  %vm3579 = vmor %vm3577, %vm3578
  %v3580 = vsel %vm3579, %v3572, %v3576
  %v3581 = vand.u32 2147483647, %v2845
  %vm3582 = vcmp.eq.f32.partialorder %v3581, 8.507059e+37
  %v3583 = vand.u32 %v2845, 2147483648
  %v3584 = vor.u32 1.1754944e-38, %v3583
  %v3585 = vsel %vm3582, %v3584, %v3580
  %v3586 = vrcp.pop %v2846
  %v3587 = vmul.f32 %v2846, %v3586
  %v3588 = vsub.f32 1.0, %v3587
  %v3589 = vmul.f32 %v3586, %v3588
  %v3590 = vadd.f32 %v3586, %v3589
  %vm3591 = vweird.f32 %v2846
  %vm3592 = vweird.f32 %v3586
  %vm3593 = vmor %vm3591, %vm3592
  %v3594 = vsel %vm3593, %v3586, %v3590
  %v3595 = vand.u32 2147483647, %v2846
  %vm3596 = vcmp.eq.f32.partialorder %v3595, 8.507059e+37
  %v3597 = vand.u32 %v2846, 2147483648
  %v3598 = vor.u32 1.1754944e-38, %v3597
  %v3599 = vsel %vm3596, %v3598, %v3594
  %v3600 = vrcp.pop %v2847
  %v3601 = vmul.f32 %v2847, %v3600
  %v3602 = vsub.f32 1.0, %v3601
  %v3603 = vmul.f32 %v3600, %v3602
  %v3604 = vadd.f32 %v3600, %v3603
  %vm3605 = vweird.f32 %v2847
  %vm3606 = vweird.f32 %v3600
  %vm3607 = vmor %vm3605, %vm3606
  %v3608 = vsel %vm3607, %v3600, %v3604
  %v3609 = vand.u32 2147483647, %v2847
  %vm3610 = vcmp.eq.f32.partialorder %v3609, 8.507059e+37
  %v3611 = vand.u32 %v2847, 2147483648
  %v3612 = vor.u32 1.1754944e-38, %v3611
  %v3613 = vsel %vm3610, %v3612, %v3608
  %v3614 = vrcp.pop %v2848
  %v3615 = vmul.f32 %v2848, %v3614
  %v3616 = vsub.f32 1.0, %v3615
  %v3617 = vmul.f32 %v3614, %v3616
  %v3618 = vadd.f32 %v3614, %v3617
  %vm3619 = vweird.f32 %v2848
  %vm3620 = vweird.f32 %v3614
  %vm3621 = vmor %vm3619, %vm3620
  %v3622 = vsel %vm3621, %v3614, %v3618
  %v3623 = vand.u32 2147483647, %v2848
  %vm3624 = vcmp.eq.f32.partialorder %v3623, 8.507059e+37
  %v3625 = vand.u32 %v2848, 2147483648
  %v3626 = vor.u32 1.1754944e-38, %v3625
  %v3627 = vsel %vm3624, %v3626, %v3622
  %v3628 = vrcp.pop %v2849
  %v3629 = vmul.f32 %v2849, %v3628
  %v3630 = vsub.f32 1.0, %v3629
  %v3631 = vmul.f32 %v3628, %v3630
  %v3632 = vadd.f32 %v3628, %v3631
  %vm3633 = vweird.f32 %v2849
  %vm3634 = vweird.f32 %v3628
  %vm3635 = vmor %vm3633, %vm3634
  %v3636 = vsel %vm3635, %v3628, %v3632
  %v3637 = vand.u32 2147483647, %v2849
  %vm3638 = vcmp.eq.f32.partialorder %v3637, 8.507059e+37
  %v3639 = vand.u32 %v2849, 2147483648
  %v3640 = vor.u32 1.1754944e-38, %v3639
  %v3641 = vsel %vm3638, %v3640, %v3636
  %v3642 = vrcp.pop %v2850
  %v3643 = vmul.f32 %v2850, %v3642
  %v3644 = vsub.f32 1.0, %v3643
  %v3645 = vmul.f32 %v3642, %v3644
  %v3646 = vadd.f32 %v3642, %v3645
  %vm3647 = vweird.f32 %v2850
  %vm3648 = vweird.f32 %v3642
  %vm3649 = vmor %vm3647, %vm3648
  %v3650 = vsel %vm3649, %v3642, %v3646
  %v3651 = vand.u32 2147483647, %v2850
  %vm3652 = vcmp.eq.f32.partialorder %v3651, 8.507059e+37
  %v3653 = vand.u32 %v2850, 2147483648
  %v3654 = vor.u32 1.1754944e-38, %v3653
  %v3655 = vsel %vm3652, %v3654, %v3650
  %v3656 = vrcp.pop %v2851
  %v3657 = vmul.f32 %v2851, %v3656
  %v3658 = vsub.f32 1.0, %v3657
  %v3659 = vmul.f32 %v3656, %v3658
  %v3660 = vadd.f32 %v3656, %v3659
  %vm3661 = vweird.f32 %v2851
  %vm3662 = vweird.f32 %v3656
  %vm3663 = vmor %vm3661, %vm3662
  %v3664 = vsel %vm3663, %v3656, %v3660
  %v3665 = vand.u32 2147483647, %v2851
  %vm3666 = vcmp.eq.f32.partialorder %v3665, 8.507059e+37
  %v3667 = vand.u32 %v2851, 2147483648
  %v3668 = vor.u32 1.1754944e-38, %v3667
  %v3669 = vsel %vm3666, %v3668, %v3664
  %v3670 = vrcp.pop %v2852
  %v3671 = vmul.f32 %v2852, %v3670
  %v3672 = vsub.f32 1.0, %v3671
  %v3673 = vmul.f32 %v3670, %v3672
  %v3674 = vadd.f32 %v3670, %v3673
  %vm3675 = vweird.f32 %v2852
  %vm3676 = vweird.f32 %v3670
  %vm3677 = vmor %vm3675, %vm3676
  %v3678 = vsel %vm3677, %v3670, %v3674
  %v3679 = vand.u32 2147483647, %v2852
  %vm3680 = vcmp.eq.f32.partialorder %v3679, 8.507059e+37
  %v3681 = vand.u32 %v2852, 2147483648
  %v3682 = vor.u32 1.1754944e-38, %v3681
  %v3683 = vsel %vm3680, %v3682, %v3678
  %v3684 = vrcp.pop %v2853
  %v3685 = vmul.f32 %v2853, %v3684
  %v3686 = vsub.f32 1.0, %v3685
  %v3687 = vmul.f32 %v3684, %v3686
  %v3688 = vadd.f32 %v3684, %v3687
  %vm3689 = vweird.f32 %v2853
  %vm3690 = vweird.f32 %v3684
  %vm3691 = vmor %vm3689, %vm3690
  %v3692 = vsel %vm3691, %v3684, %v3688
  %v3693 = vand.u32 2147483647, %v2853
  %vm3694 = vcmp.eq.f32.partialorder %v3693, 8.507059e+37
  %v3695 = vand.u32 %v2853, 2147483648
  %v3696 = vor.u32 1.1754944e-38, %v3695
  %v3697 = vsel %vm3694, %v3696, %v3692
  %v3698 = vrcp.pop %v2854
  %v3699 = vmul.f32 %v2854, %v3698
  %v3700 = vsub.f32 1.0, %v3699
  %v3701 = vmul.f32 %v3698, %v3700
  %v3702 = vadd.f32 %v3698, %v3701
  %vm3703 = vweird.f32 %v2854
  %vm3704 = vweird.f32 %v3698
  %vm3705 = vmor %vm3703, %vm3704
  %v3706 = vsel %vm3705, %v3698, %v3702
  %v3707 = vand.u32 2147483647, %v2854
  %vm3708 = vcmp.eq.f32.partialorder %v3707, 8.507059e+37
  %v3709 = vand.u32 %v2854, 2147483648
  %v3710 = vor.u32 1.1754944e-38, %v3709
  %v3711 = vsel %vm3708, %v3710, %v3706
  %v3712 = vrcp.pop %v2855
  %v3713 = vmul.f32 %v2855, %v3712
  %v3714 = vsub.f32 1.0, %v3713
  %v3715 = vmul.f32 %v3712, %v3714
  %v3716 = vadd.f32 %v3712, %v3715
  %vm3717 = vweird.f32 %v2855
  %vm3718 = vweird.f32 %v3712
  %vm3719 = vmor %vm3717, %vm3718
  %v3720 = vsel %vm3719, %v3712, %v3716
  %v3721 = vand.u32 2147483647, %v2855
  %vm3722 = vcmp.eq.f32.partialorder %v3721, 8.507059e+37
  %v3723 = vand.u32 %v2855, 2147483648
  %v3724 = vor.u32 1.1754944e-38, %v3723
  %v3725 = vsel %vm3722, %v3724, %v3720
  %v3726 = vrcp.pop %v2856
  %v3727 = vmul.f32 %v2856, %v3726
  %v3728 = vsub.f32 1.0, %v3727
  %v3729 = vmul.f32 %v3726, %v3728
  %v3730 = vadd.f32 %v3726, %v3729
  %vm3731 = vweird.f32 %v2856
  %vm3732 = vweird.f32 %v3726
  %vm3733 = vmor %vm3731, %vm3732
  %v3734 = vsel %vm3733, %v3726, %v3730
  %v3735 = vand.u32 2147483647, %v2856
  %vm3736 = vcmp.eq.f32.partialorder %v3735, 8.507059e+37
  %v3737 = vand.u32 %v2856, 2147483648
  %v3738 = vor.u32 1.1754944e-38, %v3737
  %v3739 = vsel %vm3736, %v3738, %v3734
  %v3740 = vrcp.pop %v2857
  %v3741 = vmul.f32 %v2857, %v3740
  %v3742 = vsub.f32 1.0, %v3741
  %v3743 = vmul.f32 %v3740, %v3742
  %v3744 = vadd.f32 %v3740, %v3743
  %vm3745 = vweird.f32 %v2857
  %vm3746 = vweird.f32 %v3740
  %vm3747 = vmor %vm3745, %vm3746
  %v3748 = vsel %vm3747, %v3740, %v3744
  %v3749 = vand.u32 2147483647, %v2857
  %vm3750 = vcmp.eq.f32.partialorder %v3749, 8.507059e+37
  %v3751 = vand.u32 %v2857, 2147483648
  %v3752 = vor.u32 1.1754944e-38, %v3751
  %v3753 = vsel %vm3750, %v3752, %v3748
  %v3754 = vadd.f32 %v724, %v2871
  %v3755 = vadd.f32 %v727, %v2885
  %v3756 = vadd.f32 %v730, %v2899
  %v3757 = vadd.f32 %v733, %v2913
  %v3758 = vadd.f32 %v736, %v2927
  %v3759 = vadd.f32 %v739, %v2941
  %v3760 = vadd.f32 %v742, %v2955
  %v3761 = vadd.f32 %v745, %v2969
  %v3762 = vadd.f32 %v748, %v2983
  %v3763 = vadd.f32 %v751, %v2997
  %v3764 = vadd.f32 %v754, %v3011
  %v3765 = vadd.f32 %v757, %v3025
  %v3766 = vadd.f32 %v760, %v3039
  %v3767 = vadd.f32 %v763, %v3053
  %v3768 = vadd.f32 %v766, %v3067
  %v3769 = vadd.f32 %v769, %v3081
  %v3770 = vadd.f32 %v772, %v3095
  %v3771 = vadd.f32 %v775, %v3109
  %v3772 = vadd.f32 %v778, %v3123
  %v3773 = vadd.f32 %v781, %v3137
  %v3774 = vadd.f32 %v784, %v3151
  %v3775 = vadd.f32 %v787, %v3165
  %v3776 = vadd.f32 %v790, %v3179
  %v3777 = vadd.f32 %v793, %v3193
  %v3778 = vadd.f32 %v796, %v3207
  %v3779 = vadd.f32 %v799, %v3221
  %v3780 = vadd.f32 %v802, %v3235
  %v3781 = vadd.f32 %v805, %v3249
  %v3782 = vadd.f32 %v808, %v3263
  %v3783 = vadd.f32 %v811, %v3277
  %v3784 = vadd.f32 %v814, %v3291
  %v3785 = vadd.f32 %v817, %v3305
  %v3786 = vadd.f32 %v820, %v3319
  %v3787 = vadd.f32 %v823, %v3333
  %v3788 = vadd.f32 %v826, %v3347
  %v3789 = vadd.f32 %v829, %v3361
  %v3790 = vadd.f32 %v832, %v3375
  %v3791 = vadd.f32 %v835, %v3389
  %v3792 = vadd.f32 %v838, %v3403
  %v3793 = vadd.f32 %v841, %v3417
  %v3794 = vadd.f32 %v844, %v3431
  %v3795 = vadd.f32 %v847, %v3445
  %v3796 = vadd.f32 %v850, %v3459
  %v3797 = vadd.f32 %v853, %v3473
  %v3798 = vadd.f32 %v856, %v3487
  %v3799 = vadd.f32 %v859, %v3501
  %v3800 = vadd.f32 %v862, %v3515
  %v3801 = vadd.f32 %v865, %v3529
  %v3802 = vadd.f32 %v868, %v3543
  %v3803 = vadd.f32 %v871, %v3557
  %v3804 = vadd.f32 %v874, %v3571
  %v3805 = vadd.f32 %v877, %v3585
  %v3806 = vadd.f32 %v880, %v3599
  %v3807 = vadd.f32 %v883, %v3613
  %v3808 = vadd.f32 %v886, %v3627
  %v3809 = vadd.f32 %v889, %v3641
  %v3810 = vadd.f32 %v892, %v3655
  %v3811 = vadd.f32 %v895, %v3669
  %v3812 = vadd.f32 %v898, %v3683
  %v3813 = vadd.f32 %v901, %v3697
  %v3814 = vadd.f32 %v904, %v3711
  %v3815 = vadd.f32 %v907, %v3725
  %v3816 = vadd.f32 %v910, %v3739
  %v3817 = vadd.f32 %v913, %v3753
  %v3818 = vand.u32 2147483647, %v3754
  %v3819 = vand.u32 2147483647, %v3755
  %v3820 = vand.u32 2147483647, %v3756
  %v3821 = vand.u32 2147483647, %v3757
  %v3822 = vand.u32 2147483647, %v3758
  %v3823 = vand.u32 2147483647, %v3759
  %v3824 = vand.u32 2147483647, %v3760
  %v3825 = vand.u32 2147483647, %v3761
  %v3826 = vand.u32 2147483647, %v3762
  %v3827 = vand.u32 2147483647, %v3763
  %v3828 = vand.u32 2147483647, %v3764
  %v3829 = vand.u32 2147483647, %v3765
  %v3830 = vand.u32 2147483647, %v3766
  %v3831 = vand.u32 2147483647, %v3767
  %v3832 = vand.u32 2147483647, %v3768
  %v3833 = vand.u32 2147483647, %v3769
  %v3834 = vand.u32 2147483647, %v3770
  %v3835 = vand.u32 2147483647, %v3771
  %v3836 = vand.u32 2147483647, %v3772
  %v3837 = vand.u32 2147483647, %v3773
  %v3838 = vand.u32 2147483647, %v3774
  %v3839 = vand.u32 2147483647, %v3775
  %v3840 = vand.u32 2147483647, %v3776
  %v3841 = vand.u32 2147483647, %v3777
  %v3842 = vand.u32 2147483647, %v3778
  %v3843 = vand.u32 2147483647, %v3779
  %v3844 = vand.u32 2147483647, %v3780
  %v3845 = vand.u32 2147483647, %v3781
  %v3846 = vand.u32 2147483647, %v3782
  %v3847 = vand.u32 2147483647, %v3783
  %v3848 = vand.u32 2147483647, %v3784
  %v3849 = vand.u32 2147483647, %v3785
  %v3850 = vand.u32 2147483647, %v3786
  %v3851 = vand.u32 2147483647, %v3787
  %v3852 = vand.u32 2147483647, %v3788
  %v3853 = vand.u32 2147483647, %v3789
  %v3854 = vand.u32 2147483647, %v3790
  %v3855 = vand.u32 2147483647, %v3791
  %v3856 = vand.u32 2147483647, %v3792
  %v3857 = vand.u32 2147483647, %v3793
  %v3858 = vand.u32 2147483647, %v3794
  %v3859 = vand.u32 2147483647, %v3795
  %v3860 = vand.u32 2147483647, %v3796
  %v3861 = vand.u32 2147483647, %v3797
  %v3862 = vand.u32 2147483647, %v3798
  %v3863 = vand.u32 2147483647, %v3799
  %v3864 = vand.u32 2147483647, %v3800
  %v3865 = vand.u32 2147483647, %v3801
  %v3866 = vand.u32 2147483647, %v3802
  %v3867 = vand.u32 2147483647, %v3803
  %v3868 = vand.u32 2147483647, %v3804
  %v3869 = vand.u32 2147483647, %v3805
  %v3870 = vand.u32 2147483647, %v3806
  %v3871 = vand.u32 2147483647, %v3807
  %v3872 = vand.u32 2147483647, %v3808
  %v3873 = vand.u32 2147483647, %v3809
  %v3874 = vand.u32 2147483647, %v3810
  %v3875 = vand.u32 2147483647, %v3811
  %v3876 = vand.u32 2147483647, %v3812
  %v3877 = vand.u32 2147483647, %v3813
  %v3878 = vand.u32 2147483647, %v3814
  %v3879 = vand.u32 2147483647, %v3815
  %v3880 = vand.u32 2147483647, %v3816
  %v3881 = vand.u32 2147483647, %v3817
  %vm3882 = vcmp.lt.f32.partialorder %v3818, 0.01
  %vm3883 = vcmp.lt.f32.partialorder %v3819, 0.01
  %vm3884 = vcmp.lt.f32.partialorder %v3820, 0.01
  %vm3885 = vcmp.lt.f32.partialorder %v3821, 0.01
  %vm3886 = vcmp.lt.f32.partialorder %v3822, 0.01
  %vm3887 = vcmp.lt.f32.partialorder %v3823, 0.01
  %vm3888 = vcmp.lt.f32.partialorder %v3824, 0.01
  %vm3889 = vcmp.lt.f32.partialorder %v3825, 0.01
  %vm3890 = vcmp.lt.f32.partialorder %v3826, 0.01
  %vm3891 = vcmp.lt.f32.partialorder %v3827, 0.01
  %vm3892 = vcmp.lt.f32.partialorder %v3828, 0.01
  %vm3893 = vcmp.lt.f32.partialorder %v3829, 0.01
  %vm3894 = vcmp.lt.f32.partialorder %v3830, 0.01
  %vm3895 = vcmp.lt.f32.partialorder %v3831, 0.01
  %vm3896 = vcmp.lt.f32.partialorder %v3832, 0.01
  %vm3897 = vcmp.lt.f32.partialorder %v3833, 0.01
  %vm3898 = vcmp.lt.f32.partialorder %v3834, 0.01
  %vm3899 = vcmp.lt.f32.partialorder %v3835, 0.01
  %vm3900 = vcmp.lt.f32.partialorder %v3836, 0.01
  %vm3901 = vcmp.lt.f32.partialorder %v3837, 0.01
  %vm3902 = vcmp.lt.f32.partialorder %v3838, 0.01
  %vm3903 = vcmp.lt.f32.partialorder %v3839, 0.01
  %vm3904 = vcmp.lt.f32.partialorder %v3840, 0.01
  %vm3905 = vcmp.lt.f32.partialorder %v3841, 0.01
  %vm3906 = vcmp.lt.f32.partialorder %v3842, 0.01
  %vm3907 = vcmp.lt.f32.partialorder %v3843, 0.01
  %vm3908 = vcmp.lt.f32.partialorder %v3844, 0.01
  %vm3909 = vcmp.lt.f32.partialorder %v3845, 0.01
  %vm3910 = vcmp.lt.f32.partialorder %v3846, 0.01
  %vm3911 = vcmp.lt.f32.partialorder %v3847, 0.01
  %vm3912 = vcmp.lt.f32.partialorder %v3848, 0.01
  %vm3913 = vcmp.lt.f32.partialorder %v3849, 0.01
  %vm3914 = vcmp.lt.f32.partialorder %v3850, 0.01
  %vm3915 = vcmp.lt.f32.partialorder %v3851, 0.01
  %vm3916 = vcmp.lt.f32.partialorder %v3852, 0.01
  %vm3917 = vcmp.lt.f32.partialorder %v3853, 0.01
  %vm3918 = vcmp.lt.f32.partialorder %v3854, 0.01
  %vm3919 = vcmp.lt.f32.partialorder %v3855, 0.01
  %vm3920 = vcmp.lt.f32.partialorder %v3856, 0.01
  %vm3921 = vcmp.lt.f32.partialorder %v3857, 0.01
  %vm3922 = vcmp.lt.f32.partialorder %v3858, 0.01
  %vm3923 = vcmp.lt.f32.partialorder %v3859, 0.01
  %vm3924 = vcmp.lt.f32.partialorder %v3860, 0.01
  %vm3925 = vcmp.lt.f32.partialorder %v3861, 0.01
  %vm3926 = vcmp.lt.f32.partialorder %v3862, 0.01
  %vm3927 = vcmp.lt.f32.partialorder %v3863, 0.01
  %vm3928 = vcmp.lt.f32.partialorder %v3864, 0.01
  %vm3929 = vcmp.lt.f32.partialorder %v3865, 0.01
  %vm3930 = vcmp.lt.f32.partialorder %v3866, 0.01
  %vm3931 = vcmp.lt.f32.partialorder %v3867, 0.01
  %vm3932 = vcmp.lt.f32.partialorder %v3868, 0.01
  %vm3933 = vcmp.lt.f32.partialorder %v3869, 0.01
  %vm3934 = vcmp.lt.f32.partialorder %v3870, 0.01
  %vm3935 = vcmp.lt.f32.partialorder %v3871, 0.01
  %vm3936 = vcmp.lt.f32.partialorder %v3872, 0.01
  %vm3937 = vcmp.lt.f32.partialorder %v3873, 0.01
  %vm3938 = vcmp.lt.f32.partialorder %v3874, 0.01
  %vm3939 = vcmp.lt.f32.partialorder %v3875, 0.01
  %vm3940 = vcmp.lt.f32.partialorder %v3876, 0.01
  %vm3941 = vcmp.lt.f32.partialorder %v3877, 0.01
  %vm3942 = vcmp.lt.f32.partialorder %v3878, 0.01
  %vm3943 = vcmp.lt.f32.partialorder %v3879, 0.01
  %vm3944 = vcmp.lt.f32.partialorder %v3880, 0.01
  %vm3945 = vcmp.lt.f32.partialorder %v3881, 0.01
  %vm3946 = vcmp.lt.f32.partialorder %v3754, 0.0
  %vm3947 = vcmp.lt.f32.partialorder %v3755, 0.0
  %vm3948 = vcmp.lt.f32.partialorder %v3756, 0.0
  %vm3949 = vcmp.lt.f32.partialorder %v3757, 0.0
  %vm3950 = vcmp.lt.f32.partialorder %v3758, 0.0
  %vm3951 = vcmp.lt.f32.partialorder %v3759, 0.0
  %vm3952 = vcmp.lt.f32.partialorder %v3760, 0.0
  %vm3953 = vcmp.lt.f32.partialorder %v3761, 0.0
  %vm3954 = vcmp.lt.f32.partialorder %v3762, 0.0
  %vm3955 = vcmp.lt.f32.partialorder %v3763, 0.0
  %vm3956 = vcmp.lt.f32.partialorder %v3764, 0.0
  %vm3957 = vcmp.lt.f32.partialorder %v3765, 0.0
  %vm3958 = vcmp.lt.f32.partialorder %v3766, 0.0
  %vm3959 = vcmp.lt.f32.partialorder %v3767, 0.0
  %vm3960 = vcmp.lt.f32.partialorder %v3768, 0.0
  %vm3961 = vcmp.lt.f32.partialorder %v3769, 0.0
  %vm3962 = vcmp.lt.f32.partialorder %v3770, 0.0
  %vm3963 = vcmp.lt.f32.partialorder %v3771, 0.0
  %vm3964 = vcmp.lt.f32.partialorder %v3772, 0.0
  %vm3965 = vcmp.lt.f32.partialorder %v3773, 0.0
  %vm3966 = vcmp.lt.f32.partialorder %v3774, 0.0
  %vm3967 = vcmp.lt.f32.partialorder %v3775, 0.0
  %vm3968 = vcmp.lt.f32.partialorder %v3776, 0.0
  %vm3969 = vcmp.lt.f32.partialorder %v3777, 0.0
  %vm3970 = vcmp.lt.f32.partialorder %v3778, 0.0
  %vm3971 = vcmp.lt.f32.partialorder %v3779, 0.0
  %vm3972 = vcmp.lt.f32.partialorder %v3780, 0.0
  %vm3973 = vcmp.lt.f32.partialorder %v3781, 0.0
  %vm3974 = vcmp.lt.f32.partialorder %v3782, 0.0
  %vm3975 = vcmp.lt.f32.partialorder %v3783, 0.0
  %vm3976 = vcmp.lt.f32.partialorder %v3784, 0.0
  %vm3977 = vcmp.lt.f32.partialorder %v3785, 0.0
  %vm3978 = vcmp.lt.f32.partialorder %v3786, 0.0
  %vm3979 = vcmp.lt.f32.partialorder %v3787, 0.0
  %vm3980 = vcmp.lt.f32.partialorder %v3788, 0.0
  %vm3981 = vcmp.lt.f32.partialorder %v3789, 0.0
  %vm3982 = vcmp.lt.f32.partialorder %v3790, 0.0
  %vm3983 = vcmp.lt.f32.partialorder %v3791, 0.0
  %vm3984 = vcmp.lt.f32.partialorder %v3792, 0.0
  %vm3985 = vcmp.lt.f32.partialorder %v3793, 0.0
  %vm3986 = vcmp.lt.f32.partialorder %v3794, 0.0
  %vm3987 = vcmp.lt.f32.partialorder %v3795, 0.0
  %vm3988 = vcmp.lt.f32.partialorder %v3796, 0.0
  %vm3989 = vcmp.lt.f32.partialorder %v3797, 0.0
  %vm3990 = vcmp.lt.f32.partialorder %v3798, 0.0
  %vm3991 = vcmp.lt.f32.partialorder %v3799, 0.0
  %vm3992 = vcmp.lt.f32.partialorder %v3800, 0.0
  %vm3993 = vcmp.lt.f32.partialorder %v3801, 0.0
  %vm3994 = vcmp.lt.f32.partialorder %v3802, 0.0
  %vm3995 = vcmp.lt.f32.partialorder %v3803, 0.0
  %vm3996 = vcmp.lt.f32.partialorder %v3804, 0.0
  %vm3997 = vcmp.lt.f32.partialorder %v3805, 0.0
  %vm3998 = vcmp.lt.f32.partialorder %v3806, 0.0
  %vm3999 = vcmp.lt.f32.partialorder %v3807, 0.0
  %vm4000 = vcmp.lt.f32.partialorder %v3808, 0.0
  %vm4001 = vcmp.lt.f32.partialorder %v3809, 0.0
  %vm4002 = vcmp.lt.f32.partialorder %v3810, 0.0
  %vm4003 = vcmp.lt.f32.partialorder %v3811, 0.0
  %vm4004 = vcmp.lt.f32.partialorder %v3812, 0.0
  %vm4005 = vcmp.lt.f32.partialorder %v3813, 0.0
  %vm4006 = vcmp.lt.f32.partialorder %v3814, 0.0
  %vm4007 = vcmp.lt.f32.partialorder %v3815, 0.0
  %vm4008 = vcmp.lt.f32.partialorder %v3816, 0.0
  %vm4009 = vcmp.lt.f32.partialorder %v3817, 0.0
  %v4010 = vsel %vm3946, -0.01, 0.01
  %v4011 = vsel %vm3947, -0.01, 0.01
  %v4012 = vsel %vm3948, -0.01, 0.01
  %v4013 = vsel %vm3949, -0.01, 0.01
  %v4014 = vsel %vm3950, -0.01, 0.01
  %v4015 = vsel %vm3951, -0.01, 0.01
  %v4016 = vsel %vm3952, -0.01, 0.01
  %v4017 = vsel %vm3953, -0.01, 0.01
  %v4018 = vsel %vm3954, -0.01, 0.01
  %v4019 = vsel %vm3955, -0.01, 0.01
  %v4020 = vsel %vm3956, -0.01, 0.01
  %v4021 = vsel %vm3957, -0.01, 0.01
  %v4022 = vsel %vm3958, -0.01, 0.01
  %v4023 = vsel %vm3959, -0.01, 0.01
  %v4024 = vsel %vm3960, -0.01, 0.01
  %v4025 = vsel %vm3961, -0.01, 0.01
  %v4026 = vsel %vm3962, -0.01, 0.01
  %v4027 = vsel %vm3963, -0.01, 0.01
  %v4028 = vsel %vm3964, -0.01, 0.01
  %v4029 = vsel %vm3965, -0.01, 0.01
  %v4030 = vsel %vm3966, -0.01, 0.01
  %v4031 = vsel %vm3967, -0.01, 0.01
  %v4032 = vsel %vm3968, -0.01, 0.01
  %v4033 = vsel %vm3969, -0.01, 0.01
  %v4034 = vsel %vm3970, -0.01, 0.01
  %v4035 = vsel %vm3971, -0.01, 0.01
  %v4036 = vsel %vm3972, -0.01, 0.01
  %v4037 = vsel %vm3973, -0.01, 0.01
  %v4038 = vsel %vm3974, -0.01, 0.01
  %v4039 = vsel %vm3975, -0.01, 0.01
  %v4040 = vsel %vm3976, -0.01, 0.01
  %v4041 = vsel %vm3977, -0.01, 0.01
  %v4042 = vsel %vm3978, -0.01, 0.01
  %v4043 = vsel %vm3979, -0.01, 0.01
  %v4044 = vsel %vm3980, -0.01, 0.01
  %v4045 = vsel %vm3981, -0.01, 0.01
  %v4046 = vsel %vm3982, -0.01, 0.01
  %v4047 = vsel %vm3983, -0.01, 0.01
  %v4048 = vsel %vm3984, -0.01, 0.01
  %v4049 = vsel %vm3985, -0.01, 0.01
  %v4050 = vsel %vm3986, -0.01, 0.01
  %v4051 = vsel %vm3987, -0.01, 0.01
  %v4052 = vsel %vm3988, -0.01, 0.01
  %v4053 = vsel %vm3989, -0.01, 0.01
  %v4054 = vsel %vm3990, -0.01, 0.01
  %v4055 = vsel %vm3991, -0.01, 0.01
  %v4056 = vsel %vm3992, -0.01, 0.01
  %v4057 = vsel %vm3993, -0.01, 0.01
  %v4058 = vsel %vm3994, -0.01, 0.01
  %v4059 = vsel %vm3995, -0.01, 0.01
  %v4060 = vsel %vm3996, -0.01, 0.01
  %v4061 = vsel %vm3997, -0.01, 0.01
  %v4062 = vsel %vm3998, -0.01, 0.01
  %v4063 = vsel %vm3999, -0.01, 0.01
  %v4064 = vsel %vm4000, -0.01, 0.01
  %v4065 = vsel %vm4001, -0.01, 0.01
  %v4066 = vsel %vm4002, -0.01, 0.01
  %v4067 = vsel %vm4003, -0.01, 0.01
  %v4068 = vsel %vm4004, -0.01, 0.01
  %v4069 = vsel %vm4005, -0.01, 0.01
  %v4070 = vsel %vm4006, -0.01, 0.01
  %v4071 = vsel %vm4007, -0.01, 0.01
  %v4072 = vsel %vm4008, -0.01, 0.01
  %v4073 = vsel %vm4009, -0.01, 0.01
  %v4074 = vsel %vm3882, %v4010, %v3754
  %v4075 = vsel %vm3883, %v4011, %v3755
  %v4076 = vsel %vm3884, %v4012, %v3756
  %v4077 = vsel %vm3885, %v4013, %v3757
  %v4078 = vsel %vm3886, %v4014, %v3758
  %v4079 = vsel %vm3887, %v4015, %v3759
  %v4080 = vsel %vm3888, %v4016, %v3760
  %v4081 = vsel %vm3889, %v4017, %v3761
  %v4082 = vsel %vm3890, %v4018, %v3762
  %v4083 = vsel %vm3891, %v4019, %v3763
  %v4084 = vsel %vm3892, %v4020, %v3764
  %v4085 = vsel %vm3893, %v4021, %v3765
  %v4086 = vsel %vm3894, %v4022, %v3766
  %v4087 = vsel %vm3895, %v4023, %v3767
  %v4088 = vsel %vm3896, %v4024, %v3768
  %v4089 = vsel %vm3897, %v4025, %v3769
  %v4090 = vsel %vm3898, %v4026, %v3770
  %v4091 = vsel %vm3899, %v4027, %v3771
  %v4092 = vsel %vm3900, %v4028, %v3772
  %v4093 = vsel %vm3901, %v4029, %v3773
  %v4094 = vsel %vm3902, %v4030, %v3774
  %v4095 = vsel %vm3903, %v4031, %v3775
  %v4096 = vsel %vm3904, %v4032, %v3776
  %v4097 = vsel %vm3905, %v4033, %v3777
  %v4098 = vsel %vm3906, %v4034, %v3778
  %v4099 = vsel %vm3907, %v4035, %v3779
  %v4100 = vsel %vm3908, %v4036, %v3780
  %v4101 = vsel %vm3909, %v4037, %v3781
  %v4102 = vsel %vm3910, %v4038, %v3782
  %v4103 = vsel %vm3911, %v4039, %v3783
  %v4104 = vsel %vm3912, %v4040, %v3784
  %v4105 = vsel %vm3913, %v4041, %v3785
  %v4106 = vsel %vm3914, %v4042, %v3786
  %v4107 = vsel %vm3915, %v4043, %v3787
  %v4108 = vsel %vm3916, %v4044, %v3788
  %v4109 = vsel %vm3917, %v4045, %v3789
  %v4110 = vsel %vm3918, %v4046, %v3790
  %v4111 = vsel %vm3919, %v4047, %v3791
  %v4112 = vsel %vm3920, %v4048, %v3792
  %v4113 = vsel %vm3921, %v4049, %v3793
  %v4114 = vsel %vm3922, %v4050, %v3794
  %v4115 = vsel %vm3923, %v4051, %v3795
  %v4116 = vsel %vm3924, %v4052, %v3796
  %v4117 = vsel %vm3925, %v4053, %v3797
  %v4118 = vsel %vm3926, %v4054, %v3798
  %v4119 = vsel %vm3927, %v4055, %v3799
  %v4120 = vsel %vm3928, %v4056, %v3800
  %v4121 = vsel %vm3929, %v4057, %v3801
  %v4122 = vsel %vm3930, %v4058, %v3802
  %v4123 = vsel %vm3931, %v4059, %v3803
  %v4124 = vsel %vm3932, %v4060, %v3804
  %v4125 = vsel %vm3933, %v4061, %v3805
  %v4126 = vsel %vm3934, %v4062, %v3806
  %v4127 = vsel %vm3935, %v4063, %v3807
  %v4128 = vsel %vm3936, %v4064, %v3808
  %v4129 = vsel %vm3937, %v4065, %v3809
  %v4130 = vsel %vm3938, %v4066, %v3810
  %v4131 = vsel %vm3939, %v4067, %v3811
  %v4132 = vsel %vm3940, %v4068, %v3812
  %v4133 = vsel %vm3941, %v4069, %v3813
  %v4134 = vsel %vm3942, %v4070, %v3814
  %v4135 = vsel %vm3943, %v4071, %v3815
  %v4136 = vsel %vm3944, %v4072, %v3816
  %v4137 = vsel %vm3945, %v4073, %v3817
  %v4138 = vrcp.pop %v4074
  %v4139 = vmul.f32 %v4074, %v4138
  %v4140 = vsub.f32 1.0, %v4139
  %v4141 = vmul.f32 %v4138, %v4140
  %v4142 = vadd.f32 %v4138, %v4141
  %vm4143 = vweird.f32 %v4074
  %vm4144 = vweird.f32 %v4138
  %vm4145 = vmor %vm4143, %vm4144
  %v4146 = vsel %vm4145, %v4138, %v4142
  %v4147 = vand.u32 2147483647, %v4074
  %vm4148 = vcmp.eq.f32.partialorder %v4147, 8.507059e+37
  %v4149 = vand.u32 %v4074, 2147483648
  %v4150 = vor.u32 1.1754944e-38, %v4149
  %v4151 = vsel %vm4148, %v4150, %v4146
  %v4152 = vrcp.pop %v4075
  %v4153 = vmul.f32 %v4075, %v4152
  %v4154 = vsub.f32 1.0, %v4153
  %v4155 = vmul.f32 %v4152, %v4154
  %v4156 = vadd.f32 %v4152, %v4155
  %vm4157 = vweird.f32 %v4075
  %vm4158 = vweird.f32 %v4152
  %vm4159 = vmor %vm4157, %vm4158
  %v4160 = vsel %vm4159, %v4152, %v4156
  %v4161 = vand.u32 2147483647, %v4075
  %vm4162 = vcmp.eq.f32.partialorder %v4161, 8.507059e+37
  %v4163 = vand.u32 %v4075, 2147483648
  %v4164 = vor.u32 1.1754944e-38, %v4163
  %v4165 = vsel %vm4162, %v4164, %v4160
  %v4166 = vrcp.pop %v4076
  %v4167 = vmul.f32 %v4076, %v4166
  %v4168 = vsub.f32 1.0, %v4167
  %v4169 = vmul.f32 %v4166, %v4168
  %v4170 = vadd.f32 %v4166, %v4169
  %vm4171 = vweird.f32 %v4076
  %vm4172 = vweird.f32 %v4166
  %vm4173 = vmor %vm4171, %vm4172
  %v4174 = vsel %vm4173, %v4166, %v4170
  %v4175 = vand.u32 2147483647, %v4076
  %vm4176 = vcmp.eq.f32.partialorder %v4175, 8.507059e+37
  %v4177 = vand.u32 %v4076, 2147483648
  %v4178 = vor.u32 1.1754944e-38, %v4177
  %v4179 = vsel %vm4176, %v4178, %v4174
  %v4180 = vrcp.pop %v4077
  %v4181 = vmul.f32 %v4077, %v4180
  %v4182 = vsub.f32 1.0, %v4181
  %v4183 = vmul.f32 %v4180, %v4182
  %v4184 = vadd.f32 %v4180, %v4183
  %vm4185 = vweird.f32 %v4077
  %vm4186 = vweird.f32 %v4180
  %vm4187 = vmor %vm4185, %vm4186
  %v4188 = vsel %vm4187, %v4180, %v4184
  %v4189 = vand.u32 2147483647, %v4077
  %vm4190 = vcmp.eq.f32.partialorder %v4189, 8.507059e+37
  %v4191 = vand.u32 %v4077, 2147483648
  %v4192 = vor.u32 1.1754944e-38, %v4191
  %v4193 = vsel %vm4190, %v4192, %v4188
  %v4194 = vrcp.pop %v4078
  %v4195 = vmul.f32 %v4078, %v4194
  %v4196 = vsub.f32 1.0, %v4195
  %v4197 = vmul.f32 %v4194, %v4196
  %v4198 = vadd.f32 %v4194, %v4197
  %vm4199 = vweird.f32 %v4078
  %vm4200 = vweird.f32 %v4194
  %vm4201 = vmor %vm4199, %vm4200
  %v4202 = vsel %vm4201, %v4194, %v4198
  %v4203 = vand.u32 2147483647, %v4078
  %vm4204 = vcmp.eq.f32.partialorder %v4203, 8.507059e+37
  %v4205 = vand.u32 %v4078, 2147483648
  %v4206 = vor.u32 1.1754944e-38, %v4205
  %v4207 = vsel %vm4204, %v4206, %v4202
  %v4208 = vrcp.pop %v4079
  %v4209 = vmul.f32 %v4079, %v4208
  %v4210 = vsub.f32 1.0, %v4209
  %v4211 = vmul.f32 %v4208, %v4210
  %v4212 = vadd.f32 %v4208, %v4211
  %vm4213 = vweird.f32 %v4079
  %vm4214 = vweird.f32 %v4208
  %vm4215 = vmor %vm4213, %vm4214
  %v4216 = vsel %vm4215, %v4208, %v4212
  %v4217 = vand.u32 2147483647, %v4079
  %vm4218 = vcmp.eq.f32.partialorder %v4217, 8.507059e+37
  %v4219 = vand.u32 %v4079, 2147483648
  %v4220 = vor.u32 1.1754944e-38, %v4219
  %v4221 = vsel %vm4218, %v4220, %v4216
  %v4222 = vrcp.pop %v4080
  %v4223 = vmul.f32 %v4080, %v4222
  %v4224 = vsub.f32 1.0, %v4223
  %v4225 = vmul.f32 %v4222, %v4224
  %v4226 = vadd.f32 %v4222, %v4225
  %vm4227 = vweird.f32 %v4080
  %vm4228 = vweird.f32 %v4222
  %vm4229 = vmor %vm4227, %vm4228
  %v4230 = vsel %vm4229, %v4222, %v4226
  %v4231 = vand.u32 2147483647, %v4080
  %vm4232 = vcmp.eq.f32.partialorder %v4231, 8.507059e+37
  %v4233 = vand.u32 %v4080, 2147483648
  %v4234 = vor.u32 1.1754944e-38, %v4233
  %v4235 = vsel %vm4232, %v4234, %v4230
  %v4236 = vrcp.pop %v4081
  %v4237 = vmul.f32 %v4081, %v4236
  %v4238 = vsub.f32 1.0, %v4237
  %v4239 = vmul.f32 %v4236, %v4238
  %v4240 = vadd.f32 %v4236, %v4239
  %vm4241 = vweird.f32 %v4081
  %vm4242 = vweird.f32 %v4236
  %vm4243 = vmor %vm4241, %vm4242
  %v4244 = vsel %vm4243, %v4236, %v4240
  %v4245 = vand.u32 2147483647, %v4081
  %vm4246 = vcmp.eq.f32.partialorder %v4245, 8.507059e+37
  %v4247 = vand.u32 %v4081, 2147483648
  %v4248 = vor.u32 1.1754944e-38, %v4247
  %v4249 = vsel %vm4246, %v4248, %v4244
  %v4250 = vrcp.pop %v4082
  %v4251 = vmul.f32 %v4082, %v4250
  %v4252 = vsub.f32 1.0, %v4251
  %v4253 = vmul.f32 %v4250, %v4252
  %v4254 = vadd.f32 %v4250, %v4253
  %vm4255 = vweird.f32 %v4082
  %vm4256 = vweird.f32 %v4250
  %vm4257 = vmor %vm4255, %vm4256
  %v4258 = vsel %vm4257, %v4250, %v4254
  %v4259 = vand.u32 2147483647, %v4082
  %vm4260 = vcmp.eq.f32.partialorder %v4259, 8.507059e+37
  %v4261 = vand.u32 %v4082, 2147483648
  %v4262 = vor.u32 1.1754944e-38, %v4261
  %v4263 = vsel %vm4260, %v4262, %v4258
  %v4264 = vrcp.pop %v4083
  %v4265 = vmul.f32 %v4083, %v4264
  %v4266 = vsub.f32 1.0, %v4265
  %v4267 = vmul.f32 %v4264, %v4266
  %v4268 = vadd.f32 %v4264, %v4267
  %vm4269 = vweird.f32 %v4083
  %vm4270 = vweird.f32 %v4264
  %vm4271 = vmor %vm4269, %vm4270
  %v4272 = vsel %vm4271, %v4264, %v4268
  %v4273 = vand.u32 2147483647, %v4083
  %vm4274 = vcmp.eq.f32.partialorder %v4273, 8.507059e+37
  %v4275 = vand.u32 %v4083, 2147483648
  %v4276 = vor.u32 1.1754944e-38, %v4275
  %v4277 = vsel %vm4274, %v4276, %v4272
  %v4278 = vrcp.pop %v4084
  %v4279 = vmul.f32 %v4084, %v4278
  %v4280 = vsub.f32 1.0, %v4279
  %v4281 = vmul.f32 %v4278, %v4280
  %v4282 = vadd.f32 %v4278, %v4281
  %vm4283 = vweird.f32 %v4084
  %vm4284 = vweird.f32 %v4278
  %vm4285 = vmor %vm4283, %vm4284
  %v4286 = vsel %vm4285, %v4278, %v4282
  %v4287 = vand.u32 2147483647, %v4084
  %vm4288 = vcmp.eq.f32.partialorder %v4287, 8.507059e+37
  %v4289 = vand.u32 %v4084, 2147483648
  %v4290 = vor.u32 1.1754944e-38, %v4289
  %v4291 = vsel %vm4288, %v4290, %v4286
  %v4292 = vrcp.pop %v4085
  %v4293 = vmul.f32 %v4085, %v4292
  %v4294 = vsub.f32 1.0, %v4293
  %v4295 = vmul.f32 %v4292, %v4294
  %v4296 = vadd.f32 %v4292, %v4295
  %vm4297 = vweird.f32 %v4085
  %vm4298 = vweird.f32 %v4292
  %vm4299 = vmor %vm4297, %vm4298
  %v4300 = vsel %vm4299, %v4292, %v4296
  %v4301 = vand.u32 2147483647, %v4085
  %vm4302 = vcmp.eq.f32.partialorder %v4301, 8.507059e+37
  %v4303 = vand.u32 %v4085, 2147483648
  %v4304 = vor.u32 1.1754944e-38, %v4303
  %v4305 = vsel %vm4302, %v4304, %v4300
  %v4306 = vrcp.pop %v4086
  %v4307 = vmul.f32 %v4086, %v4306
  %v4308 = vsub.f32 1.0, %v4307
  %v4309 = vmul.f32 %v4306, %v4308
  %v4310 = vadd.f32 %v4306, %v4309
  %vm4311 = vweird.f32 %v4086
  %vm4312 = vweird.f32 %v4306
  %vm4313 = vmor %vm4311, %vm4312
  %v4314 = vsel %vm4313, %v4306, %v4310
  %v4315 = vand.u32 2147483647, %v4086
  %vm4316 = vcmp.eq.f32.partialorder %v4315, 8.507059e+37
  %v4317 = vand.u32 %v4086, 2147483648
  %v4318 = vor.u32 1.1754944e-38, %v4317
  %v4319 = vsel %vm4316, %v4318, %v4314
  %v4320 = vrcp.pop %v4087
  %v4321 = vmul.f32 %v4087, %v4320
  %v4322 = vsub.f32 1.0, %v4321
  %v4323 = vmul.f32 %v4320, %v4322
  %v4324 = vadd.f32 %v4320, %v4323
  %vm4325 = vweird.f32 %v4087
  %vm4326 = vweird.f32 %v4320
  %vm4327 = vmor %vm4325, %vm4326
  %v4328 = vsel %vm4327, %v4320, %v4324
  %v4329 = vand.u32 2147483647, %v4087
  %vm4330 = vcmp.eq.f32.partialorder %v4329, 8.507059e+37
  %v4331 = vand.u32 %v4087, 2147483648
  %v4332 = vor.u32 1.1754944e-38, %v4331
  %v4333 = vsel %vm4330, %v4332, %v4328
  %v4334 = vrcp.pop %v4088
  %v4335 = vmul.f32 %v4088, %v4334
  %v4336 = vsub.f32 1.0, %v4335
  %v4337 = vmul.f32 %v4334, %v4336
  %v4338 = vadd.f32 %v4334, %v4337
  %vm4339 = vweird.f32 %v4088
  %vm4340 = vweird.f32 %v4334
  %vm4341 = vmor %vm4339, %vm4340
  %v4342 = vsel %vm4341, %v4334, %v4338
  %v4343 = vand.u32 2147483647, %v4088
  %vm4344 = vcmp.eq.f32.partialorder %v4343, 8.507059e+37
  %v4345 = vand.u32 %v4088, 2147483648
  %v4346 = vor.u32 1.1754944e-38, %v4345
  %v4347 = vsel %vm4344, %v4346, %v4342
  %v4348 = vrcp.pop %v4089
  %v4349 = vmul.f32 %v4089, %v4348
  %v4350 = vsub.f32 1.0, %v4349
  %v4351 = vmul.f32 %v4348, %v4350
  %v4352 = vadd.f32 %v4348, %v4351
  %vm4353 = vweird.f32 %v4089
  %vm4354 = vweird.f32 %v4348
  %vm4355 = vmor %vm4353, %vm4354
  %v4356 = vsel %vm4355, %v4348, %v4352
  %v4357 = vand.u32 2147483647, %v4089
  %vm4358 = vcmp.eq.f32.partialorder %v4357, 8.507059e+37
  %v4359 = vand.u32 %v4089, 2147483648
  %v4360 = vor.u32 1.1754944e-38, %v4359
  %v4361 = vsel %vm4358, %v4360, %v4356
  %v4362 = vrcp.pop %v4090
  %v4363 = vmul.f32 %v4090, %v4362
  %v4364 = vsub.f32 1.0, %v4363
  %v4365 = vmul.f32 %v4362, %v4364
  %v4366 = vadd.f32 %v4362, %v4365
  %vm4367 = vweird.f32 %v4090
  %vm4368 = vweird.f32 %v4362
  %vm4369 = vmor %vm4367, %vm4368
  %v4370 = vsel %vm4369, %v4362, %v4366
  %v4371 = vand.u32 2147483647, %v4090
  %vm4372 = vcmp.eq.f32.partialorder %v4371, 8.507059e+37
  %v4373 = vand.u32 %v4090, 2147483648
  %v4374 = vor.u32 1.1754944e-38, %v4373
  %v4375 = vsel %vm4372, %v4374, %v4370
  %v4376 = vrcp.pop %v4091
  %v4377 = vmul.f32 %v4091, %v4376
  %v4378 = vsub.f32 1.0, %v4377
  %v4379 = vmul.f32 %v4376, %v4378
  %v4380 = vadd.f32 %v4376, %v4379
  %vm4381 = vweird.f32 %v4091
  %vm4382 = vweird.f32 %v4376
  %vm4383 = vmor %vm4381, %vm4382
  %v4384 = vsel %vm4383, %v4376, %v4380
  %v4385 = vand.u32 2147483647, %v4091
  %vm4386 = vcmp.eq.f32.partialorder %v4385, 8.507059e+37
  %v4387 = vand.u32 %v4091, 2147483648
  %v4388 = vor.u32 1.1754944e-38, %v4387
  %v4389 = vsel %vm4386, %v4388, %v4384
  %v4390 = vrcp.pop %v4092
  %v4391 = vmul.f32 %v4092, %v4390
  %v4392 = vsub.f32 1.0, %v4391
  %v4393 = vmul.f32 %v4390, %v4392
  %v4394 = vadd.f32 %v4390, %v4393
  %vm4395 = vweird.f32 %v4092
  %vm4396 = vweird.f32 %v4390
  %vm4397 = vmor %vm4395, %vm4396
  %v4398 = vsel %vm4397, %v4390, %v4394
  %v4399 = vand.u32 2147483647, %v4092
  %vm4400 = vcmp.eq.f32.partialorder %v4399, 8.507059e+37
  %v4401 = vand.u32 %v4092, 2147483648
  %v4402 = vor.u32 1.1754944e-38, %v4401
  %v4403 = vsel %vm4400, %v4402, %v4398
  %v4404 = vrcp.pop %v4093
  %v4405 = vmul.f32 %v4093, %v4404
  %v4406 = vsub.f32 1.0, %v4405
  %v4407 = vmul.f32 %v4404, %v4406
  %v4408 = vadd.f32 %v4404, %v4407
  %vm4409 = vweird.f32 %v4093
  %vm4410 = vweird.f32 %v4404
  %vm4411 = vmor %vm4409, %vm4410
  %v4412 = vsel %vm4411, %v4404, %v4408
  %v4413 = vand.u32 2147483647, %v4093
  %vm4414 = vcmp.eq.f32.partialorder %v4413, 8.507059e+37
  %v4415 = vand.u32 %v4093, 2147483648
  %v4416 = vor.u32 1.1754944e-38, %v4415
  %v4417 = vsel %vm4414, %v4416, %v4412
  %v4418 = vrcp.pop %v4094
  %v4419 = vmul.f32 %v4094, %v4418
  %v4420 = vsub.f32 1.0, %v4419
  %v4421 = vmul.f32 %v4418, %v4420
  %v4422 = vadd.f32 %v4418, %v4421
  %vm4423 = vweird.f32 %v4094
  %vm4424 = vweird.f32 %v4418
  %vm4425 = vmor %vm4423, %vm4424
  %v4426 = vsel %vm4425, %v4418, %v4422
  %v4427 = vand.u32 2147483647, %v4094
  %vm4428 = vcmp.eq.f32.partialorder %v4427, 8.507059e+37
  %v4429 = vand.u32 %v4094, 2147483648
  %v4430 = vor.u32 1.1754944e-38, %v4429
  %v4431 = vsel %vm4428, %v4430, %v4426
  %v4432 = vrcp.pop %v4095
  %v4433 = vmul.f32 %v4095, %v4432
  %v4434 = vsub.f32 1.0, %v4433
  %v4435 = vmul.f32 %v4432, %v4434
  %v4436 = vadd.f32 %v4432, %v4435
  %vm4437 = vweird.f32 %v4095
  %vm4438 = vweird.f32 %v4432
  %vm4439 = vmor %vm4437, %vm4438
  %v4440 = vsel %vm4439, %v4432, %v4436
  %v4441 = vand.u32 2147483647, %v4095
  %vm4442 = vcmp.eq.f32.partialorder %v4441, 8.507059e+37
  %v4443 = vand.u32 %v4095, 2147483648
  %v4444 = vor.u32 1.1754944e-38, %v4443
  %v4445 = vsel %vm4442, %v4444, %v4440
  %v4446 = vrcp.pop %v4096
  %v4447 = vmul.f32 %v4096, %v4446
  %v4448 = vsub.f32 1.0, %v4447
  %v4449 = vmul.f32 %v4446, %v4448
  %v4450 = vadd.f32 %v4446, %v4449
  %vm4451 = vweird.f32 %v4096
  %vm4452 = vweird.f32 %v4446
  %vm4453 = vmor %vm4451, %vm4452
  %v4454 = vsel %vm4453, %v4446, %v4450
  %v4455 = vand.u32 2147483647, %v4096
  %vm4456 = vcmp.eq.f32.partialorder %v4455, 8.507059e+37
  %v4457 = vand.u32 %v4096, 2147483648
  %v4458 = vor.u32 1.1754944e-38, %v4457
  %v4459 = vsel %vm4456, %v4458, %v4454
  %v4460 = vrcp.pop %v4097
  %v4461 = vmul.f32 %v4097, %v4460
  %v4462 = vsub.f32 1.0, %v4461
  %v4463 = vmul.f32 %v4460, %v4462
  %v4464 = vadd.f32 %v4460, %v4463
  %vm4465 = vweird.f32 %v4097
  %vm4466 = vweird.f32 %v4460
  %vm4467 = vmor %vm4465, %vm4466
  %v4468 = vsel %vm4467, %v4460, %v4464
  %v4469 = vand.u32 2147483647, %v4097
  %vm4470 = vcmp.eq.f32.partialorder %v4469, 8.507059e+37
  %v4471 = vand.u32 %v4097, 2147483648
  %v4472 = vor.u32 1.1754944e-38, %v4471
  %v4473 = vsel %vm4470, %v4472, %v4468
  %v4474 = vrcp.pop %v4098
  %v4475 = vmul.f32 %v4098, %v4474
  %v4476 = vsub.f32 1.0, %v4475
  %v4477 = vmul.f32 %v4474, %v4476
  %v4478 = vadd.f32 %v4474, %v4477
  %vm4479 = vweird.f32 %v4098
  %vm4480 = vweird.f32 %v4474
  %vm4481 = vmor %vm4479, %vm4480
  %v4482 = vsel %vm4481, %v4474, %v4478
  %v4483 = vand.u32 2147483647, %v4098
  %vm4484 = vcmp.eq.f32.partialorder %v4483, 8.507059e+37
  %v4485 = vand.u32 %v4098, 2147483648
  %v4486 = vor.u32 1.1754944e-38, %v4485
  %v4487 = vsel %vm4484, %v4486, %v4482
  %v4488 = vrcp.pop %v4099
  %v4489 = vmul.f32 %v4099, %v4488
  %v4490 = vsub.f32 1.0, %v4489
  %v4491 = vmul.f32 %v4488, %v4490
  %v4492 = vadd.f32 %v4488, %v4491
  %vm4493 = vweird.f32 %v4099
  %vm4494 = vweird.f32 %v4488
  %vm4495 = vmor %vm4493, %vm4494
  %v4496 = vsel %vm4495, %v4488, %v4492
  %v4497 = vand.u32 2147483647, %v4099
  %vm4498 = vcmp.eq.f32.partialorder %v4497, 8.507059e+37
  %v4499 = vand.u32 %v4099, 2147483648
  %v4500 = vor.u32 1.1754944e-38, %v4499
  %v4501 = vsel %vm4498, %v4500, %v4496
  %v4502 = vrcp.pop %v4100
  %v4503 = vmul.f32 %v4100, %v4502
  %v4504 = vsub.f32 1.0, %v4503
  %v4505 = vmul.f32 %v4502, %v4504
  %v4506 = vadd.f32 %v4502, %v4505
  %vm4507 = vweird.f32 %v4100
  %vm4508 = vweird.f32 %v4502
  %vm4509 = vmor %vm4507, %vm4508
  %v4510 = vsel %vm4509, %v4502, %v4506
  %v4511 = vand.u32 2147483647, %v4100
  %vm4512 = vcmp.eq.f32.partialorder %v4511, 8.507059e+37
  %v4513 = vand.u32 %v4100, 2147483648
  %v4514 = vor.u32 1.1754944e-38, %v4513
  %v4515 = vsel %vm4512, %v4514, %v4510
  %v4516 = vrcp.pop %v4101
  %v4517 = vmul.f32 %v4101, %v4516
  %v4518 = vsub.f32 1.0, %v4517
  %v4519 = vmul.f32 %v4516, %v4518
  %v4520 = vadd.f32 %v4516, %v4519
  %vm4521 = vweird.f32 %v4101
  %vm4522 = vweird.f32 %v4516
  %vm4523 = vmor %vm4521, %vm4522
  %v4524 = vsel %vm4523, %v4516, %v4520
  %v4525 = vand.u32 2147483647, %v4101
  %vm4526 = vcmp.eq.f32.partialorder %v4525, 8.507059e+37
  %v4527 = vand.u32 %v4101, 2147483648
  %v4528 = vor.u32 1.1754944e-38, %v4527
  %v4529 = vsel %vm4526, %v4528, %v4524
  %v4530 = vrcp.pop %v4102
  %v4531 = vmul.f32 %v4102, %v4530
  %v4532 = vsub.f32 1.0, %v4531
  %v4533 = vmul.f32 %v4530, %v4532
  %v4534 = vadd.f32 %v4530, %v4533
  %vm4535 = vweird.f32 %v4102
  %vm4536 = vweird.f32 %v4530
  %vm4537 = vmor %vm4535, %vm4536
  %v4538 = vsel %vm4537, %v4530, %v4534
  %v4539 = vand.u32 2147483647, %v4102
  %vm4540 = vcmp.eq.f32.partialorder %v4539, 8.507059e+37
  %v4541 = vand.u32 %v4102, 2147483648
  %v4542 = vor.u32 1.1754944e-38, %v4541
  %v4543 = vsel %vm4540, %v4542, %v4538
  %v4544 = vrcp.pop %v4103
  %v4545 = vmul.f32 %v4103, %v4544
  %v4546 = vsub.f32 1.0, %v4545
  %v4547 = vmul.f32 %v4544, %v4546
  %v4548 = vadd.f32 %v4544, %v4547
  %vm4549 = vweird.f32 %v4103
  %vm4550 = vweird.f32 %v4544
  %vm4551 = vmor %vm4549, %vm4550
  %v4552 = vsel %vm4551, %v4544, %v4548
  %v4553 = vand.u32 2147483647, %v4103
  %vm4554 = vcmp.eq.f32.partialorder %v4553, 8.507059e+37
  %v4555 = vand.u32 %v4103, 2147483648
  %v4556 = vor.u32 1.1754944e-38, %v4555
  %v4557 = vsel %vm4554, %v4556, %v4552
  %v4558 = vrcp.pop %v4104
  %v4559 = vmul.f32 %v4104, %v4558
  %v4560 = vsub.f32 1.0, %v4559
  %v4561 = vmul.f32 %v4558, %v4560
  %v4562 = vadd.f32 %v4558, %v4561
  %vm4563 = vweird.f32 %v4104
  %vm4564 = vweird.f32 %v4558
  %vm4565 = vmor %vm4563, %vm4564
  %v4566 = vsel %vm4565, %v4558, %v4562
  %v4567 = vand.u32 2147483647, %v4104
  %vm4568 = vcmp.eq.f32.partialorder %v4567, 8.507059e+37
  %v4569 = vand.u32 %v4104, 2147483648
  %v4570 = vor.u32 1.1754944e-38, %v4569
  %v4571 = vsel %vm4568, %v4570, %v4566
  %v4572 = vrcp.pop %v4105
  %v4573 = vmul.f32 %v4105, %v4572
  %v4574 = vsub.f32 1.0, %v4573
  %v4575 = vmul.f32 %v4572, %v4574
  %v4576 = vadd.f32 %v4572, %v4575
  %vm4577 = vweird.f32 %v4105
  %vm4578 = vweird.f32 %v4572
  %vm4579 = vmor %vm4577, %vm4578
  %v4580 = vsel %vm4579, %v4572, %v4576
  %v4581 = vand.u32 2147483647, %v4105
  %vm4582 = vcmp.eq.f32.partialorder %v4581, 8.507059e+37
  %v4583 = vand.u32 %v4105, 2147483648
  %v4584 = vor.u32 1.1754944e-38, %v4583
  %v4585 = vsel %vm4582, %v4584, %v4580
  %v4586 = vrcp.pop %v4106
  %v4587 = vmul.f32 %v4106, %v4586
  %v4588 = vsub.f32 1.0, %v4587
  %v4589 = vmul.f32 %v4586, %v4588
  %v4590 = vadd.f32 %v4586, %v4589
  %vm4591 = vweird.f32 %v4106
  %vm4592 = vweird.f32 %v4586
  %vm4593 = vmor %vm4591, %vm4592
  %v4594 = vsel %vm4593, %v4586, %v4590
  %v4595 = vand.u32 2147483647, %v4106
  %vm4596 = vcmp.eq.f32.partialorder %v4595, 8.507059e+37
  %v4597 = vand.u32 %v4106, 2147483648
  %v4598 = vor.u32 1.1754944e-38, %v4597
  %v4599 = vsel %vm4596, %v4598, %v4594
  %v4600 = vrcp.pop %v4107
  %v4601 = vmul.f32 %v4107, %v4600
  %v4602 = vsub.f32 1.0, %v4601
  %v4603 = vmul.f32 %v4600, %v4602
  %v4604 = vadd.f32 %v4600, %v4603
  %vm4605 = vweird.f32 %v4107
  %vm4606 = vweird.f32 %v4600
  %vm4607 = vmor %vm4605, %vm4606
  %v4608 = vsel %vm4607, %v4600, %v4604
  %v4609 = vand.u32 2147483647, %v4107
  %vm4610 = vcmp.eq.f32.partialorder %v4609, 8.507059e+37
  %v4611 = vand.u32 %v4107, 2147483648
  %v4612 = vor.u32 1.1754944e-38, %v4611
  %v4613 = vsel %vm4610, %v4612, %v4608
  %v4614 = vrcp.pop %v4108
  %v4615 = vmul.f32 %v4108, %v4614
  %v4616 = vsub.f32 1.0, %v4615
  %v4617 = vmul.f32 %v4614, %v4616
  %v4618 = vadd.f32 %v4614, %v4617
  %vm4619 = vweird.f32 %v4108
  %vm4620 = vweird.f32 %v4614
  %vm4621 = vmor %vm4619, %vm4620
  %v4622 = vsel %vm4621, %v4614, %v4618
  %v4623 = vand.u32 2147483647, %v4108
  %vm4624 = vcmp.eq.f32.partialorder %v4623, 8.507059e+37
  %v4625 = vand.u32 %v4108, 2147483648
  %v4626 = vor.u32 1.1754944e-38, %v4625
  %v4627 = vsel %vm4624, %v4626, %v4622
  %v4628 = vrcp.pop %v4109
  %v4629 = vmul.f32 %v4109, %v4628
  %v4630 = vsub.f32 1.0, %v4629
  %v4631 = vmul.f32 %v4628, %v4630
  %v4632 = vadd.f32 %v4628, %v4631
  %vm4633 = vweird.f32 %v4109
  %vm4634 = vweird.f32 %v4628
  %vm4635 = vmor %vm4633, %vm4634
  %v4636 = vsel %vm4635, %v4628, %v4632
  %v4637 = vand.u32 2147483647, %v4109
  %vm4638 = vcmp.eq.f32.partialorder %v4637, 8.507059e+37
  %v4639 = vand.u32 %v4109, 2147483648
  %v4640 = vor.u32 1.1754944e-38, %v4639
  %v4641 = vsel %vm4638, %v4640, %v4636
  %v4642 = vrcp.pop %v4110
  %v4643 = vmul.f32 %v4110, %v4642
  %v4644 = vsub.f32 1.0, %v4643
  %v4645 = vmul.f32 %v4642, %v4644
  %v4646 = vadd.f32 %v4642, %v4645
  %vm4647 = vweird.f32 %v4110
  %vm4648 = vweird.f32 %v4642
  %vm4649 = vmor %vm4647, %vm4648
  %v4650 = vsel %vm4649, %v4642, %v4646
  %v4651 = vand.u32 2147483647, %v4110
  %vm4652 = vcmp.eq.f32.partialorder %v4651, 8.507059e+37
  %v4653 = vand.u32 %v4110, 2147483648
  %v4654 = vor.u32 1.1754944e-38, %v4653
  %v4655 = vsel %vm4652, %v4654, %v4650
  %v4656 = vrcp.pop %v4111
  %v4657 = vmul.f32 %v4111, %v4656
  %v4658 = vsub.f32 1.0, %v4657
  %v4659 = vmul.f32 %v4656, %v4658
  %v4660 = vadd.f32 %v4656, %v4659
  %vm4661 = vweird.f32 %v4111
  %vm4662 = vweird.f32 %v4656
  %vm4663 = vmor %vm4661, %vm4662
  %v4664 = vsel %vm4663, %v4656, %v4660
  %v4665 = vand.u32 2147483647, %v4111
  %vm4666 = vcmp.eq.f32.partialorder %v4665, 8.507059e+37
  %v4667 = vand.u32 %v4111, 2147483648
  %v4668 = vor.u32 1.1754944e-38, %v4667
  %v4669 = vsel %vm4666, %v4668, %v4664
  %v4670 = vrcp.pop %v4112
  %v4671 = vmul.f32 %v4112, %v4670
  %v4672 = vsub.f32 1.0, %v4671
  %v4673 = vmul.f32 %v4670, %v4672
  %v4674 = vadd.f32 %v4670, %v4673
  %vm4675 = vweird.f32 %v4112
  %vm4676 = vweird.f32 %v4670
  %vm4677 = vmor %vm4675, %vm4676
  %v4678 = vsel %vm4677, %v4670, %v4674
  %v4679 = vand.u32 2147483647, %v4112
  %vm4680 = vcmp.eq.f32.partialorder %v4679, 8.507059e+37
  %v4681 = vand.u32 %v4112, 2147483648
  %v4682 = vor.u32 1.1754944e-38, %v4681
  %v4683 = vsel %vm4680, %v4682, %v4678
  %v4684 = vrcp.pop %v4113
  %v4685 = vmul.f32 %v4113, %v4684
  %v4686 = vsub.f32 1.0, %v4685
  %v4687 = vmul.f32 %v4684, %v4686
  %v4688 = vadd.f32 %v4684, %v4687
  %vm4689 = vweird.f32 %v4113
  %vm4690 = vweird.f32 %v4684
  %vm4691 = vmor %vm4689, %vm4690
  %v4692 = vsel %vm4691, %v4684, %v4688
  %v4693 = vand.u32 2147483647, %v4113
  %vm4694 = vcmp.eq.f32.partialorder %v4693, 8.507059e+37
  %v4695 = vand.u32 %v4113, 2147483648
  %v4696 = vor.u32 1.1754944e-38, %v4695
  %v4697 = vsel %vm4694, %v4696, %v4692
  %v4698 = vrcp.pop %v4114
  %v4699 = vmul.f32 %v4114, %v4698
  %v4700 = vsub.f32 1.0, %v4699
  %v4701 = vmul.f32 %v4698, %v4700
  %v4702 = vadd.f32 %v4698, %v4701
  %vm4703 = vweird.f32 %v4114
  %vm4704 = vweird.f32 %v4698
  %vm4705 = vmor %vm4703, %vm4704
  %v4706 = vsel %vm4705, %v4698, %v4702
  %v4707 = vand.u32 2147483647, %v4114
  %vm4708 = vcmp.eq.f32.partialorder %v4707, 8.507059e+37
  %v4709 = vand.u32 %v4114, 2147483648
  %v4710 = vor.u32 1.1754944e-38, %v4709
  %v4711 = vsel %vm4708, %v4710, %v4706
  %v4712 = vrcp.pop %v4115
  %v4713 = vmul.f32 %v4115, %v4712
  %v4714 = vsub.f32 1.0, %v4713
  %v4715 = vmul.f32 %v4712, %v4714
  %v4716 = vadd.f32 %v4712, %v4715
  %vm4717 = vweird.f32 %v4115
  %vm4718 = vweird.f32 %v4712
  %vm4719 = vmor %vm4717, %vm4718
  %v4720 = vsel %vm4719, %v4712, %v4716
  %v4721 = vand.u32 2147483647, %v4115
  %vm4722 = vcmp.eq.f32.partialorder %v4721, 8.507059e+37
  %v4723 = vand.u32 %v4115, 2147483648
  %v4724 = vor.u32 1.1754944e-38, %v4723
  %v4725 = vsel %vm4722, %v4724, %v4720
  %v4726 = vrcp.pop %v4116
  %v4727 = vmul.f32 %v4116, %v4726
  %v4728 = vsub.f32 1.0, %v4727
  %v4729 = vmul.f32 %v4726, %v4728
  %v4730 = vadd.f32 %v4726, %v4729
  %vm4731 = vweird.f32 %v4116
  %vm4732 = vweird.f32 %v4726
  %vm4733 = vmor %vm4731, %vm4732
  %v4734 = vsel %vm4733, %v4726, %v4730
  %v4735 = vand.u32 2147483647, %v4116
  %vm4736 = vcmp.eq.f32.partialorder %v4735, 8.507059e+37
  %v4737 = vand.u32 %v4116, 2147483648
  %v4738 = vor.u32 1.1754944e-38, %v4737
  %v4739 = vsel %vm4736, %v4738, %v4734
  %v4740 = vrcp.pop %v4117
  %v4741 = vmul.f32 %v4117, %v4740
  %v4742 = vsub.f32 1.0, %v4741
  %v4743 = vmul.f32 %v4740, %v4742
  %v4744 = vadd.f32 %v4740, %v4743
  %vm4745 = vweird.f32 %v4117
  %vm4746 = vweird.f32 %v4740
  %vm4747 = vmor %vm4745, %vm4746
  %v4748 = vsel %vm4747, %v4740, %v4744
  %v4749 = vand.u32 2147483647, %v4117
  %vm4750 = vcmp.eq.f32.partialorder %v4749, 8.507059e+37
  %v4751 = vand.u32 %v4117, 2147483648
  %v4752 = vor.u32 1.1754944e-38, %v4751
  %v4753 = vsel %vm4750, %v4752, %v4748
  %v4754 = vrcp.pop %v4118
  %v4755 = vmul.f32 %v4118, %v4754
  %v4756 = vsub.f32 1.0, %v4755
  %v4757 = vmul.f32 %v4754, %v4756
  %v4758 = vadd.f32 %v4754, %v4757
  %vm4759 = vweird.f32 %v4118
  %vm4760 = vweird.f32 %v4754
  %vm4761 = vmor %vm4759, %vm4760
  %v4762 = vsel %vm4761, %v4754, %v4758
  %v4763 = vand.u32 2147483647, %v4118
  %vm4764 = vcmp.eq.f32.partialorder %v4763, 8.507059e+37
  %v4765 = vand.u32 %v4118, 2147483648
  %v4766 = vor.u32 1.1754944e-38, %v4765
  %v4767 = vsel %vm4764, %v4766, %v4762
  %v4768 = vrcp.pop %v4119
  %v4769 = vmul.f32 %v4119, %v4768
  %v4770 = vsub.f32 1.0, %v4769
  %v4771 = vmul.f32 %v4768, %v4770
  %v4772 = vadd.f32 %v4768, %v4771
  %vm4773 = vweird.f32 %v4119
  %vm4774 = vweird.f32 %v4768
  %vm4775 = vmor %vm4773, %vm4774
  %v4776 = vsel %vm4775, %v4768, %v4772
  %v4777 = vand.u32 2147483647, %v4119
  %vm4778 = vcmp.eq.f32.partialorder %v4777, 8.507059e+37
  %v4779 = vand.u32 %v4119, 2147483648
  %v4780 = vor.u32 1.1754944e-38, %v4779
  %v4781 = vsel %vm4778, %v4780, %v4776
  %v4782 = vrcp.pop %v4120
  %v4783 = vmul.f32 %v4120, %v4782
  %v4784 = vsub.f32 1.0, %v4783
  %v4785 = vmul.f32 %v4782, %v4784
  %v4786 = vadd.f32 %v4782, %v4785
  %vm4787 = vweird.f32 %v4120
  %vm4788 = vweird.f32 %v4782
  %vm4789 = vmor %vm4787, %vm4788
  %v4790 = vsel %vm4789, %v4782, %v4786
  %v4791 = vand.u32 2147483647, %v4120
  %vm4792 = vcmp.eq.f32.partialorder %v4791, 8.507059e+37
  %v4793 = vand.u32 %v4120, 2147483648
  %v4794 = vor.u32 1.1754944e-38, %v4793
  %v4795 = vsel %vm4792, %v4794, %v4790
  %v4796 = vrcp.pop %v4121
  %v4797 = vmul.f32 %v4121, %v4796
  %v4798 = vsub.f32 1.0, %v4797
  %v4799 = vmul.f32 %v4796, %v4798
  %v4800 = vadd.f32 %v4796, %v4799
  %vm4801 = vweird.f32 %v4121
  %vm4802 = vweird.f32 %v4796
  %vm4803 = vmor %vm4801, %vm4802
  %v4804 = vsel %vm4803, %v4796, %v4800
  %v4805 = vand.u32 2147483647, %v4121
  %vm4806 = vcmp.eq.f32.partialorder %v4805, 8.507059e+37
  %v4807 = vand.u32 %v4121, 2147483648
  %v4808 = vor.u32 1.1754944e-38, %v4807
  %v4809 = vsel %vm4806, %v4808, %v4804
  %v4810 = vrcp.pop %v4122
  %v4811 = vmul.f32 %v4122, %v4810
  %v4812 = vsub.f32 1.0, %v4811
  %v4813 = vmul.f32 %v4810, %v4812
  %v4814 = vadd.f32 %v4810, %v4813
  %vm4815 = vweird.f32 %v4122
  %vm4816 = vweird.f32 %v4810
  %vm4817 = vmor %vm4815, %vm4816
  %v4818 = vsel %vm4817, %v4810, %v4814
  %v4819 = vand.u32 2147483647, %v4122
  %vm4820 = vcmp.eq.f32.partialorder %v4819, 8.507059e+37
  %v4821 = vand.u32 %v4122, 2147483648
  %v4822 = vor.u32 1.1754944e-38, %v4821
  %v4823 = vsel %vm4820, %v4822, %v4818
  %v4824 = vrcp.pop %v4123
  %v4825 = vmul.f32 %v4123, %v4824
  %v4826 = vsub.f32 1.0, %v4825
  %v4827 = vmul.f32 %v4824, %v4826
  %v4828 = vadd.f32 %v4824, %v4827
  %vm4829 = vweird.f32 %v4123
  %vm4830 = vweird.f32 %v4824
  %vm4831 = vmor %vm4829, %vm4830
  %v4832 = vsel %vm4831, %v4824, %v4828
  %v4833 = vand.u32 2147483647, %v4123
  %vm4834 = vcmp.eq.f32.partialorder %v4833, 8.507059e+37
  %v4835 = vand.u32 %v4123, 2147483648
  %v4836 = vor.u32 1.1754944e-38, %v4835
  %v4837 = vsel %vm4834, %v4836, %v4832
  %v4838 = vrcp.pop %v4124
  %v4839 = vmul.f32 %v4124, %v4838
  %v4840 = vsub.f32 1.0, %v4839
  %v4841 = vmul.f32 %v4838, %v4840
  %v4842 = vadd.f32 %v4838, %v4841
  %vm4843 = vweird.f32 %v4124
  %vm4844 = vweird.f32 %v4838
  %vm4845 = vmor %vm4843, %vm4844
  %v4846 = vsel %vm4845, %v4838, %v4842
  %v4847 = vand.u32 2147483647, %v4124
  %vm4848 = vcmp.eq.f32.partialorder %v4847, 8.507059e+37
  %v4849 = vand.u32 %v4124, 2147483648
  %v4850 = vor.u32 1.1754944e-38, %v4849
  %v4851 = vsel %vm4848, %v4850, %v4846
  %v4852 = vrcp.pop %v4125
  %v4853 = vmul.f32 %v4125, %v4852
  %v4854 = vsub.f32 1.0, %v4853
  %v4855 = vmul.f32 %v4852, %v4854
  %v4856 = vadd.f32 %v4852, %v4855
  %vm4857 = vweird.f32 %v4125
  %vm4858 = vweird.f32 %v4852
  %vm4859 = vmor %vm4857, %vm4858
  %v4860 = vsel %vm4859, %v4852, %v4856
  %v4861 = vand.u32 2147483647, %v4125
  %vm4862 = vcmp.eq.f32.partialorder %v4861, 8.507059e+37
  %v4863 = vand.u32 %v4125, 2147483648
  %v4864 = vor.u32 1.1754944e-38, %v4863
  %v4865 = vsel %vm4862, %v4864, %v4860
  %v4866 = vrcp.pop %v4126
  %v4867 = vmul.f32 %v4126, %v4866
  %v4868 = vsub.f32 1.0, %v4867
  %v4869 = vmul.f32 %v4866, %v4868
  %v4870 = vadd.f32 %v4866, %v4869
  %vm4871 = vweird.f32 %v4126
  %vm4872 = vweird.f32 %v4866
  %vm4873 = vmor %vm4871, %vm4872
  %v4874 = vsel %vm4873, %v4866, %v4870
  %v4875 = vand.u32 2147483647, %v4126
  %vm4876 = vcmp.eq.f32.partialorder %v4875, 8.507059e+37
  %v4877 = vand.u32 %v4126, 2147483648
  %v4878 = vor.u32 1.1754944e-38, %v4877
  %v4879 = vsel %vm4876, %v4878, %v4874
  %v4880 = vrcp.pop %v4127
  %v4881 = vmul.f32 %v4127, %v4880
  %v4882 = vsub.f32 1.0, %v4881
  %v4883 = vmul.f32 %v4880, %v4882
  %v4884 = vadd.f32 %v4880, %v4883
  %vm4885 = vweird.f32 %v4127
  %vm4886 = vweird.f32 %v4880
  %vm4887 = vmor %vm4885, %vm4886
  %v4888 = vsel %vm4887, %v4880, %v4884
  %v4889 = vand.u32 2147483647, %v4127
  %vm4890 = vcmp.eq.f32.partialorder %v4889, 8.507059e+37
  %v4891 = vand.u32 %v4127, 2147483648
  %v4892 = vor.u32 1.1754944e-38, %v4891
  %v4893 = vsel %vm4890, %v4892, %v4888
  %v4894 = vrcp.pop %v4128
  %v4895 = vmul.f32 %v4128, %v4894
  %v4896 = vsub.f32 1.0, %v4895
  %v4897 = vmul.f32 %v4894, %v4896
  %v4898 = vadd.f32 %v4894, %v4897
  %vm4899 = vweird.f32 %v4128
  %vm4900 = vweird.f32 %v4894
  %vm4901 = vmor %vm4899, %vm4900
  %v4902 = vsel %vm4901, %v4894, %v4898
  %v4903 = vand.u32 2147483647, %v4128
  %vm4904 = vcmp.eq.f32.partialorder %v4903, 8.507059e+37
  %v4905 = vand.u32 %v4128, 2147483648
  %v4906 = vor.u32 1.1754944e-38, %v4905
  %v4907 = vsel %vm4904, %v4906, %v4902
  %v4908 = vrcp.pop %v4129
  %v4909 = vmul.f32 %v4129, %v4908
  %v4910 = vsub.f32 1.0, %v4909
  %v4911 = vmul.f32 %v4908, %v4910
  %v4912 = vadd.f32 %v4908, %v4911
  %vm4913 = vweird.f32 %v4129
  %vm4914 = vweird.f32 %v4908
  %vm4915 = vmor %vm4913, %vm4914
  %v4916 = vsel %vm4915, %v4908, %v4912
  %v4917 = vand.u32 2147483647, %v4129
  %vm4918 = vcmp.eq.f32.partialorder %v4917, 8.507059e+37
  %v4919 = vand.u32 %v4129, 2147483648
  %v4920 = vor.u32 1.1754944e-38, %v4919
  %v4921 = vsel %vm4918, %v4920, %v4916
  %v4922 = vrcp.pop %v4130
  %v4923 = vmul.f32 %v4130, %v4922
  %v4924 = vsub.f32 1.0, %v4923
  %v4925 = vmul.f32 %v4922, %v4924
  %v4926 = vadd.f32 %v4922, %v4925
  %vm4927 = vweird.f32 %v4130
  %vm4928 = vweird.f32 %v4922
  %vm4929 = vmor %vm4927, %vm4928
  %v4930 = vsel %vm4929, %v4922, %v4926
  %v4931 = vand.u32 2147483647, %v4130
  %vm4932 = vcmp.eq.f32.partialorder %v4931, 8.507059e+37
  %v4933 = vand.u32 %v4130, 2147483648
  %v4934 = vor.u32 1.1754944e-38, %v4933
  %v4935 = vsel %vm4932, %v4934, %v4930
  %v4936 = vrcp.pop %v4131
  %v4937 = vmul.f32 %v4131, %v4936
  %v4938 = vsub.f32 1.0, %v4937
  %v4939 = vmul.f32 %v4936, %v4938
  %v4940 = vadd.f32 %v4936, %v4939
  %vm4941 = vweird.f32 %v4131
  %vm4942 = vweird.f32 %v4936
  %vm4943 = vmor %vm4941, %vm4942
  %v4944 = vsel %vm4943, %v4936, %v4940
  %v4945 = vand.u32 2147483647, %v4131
  %vm4946 = vcmp.eq.f32.partialorder %v4945, 8.507059e+37
  %v4947 = vand.u32 %v4131, 2147483648
  %v4948 = vor.u32 1.1754944e-38, %v4947
  %v4949 = vsel %vm4946, %v4948, %v4944
  %v4950 = vrcp.pop %v4132
  %v4951 = vmul.f32 %v4132, %v4950
  %v4952 = vsub.f32 1.0, %v4951
  %v4953 = vmul.f32 %v4950, %v4952
  %v4954 = vadd.f32 %v4950, %v4953
  %vm4955 = vweird.f32 %v4132
  %vm4956 = vweird.f32 %v4950
  %vm4957 = vmor %vm4955, %vm4956
  %v4958 = vsel %vm4957, %v4950, %v4954
  %v4959 = vand.u32 2147483647, %v4132
  %vm4960 = vcmp.eq.f32.partialorder %v4959, 8.507059e+37
  %v4961 = vand.u32 %v4132, 2147483648
  %v4962 = vor.u32 1.1754944e-38, %v4961
  %v4963 = vsel %vm4960, %v4962, %v4958
  %v4964 = vrcp.pop %v4133
  %v4965 = vmul.f32 %v4133, %v4964
  %v4966 = vsub.f32 1.0, %v4965
  %v4967 = vmul.f32 %v4964, %v4966
  %v4968 = vadd.f32 %v4964, %v4967
  %vm4969 = vweird.f32 %v4133
  %vm4970 = vweird.f32 %v4964
  %vm4971 = vmor %vm4969, %vm4970
  %v4972 = vsel %vm4971, %v4964, %v4968
  %v4973 = vand.u32 2147483647, %v4133
  %vm4974 = vcmp.eq.f32.partialorder %v4973, 8.507059e+37
  %v4975 = vand.u32 %v4133, 2147483648
  %v4976 = vor.u32 1.1754944e-38, %v4975
  %v4977 = vsel %vm4974, %v4976, %v4972
  %v4978 = vrcp.pop %v4134
  %v4979 = vmul.f32 %v4134, %v4978
  %v4980 = vsub.f32 1.0, %v4979
  %v4981 = vmul.f32 %v4978, %v4980
  %v4982 = vadd.f32 %v4978, %v4981
  %vm4983 = vweird.f32 %v4134
  %vm4984 = vweird.f32 %v4978
  %vm4985 = vmor %vm4983, %vm4984
  %v4986 = vsel %vm4985, %v4978, %v4982
  %v4987 = vand.u32 2147483647, %v4134
  %vm4988 = vcmp.eq.f32.partialorder %v4987, 8.507059e+37
  %v4989 = vand.u32 %v4134, 2147483648
  %v4990 = vor.u32 1.1754944e-38, %v4989
  %v4991 = vsel %vm4988, %v4990, %v4986
  %v4992 = vrcp.pop %v4135
  %v4993 = vmul.f32 %v4135, %v4992
  %v4994 = vsub.f32 1.0, %v4993
  %v4995 = vmul.f32 %v4992, %v4994
  %v4996 = vadd.f32 %v4992, %v4995
  %vm4997 = vweird.f32 %v4135
  %vm4998 = vweird.f32 %v4992
  %vm4999 = vmor %vm4997, %vm4998
  %v5000 = vsel %vm4999, %v4992, %v4996
  %v5001 = vand.u32 2147483647, %v4135
  %vm5002 = vcmp.eq.f32.partialorder %v5001, 8.507059e+37
  %v5003 = vand.u32 %v4135, 2147483648
  %v5004 = vor.u32 1.1754944e-38, %v5003
  %v5005 = vsel %vm5002, %v5004, %v5000
  %v5006 = vrcp.pop %v4136
  %v5007 = vmul.f32 %v4136, %v5006
  %v5008 = vsub.f32 1.0, %v5007
  %v5009 = vmul.f32 %v5006, %v5008
  %v5010 = vadd.f32 %v5006, %v5009
  %vm5011 = vweird.f32 %v4136
  %vm5012 = vweird.f32 %v5006
  %vm5013 = vmor %vm5011, %vm5012
  %v5014 = vsel %vm5013, %v5006, %v5010
  %v5015 = vand.u32 2147483647, %v4136
  %vm5016 = vcmp.eq.f32.partialorder %v5015, 8.507059e+37
  %v5017 = vand.u32 %v4136, 2147483648
  %v5018 = vor.u32 1.1754944e-38, %v5017
  %v5019 = vsel %vm5016, %v5018, %v5014
  %v5020 = vrcp.pop %v4137
  %v5021 = vmul.f32 %v4137, %v5020
  %v5022 = vsub.f32 1.0, %v5021
  %v5023 = vmul.f32 %v5020, %v5022
  %v5024 = vadd.f32 %v5020, %v5023
  %vm5025 = vweird.f32 %v4137
  %vm5026 = vweird.f32 %v5020
  %vm5027 = vmor %vm5025, %vm5026
  %v5028 = vsel %vm5027, %v5020, %v5024
  %v5029 = vand.u32 2147483647, %v4137
  %vm5030 = vcmp.eq.f32.partialorder %v5029, 8.507059e+37
  %v5031 = vand.u32 %v4137, 2147483648
  %v5032 = vor.u32 1.1754944e-38, %v5031
  %v5033 = vsel %vm5030, %v5032, %v5028
  %v5034 = vld [vmem:[%s3] sm:$0xff]
  %v5035 = vld [vmem:[%s3 + $0x8] sm:$0xff]
  %v5036 = vld [vmem:[%s3 + $0x10] sm:$0xff]
  %v5037 = vld [vmem:[%s3 + $0x18] sm:$0xff]
  %v5038 = vld [vmem:[%s3 + $0x20] sm:$0xff]
  %v5039 = vld [vmem:[%s3 + $0x28] sm:$0xff]
  %v5040 = vld [vmem:[%s3 + $0x30] sm:$0xff]
  %v5041 = vld [vmem:[%s3 + $0x38] sm:$0xff]
  %v5042 = vld [vmem:[%s3 + $0x40] sm:$0xff]
  %v5043 = vld [vmem:[%s3 + $0x48] sm:$0xff]
  %v5044 = vld [vmem:[%s3 + $0x50] sm:$0xff]
  %v5045 = vld [vmem:[%s3 + $0x58] sm:$0xff]
  %v5046 = vld [vmem:[%s3 + $0x60] sm:$0xff]
  %v5047 = vld [vmem:[%s3 + $0x68] sm:$0xff]
  %v5048 = vld [vmem:[%s3 + $0x70] sm:$0xff]
  %v5049 = vld [vmem:[%s3 + $0x78] sm:$0xff]
  %v5050 = vld [vmem:[%s4] sm:$0x1]
  %v5052 = vperm.slane %v5050, 0
  %5054 = vmatpush.msra.mxu0 %v5049
  %5055 = vmatpush.msra.mxu0 %v5048
  %5056 = vmatpush.msra.mxu0 %v5047
  %5057 = vmatpush.msra.mxu0 %v5046
  %5058 = vmatpush.msra.mxu0 %v5045
  %5059 = vmatpush.msra.mxu0 %v5044
  %5060 = vmatpush.msra.mxu0 %v5043
  %5061 = vmatpush.msra.mxu0 %v5042
  %5062 = vmatpush.msra.mxu0 %v5041
  %5063 = vmatpush.msra.mxu0 %v5040
  %5064 = vmatpush.msra.mxu0 %v5039
  %5065 = vmatpush.msra.mxu0 %v5038
  %5066 = vmatpush.msra.mxu0 %v5037
  %5067 = vmatpush.msra.mxu0 %v5036
  %5068 = vmatpush.msra.mxu0 %v5035
  %5069 = vmatpush.msra.mxu0 %v5034
  %5070 = vmatmul.f32.gmra.mxu0 %v4151
  %v5071 = vpop.f32.mrf.mxu0
  %v5072 = vadd.f32 %v5052, %v5071
  %5073 = vmatmul.f32.gmra.mxu0 %v4165
  %v5074 = vpop.f32.mrf.mxu0
  %v5075 = vadd.f32 %v5052, %v5074
  %5076 = vmatmul.f32.gmra.mxu0 %v4179
  %v5077 = vpop.f32.mrf.mxu0
  %v5078 = vadd.f32 %v5052, %v5077
  %5079 = vmatmul.f32.gmra.mxu0 %v4193
  %v5080 = vpop.f32.mrf.mxu0
  %v5081 = vadd.f32 %v5052, %v5080
  %5082 = vmatmul.f32.gmra.mxu0 %v4207
  %v5083 = vpop.f32.mrf.mxu0
  %v5084 = vadd.f32 %v5052, %v5083
  %5085 = vmatmul.f32.gmra.mxu0 %v4221
  %v5086 = vpop.f32.mrf.mxu0
  %v5087 = vadd.f32 %v5052, %v5086
  %5088 = vmatmul.f32.gmra.mxu0 %v4235
  %v5089 = vpop.f32.mrf.mxu0
  %v5090 = vadd.f32 %v5052, %v5089
  %5091 = vmatmul.f32.gmra.mxu0 %v4249
  %v5092 = vpop.f32.mrf.mxu0
  %v5093 = vadd.f32 %v5052, %v5092
  %5094 = vmatmul.f32.gmra.mxu0 %v4263
  %v5095 = vpop.f32.mrf.mxu0
  %v5096 = vadd.f32 %v5052, %v5095
  %5097 = vmatmul.f32.gmra.mxu0 %v4277
  %v5098 = vpop.f32.mrf.mxu0
  %v5099 = vadd.f32 %v5052, %v5098
  %5100 = vmatmul.f32.gmra.mxu0 %v4291
  %v5101 = vpop.f32.mrf.mxu0
  %v5102 = vadd.f32 %v5052, %v5101
  %5103 = vmatmul.f32.gmra.mxu0 %v4305
  %v5104 = vpop.f32.mrf.mxu0
  %v5105 = vadd.f32 %v5052, %v5104
  %5106 = vmatmul.f32.gmra.mxu0 %v4319
  %v5107 = vpop.f32.mrf.mxu0
  %v5108 = vadd.f32 %v5052, %v5107
  %5109 = vmatmul.f32.gmra.mxu0 %v4333
  %v5110 = vpop.f32.mrf.mxu0
  %v5111 = vadd.f32 %v5052, %v5110
  %5112 = vmatmul.f32.gmra.mxu0 %v4347
  %v5113 = vpop.f32.mrf.mxu0
  %v5114 = vadd.f32 %v5052, %v5113
  %5115 = vmatmul.f32.gmra.mxu0 %v4361
  %v5116 = vpop.f32.mrf.mxu0
  %v5117 = vadd.f32 %v5052, %v5116
  %5118 = vmatmul.f32.gmra.mxu0 %v4375
  %v5119 = vpop.f32.mrf.mxu0
  %v5120 = vadd.f32 %v5052, %v5119
  %5121 = vmatmul.f32.gmra.mxu0 %v4389
  %v5122 = vpop.f32.mrf.mxu0
  %v5123 = vadd.f32 %v5052, %v5122
  %5124 = vmatmul.f32.gmra.mxu0 %v4403
  %v5125 = vpop.f32.mrf.mxu0
  %v5126 = vadd.f32 %v5052, %v5125
  %5127 = vmatmul.f32.gmra.mxu0 %v4417
  %v5128 = vpop.f32.mrf.mxu0
  %v5129 = vadd.f32 %v5052, %v5128
  %5130 = vmatmul.f32.gmra.mxu0 %v4431
  %v5131 = vpop.f32.mrf.mxu0
  %v5132 = vadd.f32 %v5052, %v5131
  %5133 = vmatmul.f32.gmra.mxu0 %v4445
  %v5134 = vpop.f32.mrf.mxu0
  %v5135 = vadd.f32 %v5052, %v5134
  %5136 = vmatmul.f32.gmra.mxu0 %v4459
  %v5137 = vpop.f32.mrf.mxu0
  %v5138 = vadd.f32 %v5052, %v5137
  %5139 = vmatmul.f32.gmra.mxu0 %v4473
  %v5140 = vpop.f32.mrf.mxu0
  %v5141 = vadd.f32 %v5052, %v5140
  %5142 = vmatmul.f32.gmra.mxu0 %v4487
  %v5143 = vpop.f32.mrf.mxu0
  %v5144 = vadd.f32 %v5052, %v5143
  %5145 = vmatmul.f32.gmra.mxu0 %v4501
  %v5146 = vpop.f32.mrf.mxu0
  %v5147 = vadd.f32 %v5052, %v5146
  %5148 = vmatmul.f32.gmra.mxu0 %v4515
  %v5149 = vpop.f32.mrf.mxu0
  %v5150 = vadd.f32 %v5052, %v5149
  %5151 = vmatmul.f32.gmra.mxu0 %v4529
  %v5152 = vpop.f32.mrf.mxu0
  %v5153 = vadd.f32 %v5052, %v5152
  %5154 = vmatmul.f32.gmra.mxu0 %v4543
  %v5155 = vpop.f32.mrf.mxu0
  %v5156 = vadd.f32 %v5052, %v5155
  %5157 = vmatmul.f32.gmra.mxu0 %v4557
  %v5158 = vpop.f32.mrf.mxu0
  %v5159 = vadd.f32 %v5052, %v5158
  %5160 = vmatmul.f32.gmra.mxu0 %v4571
  %v5161 = vpop.f32.mrf.mxu0
  %v5162 = vadd.f32 %v5052, %v5161
  %5163 = vmatmul.f32.gmra.mxu0 %v4585
  %v5164 = vpop.f32.mrf.mxu0
  %v5165 = vadd.f32 %v5052, %v5164
  %5166 = vmatmul.f32.gmra.mxu0 %v4599
  %v5167 = vpop.f32.mrf.mxu0
  %v5168 = vadd.f32 %v5052, %v5167
  %5169 = vmatmul.f32.gmra.mxu0 %v4613
  %v5170 = vpop.f32.mrf.mxu0
  %v5171 = vadd.f32 %v5052, %v5170
  %5172 = vmatmul.f32.gmra.mxu0 %v4627
  %v5173 = vpop.f32.mrf.mxu0
  %v5174 = vadd.f32 %v5052, %v5173
  %5175 = vmatmul.f32.gmra.mxu0 %v4641
  %v5176 = vpop.f32.mrf.mxu0
  %v5177 = vadd.f32 %v5052, %v5176
  %5178 = vmatmul.f32.gmra.mxu0 %v4655
  %v5179 = vpop.f32.mrf.mxu0
  %v5180 = vadd.f32 %v5052, %v5179
  %5181 = vmatmul.f32.gmra.mxu0 %v4669
  %v5182 = vpop.f32.mrf.mxu0
  %v5183 = vadd.f32 %v5052, %v5182
  %5184 = vmatmul.f32.gmra.mxu0 %v4683
  %v5185 = vpop.f32.mrf.mxu0
  %v5186 = vadd.f32 %v5052, %v5185
  %5187 = vmatmul.f32.gmra.mxu0 %v4697
  %v5188 = vpop.f32.mrf.mxu0
  %v5189 = vadd.f32 %v5052, %v5188
  %5190 = vmatmul.f32.gmra.mxu0 %v4711
  %v5191 = vpop.f32.mrf.mxu0
  %v5192 = vadd.f32 %v5052, %v5191
  %5193 = vmatmul.f32.gmra.mxu0 %v4725
  %v5194 = vpop.f32.mrf.mxu0
  %v5195 = vadd.f32 %v5052, %v5194
  %5196 = vmatmul.f32.gmra.mxu0 %v4739
  %v5197 = vpop.f32.mrf.mxu0
  %v5198 = vadd.f32 %v5052, %v5197
  %5199 = vmatmul.f32.gmra.mxu0 %v4753
  %v5200 = vpop.f32.mrf.mxu0
  %v5201 = vadd.f32 %v5052, %v5200
  %5202 = vmatmul.f32.gmra.mxu0 %v4767
  %v5203 = vpop.f32.mrf.mxu0
  %v5204 = vadd.f32 %v5052, %v5203
  %5205 = vmatmul.f32.gmra.mxu0 %v4781
  %v5206 = vpop.f32.mrf.mxu0
  %v5207 = vadd.f32 %v5052, %v5206
  %5208 = vmatmul.f32.gmra.mxu0 %v4795
  %v5209 = vpop.f32.mrf.mxu0
  %v5210 = vadd.f32 %v5052, %v5209
  %5211 = vmatmul.f32.gmra.mxu0 %v4809
  %v5212 = vpop.f32.mrf.mxu0
  %v5213 = vadd.f32 %v5052, %v5212
  %5214 = vmatmul.f32.gmra.mxu0 %v4823
  %v5215 = vpop.f32.mrf.mxu0
  %v5216 = vadd.f32 %v5052, %v5215
  %5217 = vmatmul.f32.gmra.mxu0 %v4837
  %v5218 = vpop.f32.mrf.mxu0
  %v5219 = vadd.f32 %v5052, %v5218
  %5220 = vmatmul.f32.gmra.mxu0 %v4851
  %v5221 = vpop.f32.mrf.mxu0
  %v5222 = vadd.f32 %v5052, %v5221
  %5223 = vmatmul.f32.gmra.mxu0 %v4865
  %v5224 = vpop.f32.mrf.mxu0
  %v5225 = vadd.f32 %v5052, %v5224
  %5226 = vmatmul.f32.gmra.mxu0 %v4879
  %v5227 = vpop.f32.mrf.mxu0
  %v5228 = vadd.f32 %v5052, %v5227
  %5229 = vmatmul.f32.gmra.mxu0 %v4893
  %v5230 = vpop.f32.mrf.mxu0
  %v5231 = vadd.f32 %v5052, %v5230
  %5232 = vmatmul.f32.gmra.mxu0 %v4907
  %v5233 = vpop.f32.mrf.mxu0
  %v5234 = vadd.f32 %v5052, %v5233
  %5235 = vmatmul.f32.gmra.mxu0 %v4921
  %v5236 = vpop.f32.mrf.mxu0
  %v5237 = vadd.f32 %v5052, %v5236
  %5238 = vmatmul.f32.gmra.mxu0 %v4935
  %v5239 = vpop.f32.mrf.mxu0
  %v5240 = vadd.f32 %v5052, %v5239
  %5241 = vmatmul.f32.gmra.mxu0 %v4949
  %v5242 = vpop.f32.mrf.mxu0
  %v5243 = vadd.f32 %v5052, %v5242
  %5244 = vmatmul.f32.gmra.mxu0 %v4963
  %v5245 = vpop.f32.mrf.mxu0
  %v5246 = vadd.f32 %v5052, %v5245
  %5247 = vmatmul.f32.gmra.mxu0 %v4977
  %v5248 = vpop.f32.mrf.mxu0
  %v5249 = vadd.f32 %v5052, %v5248
  %5250 = vmatmul.f32.gmra.mxu0 %v4991
  %v5251 = vpop.f32.mrf.mxu0
  %v5252 = vadd.f32 %v5052, %v5251
  %5253 = vmatmul.f32.gmra.mxu0 %v5005
  %v5254 = vpop.f32.mrf.mxu0
  %v5255 = vadd.f32 %v5052, %v5254
  %5256 = vmatmul.f32.gmra.mxu0 %v5019
  %v5257 = vpop.f32.mrf.mxu0
  %v5258 = vadd.f32 %v5052, %v5257
  %5259 = vmatmul.f32.gmra.mxu0 %v5033
  %v5260 = vpop.f32.mrf.mxu0
  %v5261 = vadd.f32 %v5052, %v5260
  %5262 = vdwg.mxu0
  %5263 = vst [vmem:[%s5] sm:$0xff] %v5072
  %5264 = vst [vmem:[%s5 + $0x8] sm:$0xff] %v5075
  %5265 = vst [vmem:[%s5 + $0x10] sm:$0xff] %v5078
  %5266 = vst [vmem:[%s5 + $0x18] sm:$0xff] %v5081
  %5267 = vst [vmem:[%s5 + $0x20] sm:$0xff] %v5084
  %5268 = vst [vmem:[%s5 + $0x28] sm:$0xff] %v5087
  %5269 = vst [vmem:[%s5 + $0x30] sm:$0xff] %v5090
  %5270 = vst [vmem:[%s5 + $0x38] sm:$0xff] %v5093
  %5271 = vst [vmem:[%s5 + $0x40] sm:$0xff] %v5096
  %5272 = vst [vmem:[%s5 + $0x48] sm:$0xff] %v5099
  %5273 = vst [vmem:[%s5 + $0x50] sm:$0xff] %v5102
  %5274 = vst [vmem:[%s5 + $0x58] sm:$0xff] %v5105
  %5275 = vst [vmem:[%s5 + $0x60] sm:$0xff] %v5108
  %5276 = vst [vmem:[%s5 + $0x68] sm:$0xff] %v5111
  %5277 = vst [vmem:[%s5 + $0x70] sm:$0xff] %v5114
  %5278 = vst [vmem:[%s5 + $0x78] sm:$0xff] %v5117
  %5279 = vst [vmem:[%s5 + $0x80] sm:$0xff] %v5120
  %5280 = vst [vmem:[%s5 + $0x88] sm:$0xff] %v5123
  %5281 = vst [vmem:[%s5 + $0x90] sm:$0xff] %v5126
  %5282 = vst [vmem:[%s5 + $0x98] sm:$0xff] %v5129
  %5283 = vst [vmem:[%s5 + $0xa0] sm:$0xff] %v5132
  %5284 = vst [vmem:[%s5 + $0xa8] sm:$0xff] %v5135
  %5285 = vst [vmem:[%s5 + $0xb0] sm:$0xff] %v5138
  %5286 = vst [vmem:[%s5 + $0xb8] sm:$0xff] %v5141
  %5287 = vst [vmem:[%s5 + $0xc0] sm:$0xff] %v5144
  %5288 = vst [vmem:[%s5 + $0xc8] sm:$0xff] %v5147
  %5289 = vst [vmem:[%s5 + $0xd0] sm:$0xff] %v5150
  %5290 = vst [vmem:[%s5 + $0xd8] sm:$0xff] %v5153
  %5291 = vst [vmem:[%s5 + $0xe0] sm:$0xff] %v5156
  %5292 = vst [vmem:[%s5 + $0xe8] sm:$0xff] %v5159
  %5293 = vst [vmem:[%s5 + $0xf0] sm:$0xff] %v5162
  %5294 = vst [vmem:[%s5 + $0xf8] sm:$0xff] %v5165
  %5295 = vst [vmem:[%s5 + $0x100] sm:$0xff] %v5168
  %5296 = vst [vmem:[%s5 + $0x108] sm:$0xff] %v5171
  %5297 = vst [vmem:[%s5 + $0x110] sm:$0xff] %v5174
  %5298 = vst [vmem:[%s5 + $0x118] sm:$0xff] %v5177
  %5299 = vst [vmem:[%s5 + $0x120] sm:$0xff] %v5180
  %5300 = vst [vmem:[%s5 + $0x128] sm:$0xff] %v5183
  %5301 = vst [vmem:[%s5 + $0x130] sm:$0xff] %v5186
  %5302 = vst [vmem:[%s5 + $0x138] sm:$0xff] %v5189
  %5303 = vst [vmem:[%s5 + $0x140] sm:$0xff] %v5192
  %5304 = vst [vmem:[%s5 + $0x148] sm:$0xff] %v5195
  %5305 = vst [vmem:[%s5 + $0x150] sm:$0xff] %v5198
  %5306 = vst [vmem:[%s5 + $0x158] sm:$0xff] %v5201
  %5307 = vst [vmem:[%s5 + $0x160] sm:$0xff] %v5204
  %5308 = vst [vmem:[%s5 + $0x168] sm:$0xff] %v5207
  %5309 = vst [vmem:[%s5 + $0x170] sm:$0xff] %v5210
  %5310 = vst [vmem:[%s5 + $0x178] sm:$0xff] %v5213
  %5311 = vst [vmem:[%s5 + $0x180] sm:$0xff] %v5216
  %5312 = vst [vmem:[%s5 + $0x188] sm:$0xff] %v5219
  %5313 = vst [vmem:[%s5 + $0x190] sm:$0xff] %v5222
  %5314 = vst [vmem:[%s5 + $0x198] sm:$0xff] %v5225
  %5315 = vst [vmem:[%s5 + $0x1a0] sm:$0xff] %v5228
  %5316 = vst [vmem:[%s5 + $0x1a8] sm:$0xff] %v5231
  %5317 = vst [vmem:[%s5 + $0x1b0] sm:$0xff] %v5234
  %5318 = vst [vmem:[%s5 + $0x1b8] sm:$0xff] %v5237
  %5319 = vst [vmem:[%s5 + $0x1c0] sm:$0xff] %v5240
  %5320 = vst [vmem:[%s5 + $0x1c8] sm:$0xff] %v5243
  %5321 = vst [vmem:[%s5 + $0x1d0] sm:$0xff] %v5246
  %5322 = vst [vmem:[%s5 + $0x1d8] sm:$0xff] %v5249
  %5323 = vst [vmem:[%s5 + $0x1e0] sm:$0xff] %v5252
  %5324 = vst [vmem:[%s5 + $0x1e8] sm:$0xff] %v5255
  %5325 = vst [vmem:[%s5 + $0x1f0] sm:$0xff] %v5258
  %5326 = vst [vmem:[%s5 + $0x1f8] sm:$0xff] %v5261
  // Predicated region
  $region22: #{cofrnet_apply.1} parent=0 // pred_check
    _
  $region23: #{cofrnet_apply.1} parent=0 // pred_check_branch
    %5328 = sbr.rel (0) target = $region25
  $region24: #{cofrnet_apply.1} parent=0 // pred_region
    _
  $region25: #{cofrnet_apply.1} parent=0 // pred_fallthru
    _
  // Predicated region
  $region26: #{cofrnet_apply.1} parent=0 // pred_check
    _
  $region27: #{cofrnet_apply.1} parent=0 // pred_check_branch
    %5330 = sbr.rel (0) target = $region29
  $region28: #{cofrnet_apply.1} parent=0 // pred_region
    _
  $region29: #{cofrnet_apply.1} parent=0 // pred_fallthru
    _

</llo_original>
